<compile_context>
chip_gen: v6e
topology: v6e:2x2x1
jax: 0.10.0
libtpu: 0.0.40
codegen_flags: <defaults>
</compile_context>

<pallas_src>
import functools

import jax
import jax.numpy as jnp
from jax.experimental import pallas as pl
from jax.experimental.pallas import tpu as pltpu


def grnn_kernel(x_ref, h0_ref, at_ref,
                wh_zr_ref, wh_t_ref, wx3_ref, bx3_ref,
                wo_ref, bo_ref,
                o_ref, hout_ref,
                xzr_ref, xt_ref, hseq_ref,
                *, dense_output):
    Bb, T, N, F = x_ref.shape
    D = h0_ref.shape[2]

    A_T = at_ref[...]                     # [Bb, N, N]  pre-transposed adjacency
    h = h0_ref[...]                       # [Bb, N, D]  node-major hidden state

    # Hoisted weight loads (read VMEM once, not T times on the critical path).
    wh_zr = wh_zr_ref[...]                # [D, 2D]  fused z|r state weights
    wh_t = wh_t_ref[...]                  # [D, D]   transform state weights

    # Hoisted, fused x projection for ALL gates and ALL timesteps: one
    # [Bb*T*N, F] @ [F, 3D] matmul with the biases folded in, parked in VMEM
    # scratch so it does not hold vregs across the unrolled recurrence.
    x2d = x_ref[...].reshape(Bb * T * N, F)
    x_all = (jnp.dot(x2d, wx3_ref[...], preferred_element_type=jnp.float32)
             + bx3_ref[...]).reshape(Bb, T * N, 3 * D)
    xzr_ref[...] = x_all[:, :, :2 * D]    # [Bb, T*N, 2D]
    xt_ref[...] = x_all[:, :, 2 * D:]     # [Bb, T*N, D]

    # T is small and static -> full unroll (static slice addresses).
    # TODO(synk): for large T switch to a fori_loop / inner pipeline over T
    # chunks with h carried in scratch (keeps VMEM flat on v7x's 64 MiB).
    for t in range(T):
        # Batched graph propagation: S[b] = A[b]^T @ h[b]  ->  [Bb, N, D],
        # then stacked to [Bb*N, D] rows for the shared-weight gate matmuls.
        S = jnp.einsum('bnm,bmd->bnd', A_T, h,
                       preferred_element_type=jnp.float32).reshape(Bb * N, D)

        xzr_t = xzr_ref[:, t * N:(t + 1) * N, :].reshape(Bb * N, 2 * D)
        xt_t = xt_ref[:, t * N:(t + 1) * N, :].reshape(Bb * N, D)

        # Fused z|r gate matmul: [Bb*N, D] @ [D, 2D].
        zr = jax.nn.sigmoid(
            jnp.dot(S, wh_zr, preferred_element_type=jnp.float32) + xzr_t)
        # NOTE: the reference's "resetGate" output (z) is the GRU blend gate,
        # and "updateGate" (r) is the multiplicative reset - math matches ref.
        z = zr[:, :D]
        r = zr[:, D:]

        h_hat = jnp.tanh(
            jnp.dot(r * S, wh_t, preferred_element_type=jnp.float32) + xt_t)

        h_flat = (1.0 - z) * S + z * h_hat                     # [Bb*N, D]
        h = h_flat.reshape(Bb, N, D)
        hseq_ref[:, t * N:(t + 1) * N, :] = h                  # bounded live range

    hout_ref[...] = h.astype(hout_ref.dtype)                   # [Bb, N, D]

    # Batched output projection over all (batch, time, node) rows at once.
    h_all = hseq_ref[...].reshape(Bb * T * N, D)
    o_pre = (jnp.dot(h_all, wo_ref[...], preferred_element_type=jnp.float32)
             + bo_ref[...])                                     # [Bb*T*N, F]
    if dense_output:
        # Lane-dense flat slab: last dim T*N*F (>=128 for realistic shapes)
        # -> unmasked full-width stores of the output block.
        o_ref[0] = jax.nn.sigmoid(
            o_pre.reshape(Bb, T * N * F)).astype(o_ref.dtype)
    else:
        # Natural layout fallback (leading-dim-only reshape, always lowers).
        o_ref[...] = jax.nn.sigmoid(o_pre).reshape(Bb, T, N, F).astype(o_ref.dtype)


def _pick_block_b(B, max_block=8):
    """Largest Bb <= max_block dividing B while keeping the grid length >= 2
    (so v7x's 2 TensorCores both get grid steps under 'parallel' semantics)."""
    if B <= 1:
        return 1
    target = max(1, min(max_block, B // 2))
    for bb in range(target, 0, -1):
        if B % bb == 0:
            return bb
    return 1


def grnn_forward(x, h_state, A, params, *, block_b=None, dense_output=True):
    """x:[B,T,N,F], h_state:[B,D,N], A:[B,N,N]. Returns (O:[B,T,N,F], h:[B,D,N])."""
    B, T, N, F = x.shape
    D = h_state.shape[1]
    # Keep per-step slices / reshapes (8,128)-tile aligned.
    # TODO(synk): zero-pad nodes (x, A rows, h0) to a multiple of 8 instead of
    # asserting if production nNode is not already a multiple of 8.
    assert N % 8 == 0, "nNode must be a multiple of 8 (sublane) for this kernel"

    wz, bz, wr, br, wt, bt, wo, bo = params

    if block_b is None:
        block_b = _pick_block_b(B)
    assert B % block_b == 0
    G = B // block_b                                       # grid length

    # One-time layout work in the XLA wrapper (amortised over the T recurrence):
    A_T = jnp.swapaxes(A, 1, 2)                            # [B, N, N]
    h0 = jnp.swapaxes(h_state, 1, 2)                       # [B, N, D] node-major
    wh_zr = jnp.concatenate([wz[:D], wr[:D]], axis=1)      # [D, 2D]  fused z|r (state)
    wh_t = wt[:D]                                          # [D, D]   transform (state)
    wx3 = jnp.concatenate([wz[D:], wr[D:], wt[D:]], axis=1)  # [F, 3D] fused z|r|t (input)
    bx3 = jnp.concatenate([bz, br, bt], axis=1)            # [1, 3D]

    def _full2d(shape):
        return pl.BlockSpec(shape, lambda g: (0, 0))

    in_specs = [
        pl.BlockSpec((block_b, T, N, F), lambda g: (g, 0, 0, 0)),   # x (whole seq)
        pl.BlockSpec((block_b, N, D), lambda g: (g, 0, 0)),         # h0 node-major
        pl.BlockSpec((block_b, N, N), lambda g: (g, 0, 0)),         # A^T
        _full2d((D, 2 * D)),                                        # wh_zr
        _full2d((D, D)),                                            # wh_t
        _full2d((F, 3 * D)),                                        # wx3 (fused)
        _full2d((1, 3 * D)),                                        # bx3 (fused)
        _full2d((D, F)),                                            # wo
        _full2d((1, F)),                                            # bo
    ]

    if dense_output:
        o_shape = jax.ShapeDtypeStruct((G, block_b, T * N * F), jnp.float32)
        o_spec = pl.BlockSpec((1, block_b, T * N * F), lambda g: (g, 0, 0))
    else:
        o_shape = jax.ShapeDtypeStruct((B, T, N, F), jnp.float32)
        o_spec = pl.BlockSpec((block_b, T, N, F), lambda g: (g, 0, 0, 0))

    grid_spec = pltpu.PrefetchScalarGridSpec(
        num_scalar_prefetch=0,
        grid=(G,),
        in_specs=in_specs,
        out_specs=[
            o_spec,
            pl.BlockSpec((block_b, N, D), lambda g: (g, 0, 0)),     # h out (node-major)
        ],
        scratch_shapes=[
            pltpu.VMEM((block_b, T * N, 2 * D), jnp.float32),       # hoisted x (z|r)
            pltpu.VMEM((block_b, T * N, D), jnp.float32),           # hoisted x (t)
            pltpu.VMEM((block_b, T * N, D), jnp.float32),           # hidden-state seq
        ],
    )

    O_out, h_out_nd = pl.pallas_call(
        functools.partial(grnn_kernel, dense_output=dense_output),
        out_shape=(
            o_shape,
            jax.ShapeDtypeStruct((B, N, D), jnp.float32),
        ),
        grid_spec=grid_spec,
        input_output_aliases={1: 1},   # reuse the h0 buffer for the h output
        compiler_params=pltpu.CompilerParams(
            dimension_semantics=("parallel",)),
        # NOTE: at production T*N*F sizes set vmem_limit_bytes explicitly
        # (v5e default scoped limit is 16 MiB; v7x physical VMEM is 64 MiB).
    )(x, h0, A_T, wh_zr, wh_t, wx3, bx3, wo, bo)

    if dense_output:
        O = O_out.reshape(B, T, N, F)        # free row-major reshape
    else:
        O = O_out
    h_out = jnp.swapaxes(h_out_nd, 1, 2)     # back to PyTorch's [B, D, N]
    return O, h_out


def grnn_reference(x, h_state, A, params):
    """Pure-JAX reference mirroring the PyTorch forward."""
    wz, bz, wr, br, wt, bt, wo, bo = params
    B, T, N, F = x.shape
    outs = []
    h = h_state
    for t in range(T):
        xt = x[:, t]                                   # [B, N, F]
        S = jnp.einsum('bdn,bnm->bdm', h, A)           # [B, D, N]
        S_t = jnp.swapaxes(S, 1, 2)                    # [B, N, D]
        i = jnp.concatenate([S_t, xt], axis=2)
        z = jax.nn.sigmoid(i @ wz + bz)
        r = jax.nn.sigmoid(i @ wr + br)
        joint_i = jnp.concatenate([r * S_t, xt], axis=2)
        h_hat = jnp.tanh(joint_i @ wt + bt)
        h_new = (1.0 - z) * S_t + z * h_hat            # [B, N, D]
        o = jax.nn.sigmoid(h_new @ wo + bo)
        outs.append(o)
        h = jnp.swapaxes(h_new, 1, 2)                  # [B, D, N]
    return jnp.stack(outs, axis=1), h


if __name__ == "__main__":
    B, T, N, F, D = 4, 4, 8, 4, 32   # block_b=2 -> grid=(2,), lane dim T*N*F=128

    key = jax.random.PRNGKey(0)
    keys = jax.random.split(key, 8)

    x = jax.random.normal(keys[0], (B, T, N, F), jnp.float32)
    h_state = jax.random.normal(keys[1], (B, D, N), jnp.float32)
    A = jax.random.uniform(keys[2], (B, N, N), jnp.float32)

    def lin(k, fan_in, fan_out):
        kw, kb = jax.random.split(k)
        bound = 1.0 / jnp.sqrt(fan_in)
        w = jax.random.uniform(kw, (fan_in, fan_out), jnp.float32, -bound, bound)
        b = jax.random.uniform(kb, (1, fan_out), jnp.float32, -bound, bound)
        return w, b

    wz, bz = lin(keys[3], D + F, D)   # resetGate (acts as GRU blend gate z)
    wr, br = lin(keys[4], D + F, D)   # updateGate (acts as multiplicative r)
    wt, bt = lin(keys[5], D + F, D)   # transform
    wo, bo = lin(keys[6], D, F)       # output
    params = (wz, bz, wr, br, wt, bt, wo, bo)

    O_ref, h_ref = grnn_reference(x, h_state, A, params)

    def _run_and_check(dense_output):
        O, h_out = grnn_forward(x, h_state, A, params, dense_output=dense_output)
        jax.block_until_ready((O, h_out))
        assert jnp.allclose(O, O_ref, atol=1e-4, rtol=1e-4), "O mismatch"
        assert jnp.allclose(h_out, h_ref, atol=1e-4, rtol=1e-4), "hState mismatch"

    try:
        _run_and_check(dense_output=True)    # lane-dense flat O slab (preferred)
    except Exception:
        # Fallback to the natural (Bb, T, N, F) output block if this Mosaic
        # build rejects the minor-dim reshape used for the dense slab.
        _run_and_check(dense_output=False)

    print("KERNEL_OK")
</pallas_src>

<mosaic_0001>
module attributes {stable_mosaic.version = 11 : i64} {
  func.func @grnn_kernel(%arg0: i32, %arg1: memref<2x4x8x4xf32, #tpu.memory_space<vmem>>, %arg2: memref<2x8x32xf32, #tpu.memory_space<vmem>>, %arg3: memref<2x8x8xf32, #tpu.memory_space<vmem>>, %arg4: memref<32x64xf32, #tpu.memory_space<vmem>>, %arg5: memref<32x32xf32, #tpu.memory_space<vmem>>, %arg6: memref<4x96xf32, #tpu.memory_space<vmem>>, %arg7: memref<1x96xf32, #tpu.memory_space<vmem>>, %arg8: memref<32x4xf32, #tpu.memory_space<vmem>>, %arg9: memref<1x4xf32, #tpu.memory_space<vmem>>, %arg10: memref<1x2x128xf32, #tpu.memory_space<vmem>>, %arg11: memref<2x8x32xf32, #tpu.memory_space<vmem>>, %arg12: memref<2x32x64xf32, #tpu.memory_space<vmem>>, %arg13: memref<2x32x32xf32, #tpu.memory_space<vmem>>, %arg14: memref<2x32x32xf32, #tpu.memory_space<vmem>>) attributes {dimension_semantics = [#tpu.dimension_semantics<parallel>], iteration_bounds = array<i64: 2>, scalar_prefetch = 0 : i64, scratch_operands = 3 : i64, tpu.core_type = #tpu.core_type<tc>, window_params = [{transform_indices = @transform_0, window_bounds = array<i64: 2, 4, 8, 4>}, {transform_indices = @transform_1, window_bounds = array<i64: 2, 8, 32>}, {transform_indices = @transform_2, window_bounds = array<i64: 2, 8, 8>}, {pipeline_mode = #tpu.pipeline_mode<synchronous>, transform_indices = @transform_3, window_bounds = array<i64: 32, 64>}, {pipeline_mode = #tpu.pipeline_mode<synchronous>, transform_indices = @transform_4, window_bounds = array<i64: 32, 32>}, {pipeline_mode = #tpu.pipeline_mode<synchronous>, transform_indices = @transform_5, window_bounds = array<i64: 4, 96>}, {pipeline_mode = #tpu.pipeline_mode<synchronous>, transform_indices = @transform_6, window_bounds = array<i64: 1, 96>}, {pipeline_mode = #tpu.pipeline_mode<synchronous>, transform_indices = @transform_7, window_bounds = array<i64: 32, 4>}, {pipeline_mode = #tpu.pipeline_mode<synchronous>, transform_indices = @transform_8, window_bounds = array<i64: 1, 4>}, {transform_indices = @transform_9, window_bounds = array<i64: 1, 2, 128>}, {transform_indices = @transform_10, window_bounds = array<i64: 2, 8, 32>}]} {
    %c0 = arith.constant 0 : index
    %c0_0 = arith.constant 0 : index
    %c0_1 = arith.constant 0 : index
    %0 = vector.load %arg3[%c0, %c0_0, %c0_1] : memref<2x8x8xf32, #tpu.memory_space<vmem>>, vector<2x8x8xf32>
    %c0_2 = arith.constant 0 : index
    %c0_3 = arith.constant 0 : index
    %c0_4 = arith.constant 0 : index
    %1 = vector.load %arg2[%c0_2, %c0_3, %c0_4] : memref<2x8x32xf32, #tpu.memory_space<vmem>>, vector<2x8x32xf32>
    %c0_5 = arith.constant 0 : index
    %c0_6 = arith.constant 0 : index
    %2 = vector.load %arg4[%c0_5, %c0_6] : memref<32x64xf32, #tpu.memory_space<vmem>>, vector<32x64xf32>
    %c0_7 = arith.constant 0 : index
    %c0_8 = arith.constant 0 : index
    %3 = vector.load %arg5[%c0_7, %c0_8] : memref<32x32xf32, #tpu.memory_space<vmem>>, vector<32x32xf32>
    %c0_9 = arith.constant 0 : index
    %c0_10 = arith.constant 0 : index
    %c0_11 = arith.constant 0 : index
    %c0_12 = arith.constant 0 : index
    %4 = vector.load %arg1[%c0_9, %c0_10, %c0_11, %c0_12] : memref<2x4x8x4xf32, #tpu.memory_space<vmem>>, vector<2x4x8x4xf32>
    %5 = vector.shape_cast %4 : vector<2x4x8x4xf32> to vector<64x4xf32>
    %c0_13 = arith.constant 0 : index
    %c0_14 = arith.constant 0 : index
    %6 = vector.load %arg6[%c0_13, %c0_14] : memref<4x96xf32, #tpu.memory_space<vmem>>, vector<4x96xf32>
    %cst = arith.constant dense<0.000000e+00> : vector<64x96xf32>
    %7 = tpu.matmul %5, %6, %cst {dimension_numbers = #tpu.dot_dimension_numbers<[1], [0], [0], [1], [0, 0, 1, 1], [], []>} : vector<64x4xf32>, vector<4x96xf32>, vector<64x96xf32> -> vector<64x96xf32>
    %c0_15 = arith.constant 0 : index
    %c0_16 = arith.constant 0 : index
    %8 = vector.load %arg7[%c0_15, %c0_16] : memref<1x96xf32, #tpu.memory_space<vmem>>, vector<1x96xf32>
    %9 = vector.broadcast %8 : vector<1x96xf32> to vector<64x96xf32>
    %10 = arith.addf %7, %9 : vector<64x96xf32>
    %11 = vector.shape_cast %10 : vector<64x96xf32> to vector<2x32x96xf32>
    %12 = vector.extract_strided_slice %11 {offsets = [0, 0, 0], sizes = [2, 32, 64], strides = [1, 1, 1]} : vector<2x32x96xf32> to vector<2x32x64xf32>
    %c0_17 = arith.constant 0 : index
    %c0_18 = arith.constant 0 : index
    %c0_19 = arith.constant 0 : index
    %13 = vector.load %arg12[%c0_17, %c0_18, %c0_19] : memref<2x32x64xf32, #tpu.memory_space<vmem>>, vector<2x32x64xf32>
    tpu.vector_store %arg12[%c0_17, %c0_18, %c0_19], %12 {strides = array<i32>} : memref<2x32x64xf32, #tpu.memory_space<vmem>>, vector<2x32x64xf32>,
    %14 = vector.extract_strided_slice %11 {offsets = [0, 0, 64], sizes = [2, 32, 32], strides = [1, 1, 1]} : vector<2x32x96xf32> to vector<2x32x32xf32>
    %c0_20 = arith.constant 0 : index
    %c0_21 = arith.constant 0 : index
    %c0_22 = arith.constant 0 : index
    %15 = vector.load %arg13[%c0_20, %c0_21, %c0_22] : memref<2x32x32xf32, #tpu.memory_space<vmem>>, vector<2x32x32xf32>
    tpu.vector_store %arg13[%c0_20, %c0_21, %c0_22], %14 {strides = array<i32>} : memref<2x32x32xf32, #tpu.memory_space<vmem>>, vector<2x32x32xf32>,
    "tpu.trace_start"() <{level = 10 : i32, message = "bnm,bmd->bnd"}> : () -> ()
    %cst_23 = arith.constant dense<0.000000e+00> : vector<2x8x32xf32>
    %16 = tpu.matmul %0, %1, %cst_23 {dimension_numbers = #tpu.dot_dimension_numbers<[2], [1], [1], [2], [0, 0, 0, 1, 1, 2], [0], [0]>} : vector<2x8x8xf32>, vector<2x8x32xf32>, vector<2x8x32xf32> -> vector<2x8x32xf32>
    "tpu.trace_stop"() : () -> ()
    %17 = vector.shape_cast %16 : vector<2x8x32xf32> to vector<16x32xf32>
    %c0_24 = arith.constant 0 : index
    %c0_25 = arith.constant 0 : index
    %c0_26 = arith.constant 0 : index
    %18 = vector.load %arg12[%c0_24, %c0_25, %c0_26] : memref<2x32x64xf32, #tpu.memory_space<vmem>>, vector<2x8x64xf32>
    %19 = vector.shape_cast %18 : vector<2x8x64xf32> to vector<16x64xf32>
    %c0_27 = arith.constant 0 : index
    %c0_28 = arith.constant 0 : index
    %c0_29 = arith.constant 0 : index
    %20 = vector.load %arg13[%c0_27, %c0_28, %c0_29] : memref<2x32x32xf32, #tpu.memory_space<vmem>>, vector<2x8x32xf32>
    %21 = vector.shape_cast %20 : vector<2x8x32xf32> to vector<16x32xf32>
    %cst_30 = arith.constant dense<0.000000e+00> : vector<16x64xf32>
    %22 = tpu.matmul %17, %2, %cst_30 {dimension_numbers = #tpu.dot_dimension_numbers<[1], [0], [0], [1], [0, 0, 1, 1], [], []>} : vector<16x32xf32>, vector<32x64xf32>, vector<16x64xf32> -> vector<16x64xf32>
    %23 = arith.addf %22, %19 : vector<16x64xf32>
    %24 = arith.negf %23 : vector<16x64xf32>
    %25 = math.exp %24 : vector<16x64xf32>
    %cst_31 = arith.constant 1.000000e+00 : f32
    %26 = vector.broadcast %cst_31 : f32 to vector<16x64xf32>
    %27 = arith.addf %26, %25 : vector<16x64xf32>
    %28 = arith.divf %26, %27 : vector<16x64xf32>
    %29 = vector.extract_strided_slice %28 {offsets = [0, 0], sizes = [16, 32], strides = [1, 1]} : vector<16x64xf32> to vector<16x32xf32>
    %30 = vector.extract_strided_slice %28 {offsets = [0, 32], sizes = [16, 32], strides = [1, 1]} : vector<16x64xf32> to vector<16x32xf32>
    %31 = arith.mulf %30, %17 : vector<16x32xf32>
    %cst_32 = arith.constant dense<0.000000e+00> : vector<16x32xf32>
    %32 = tpu.matmul %31, %3, %cst_32 {dimension_numbers = #tpu.dot_dimension_numbers<[1], [0], [0], [1], [0, 0, 1, 1], [], []>} : vector<16x32xf32>, vector<32x32xf32>, vector<16x32xf32> -> vector<16x32xf32>
    %33 = arith.addf %32, %21 : vector<16x32xf32>
    %34 = math.tanh %33 : vector<16x32xf32>
    %cst_33 = arith.constant 1.000000e+00 : f32
    %35 = vector.broadcast %cst_33 : f32 to vector<16x32xf32>
    %36 = arith.subf %35, %29 : vector<16x32xf32>
    %37 = arith.mulf %36, %17 : vector<16x32xf32>
    %38 = arith.mulf %29, %34 : vector<16x32xf32>
    %39 = arith.addf %37, %38 : vector<16x32xf32>
    %40 = vector.shape_cast %39 : vector<16x32xf32> to vector<2x8x32xf32>
    %c0_34 = arith.constant 0 : index
    %c0_35 = arith.constant 0 : index
    %c0_36 = arith.constant 0 : index
    %41 = vector.load %arg14[%c0_34, %c0_35, %c0_36] : memref<2x32x32xf32, #tpu.memory_space<vmem>>, vector<2x8x32xf32>
    tpu.vector_store %arg14[%c0_34, %c0_35, %c0_36], %40 {strides = array<i32>} : memref<2x32x32xf32, #tpu.memory_space<vmem>>, vector<2x8x32xf32>,
    "tpu.trace_start"() <{level = 10 : i32, message = "bnm,bmd->bnd"}> : () -> ()
    %cst_37 = arith.constant dense<0.000000e+00> : vector<2x8x32xf32>
    %42 = tpu.matmul %0, %40, %cst_37 {dimension_numbers = #tpu.dot_dimension_numbers<[2], [1], [1], [2], [0, 0, 0, 1, 1, 2], [0], [0]>} : vector<2x8x8xf32>, vector<2x8x32xf32>, vector<2x8x32xf32> -> vector<2x8x32xf32>
    "tpu.trace_stop"() : () -> ()
    %43 = vector.shape_cast %42 : vector<2x8x32xf32> to vector<16x32xf32>
    %c0_38 = arith.constant 0 : index
    %c8 = arith.constant 8 : index
    %c0_39 = arith.constant 0 : index
    %44 = vector.load %arg12[%c0_38, %c8, %c0_39] : memref<2x32x64xf32, #tpu.memory_space<vmem>>, vector<2x8x64xf32>
    %45 = vector.shape_cast %44 : vector<2x8x64xf32> to vector<16x64xf32>
    %c0_40 = arith.constant 0 : index
    %c8_41 = arith.constant 8 : index
    %c0_42 = arith.constant 0 : index
    %46 = vector.load %arg13[%c0_40, %c8_41, %c0_42] : memref<2x32x32xf32, #tpu.memory_space<vmem>>, vector<2x8x32xf32>
    %47 = vector.shape_cast %46 : vector<2x8x32xf32> to vector<16x32xf32>
    %cst_43 = arith.constant dense<0.000000e+00> : vector<16x64xf32>
    %48 = tpu.matmul %43, %2, %cst_43 {dimension_numbers = #tpu.dot_dimension_numbers<[1], [0], [0], [1], [0, 0, 1, 1], [], []>} : vector<16x32xf32>, vector<32x64xf32>, vector<16x64xf32> -> vector<16x64xf32>
    %49 = arith.addf %48, %45 : vector<16x64xf32>
    %50 = arith.negf %49 : vector<16x64xf32>
    %51 = math.exp %50 : vector<16x64xf32>
    %cst_44 = arith.constant 1.000000e+00 : f32
    %52 = vector.broadcast %cst_44 : f32 to vector<16x64xf32>
    %53 = arith.addf %52, %51 : vector<16x64xf32>
    %54 = arith.divf %52, %53 : vector<16x64xf32>
    %55 = vector.extract_strided_slice %54 {offsets = [0, 0], sizes = [16, 32], strides = [1, 1]} : vector<16x64xf32> to vector<16x32xf32>
    %56 = vector.extract_strided_slice %54 {offsets = [0, 32], sizes = [16, 32], strides = [1, 1]} : vector<16x64xf32> to vector<16x32xf32>
    %57 = arith.mulf %56, %43 : vector<16x32xf32>
    %cst_45 = arith.constant dense<0.000000e+00> : vector<16x32xf32>
    %58 = tpu.matmul %57, %3, %cst_45 {dimension_numbers = #tpu.dot_dimension_numbers<[1], [0], [0], [1], [0, 0, 1, 1], [], []>} : vector<16x32xf32>, vector<32x32xf32>, vector<16x32xf32> -> vector<16x32xf32>
    %59 = arith.addf %58, %47 : vector<16x32xf32>
    %60 = math.tanh %59 : vector<16x32xf32>
    %cst_46 = arith.constant 1.000000e+00 : f32
    %61 = vector.broadcast %cst_46 : f32 to vector<16x32xf32>
    %62 = arith.subf %61, %55 : vector<16x32xf32>
    %63 = arith.mulf %62, %43 : vector<16x32xf32>
    %64 = arith.mulf %55, %60 : vector<16x32xf32>
    %65 = arith.addf %63, %64 : vector<16x32xf32>
    %66 = vector.shape_cast %65 : vector<16x32xf32> to vector<2x8x32xf32>
    %c0_47 = arith.constant 0 : index
    %c8_48 = arith.constant 8 : index
    %c0_49 = arith.constant 0 : index
    %67 = vector.load %arg14[%c0_47, %c8_48, %c0_49] : memref<2x32x32xf32, #tpu.memory_space<vmem>>, vector<2x8x32xf32>
    tpu.vector_store %arg14[%c0_47, %c8_48, %c0_49], %66 {strides = array<i32>} : memref<2x32x32xf32, #tpu.memory_space<vmem>>, vector<2x8x32xf32>,
    "tpu.trace_start"() <{level = 10 : i32, message = "bnm,bmd->bnd"}> : () -> ()
    %cst_50 = arith.constant dense<0.000000e+00> : vector<2x8x32xf32>
    %68 = tpu.matmul %0, %66, %cst_50 {dimension_numbers = #tpu.dot_dimension_numbers<[2], [1], [1], [2], [0, 0, 0, 1, 1, 2], [0], [0]>} : vector<2x8x8xf32>, vector<2x8x32xf32>, vector<2x8x32xf32> -> vector<2x8x32xf32>
    "tpu.trace_stop"() : () -> ()
    %69 = vector.shape_cast %68 : vector<2x8x32xf32> to vector<16x32xf32>
    %c0_51 = arith.constant 0 : index
    %c16 = arith.constant 16 : index
    %c0_52 = arith.constant 0 : index
    %70 = vector.load %arg12[%c0_51, %c16, %c0_52] : memref<2x32x64xf32, #tpu.memory_space<vmem>>, vector<2x8x64xf32>
    %71 = vector.shape_cast %70 : vector<2x8x64xf32> to vector<16x64xf32>
    %c0_53 = arith.constant 0 : index
    %c16_54 = arith.constant 16 : index
    %c0_55 = arith.constant 0 : index
    %72 = vector.load %arg13[%c0_53, %c16_54, %c0_55] : memref<2x32x32xf32, #tpu.memory_space<vmem>>, vector<2x8x32xf32>
    %73 = vector.shape_cast %72 : vector<2x8x32xf32> to vector<16x32xf32>
    %cst_56 = arith.constant dense<0.000000e+00> : vector<16x64xf32>
    %74 = tpu.matmul %69, %2, %cst_56 {dimension_numbers = #tpu.dot_dimension_numbers<[1], [0], [0], [1], [0, 0, 1, 1], [], []>} : vector<16x32xf32>, vector<32x64xf32>, vector<16x64xf32> -> vector<16x64xf32>
    %75 = arith.addf %74, %71 : vector<16x64xf32>
    %76 = arith.negf %75 : vector<16x64xf32>
    %77 = math.exp %76 : vector<16x64xf32>
    %cst_57 = arith.constant 1.000000e+00 : f32
    %78 = vector.broadcast %cst_57 : f32 to vector<16x64xf32>
    %79 = arith.addf %78, %77 : vector<16x64xf32>
    %80 = arith.divf %78, %79 : vector<16x64xf32>
    %81 = vector.extract_strided_slice %80 {offsets = [0, 0], sizes = [16, 32], strides = [1, 1]} : vector<16x64xf32> to vector<16x32xf32>
    %82 = vector.extract_strided_slice %80 {offsets = [0, 32], sizes = [16, 32], strides = [1, 1]} : vector<16x64xf32> to vector<16x32xf32>
    %83 = arith.mulf %82, %69 : vector<16x32xf32>
    %cst_58 = arith.constant dense<0.000000e+00> : vector<16x32xf32>
    %84 = tpu.matmul %83, %3, %cst_58 {dimension_numbers = #tpu.dot_dimension_numbers<[1], [0], [0], [1], [0, 0, 1, 1], [], []>} : vector<16x32xf32>, vector<32x32xf32>, vector<16x32xf32> -> vector<16x32xf32>
    %85 = arith.addf %84, %73 : vector<16x32xf32>
    %86 = math.tanh %85 : vector<16x32xf32>
    %cst_59 = arith.constant 1.000000e+00 : f32
    %87 = vector.broadcast %cst_59 : f32 to vector<16x32xf32>
    %88 = arith.subf %87, %81 : vector<16x32xf32>
    %89 = arith.mulf %88, %69 : vector<16x32xf32>
    %90 = arith.mulf %81, %86 : vector<16x32xf32>
    %91 = arith.addf %89, %90 : vector<16x32xf32>
    %92 = vector.shape_cast %91 : vector<16x32xf32> to vector<2x8x32xf32>
    %c0_60 = arith.constant 0 : index
    %c16_61 = arith.constant 16 : index
    %c0_62 = arith.constant 0 : index
    %93 = vector.load %arg14[%c0_60, %c16_61, %c0_62] : memref<2x32x32xf32, #tpu.memory_space<vmem>>, vector<2x8x32xf32>
    tpu.vector_store %arg14[%c0_60, %c16_61, %c0_62], %92 {strides = array<i32>} : memref<2x32x32xf32, #tpu.memory_space<vmem>>, vector<2x8x32xf32>,
    "tpu.trace_start"() <{level = 10 : i32, message = "bnm,bmd->bnd"}> : () -> ()
    %cst_63 = arith.constant dense<0.000000e+00> : vector<2x8x32xf32>
    %94 = tpu.matmul %0, %92, %cst_63 {dimension_numbers = #tpu.dot_dimension_numbers<[2], [1], [1], [2], [0, 0, 0, 1, 1, 2], [0], [0]>} : vector<2x8x8xf32>, vector<2x8x32xf32>, vector<2x8x32xf32> -> vector<2x8x32xf32>
    "tpu.trace_stop"() : () -> ()
    %95 = vector.shape_cast %94 : vector<2x8x32xf32> to vector<16x32xf32>
    %c0_64 = arith.constant 0 : index
    %c24 = arith.constant 24 : index
    %c0_65 = arith.constant 0 : index
    %96 = vector.load %arg12[%c0_64, %c24, %c0_65] : memref<2x32x64xf32, #tpu.memory_space<vmem>>, vector<2x8x64xf32>
    %97 = vector.shape_cast %96 : vector<2x8x64xf32> to vector<16x64xf32>
    %c0_66 = arith.constant 0 : index
    %c24_67 = arith.constant 24 : index
    %c0_68 = arith.constant 0 : index
    %98 = vector.load %arg13[%c0_66, %c24_67, %c0_68] : memref<2x32x32xf32, #tpu.memory_space<vmem>>, vector<2x8x32xf32>
    %99 = vector.shape_cast %98 : vector<2x8x32xf32> to vector<16x32xf32>
    %cst_69 = arith.constant dense<0.000000e+00> : vector<16x64xf32>
    %100 = tpu.matmul %95, %2, %cst_69 {dimension_numbers = #tpu.dot_dimension_numbers<[1], [0], [0], [1], [0, 0, 1, 1], [], []>} : vector<16x32xf32>, vector<32x64xf32>, vector<16x64xf32> -> vector<16x64xf32>
    %101 = arith.addf %100, %97 : vector<16x64xf32>
    %102 = arith.negf %101 : vector<16x64xf32>
    %103 = math.exp %102 : vector<16x64xf32>
    %cst_70 = arith.constant 1.000000e+00 : f32
    %104 = vector.broadcast %cst_70 : f32 to vector<16x64xf32>
    %105 = arith.addf %104, %103 : vector<16x64xf32>
    %106 = arith.divf %104, %105 : vector<16x64xf32>
    %107 = vector.extract_strided_slice %106 {offsets = [0, 0], sizes = [16, 32], strides = [1, 1]} : vector<16x64xf32> to vector<16x32xf32>
    %108 = vector.extract_strided_slice %106 {offsets = [0, 32], sizes = [16, 32], strides = [1, 1]} : vector<16x64xf32> to vector<16x32xf32>
    %109 = arith.mulf %108, %95 : vector<16x32xf32>
    %cst_71 = arith.constant dense<0.000000e+00> : vector<16x32xf32>
    %110 = tpu.matmul %109, %3, %cst_71 {dimension_numbers = #tpu.dot_dimension_numbers<[1], [0], [0], [1], [0, 0, 1, 1], [], []>} : vector<16x32xf32>, vector<32x32xf32>, vector<16x32xf32> -> vector<16x32xf32>
    %111 = arith.addf %110, %99 : vector<16x32xf32>
    %112 = math.tanh %111 : vector<16x32xf32>
    %cst_72 = arith.constant 1.000000e+00 : f32
    %113 = vector.broadcast %cst_72 : f32 to vector<16x32xf32>
    %114 = arith.subf %113, %107 : vector<16x32xf32>
    %115 = arith.mulf %114, %95 : vector<16x32xf32>
    %116 = arith.mulf %107, %112 : vector<16x32xf32>
    %117 = arith.addf %115, %116 : vector<16x32xf32>
    %118 = vector.shape_cast %117 : vector<16x32xf32> to vector<2x8x32xf32>
    %c0_73 = arith.constant 0 : index
    %c24_74 = arith.constant 24 : index
    %c0_75 = arith.constant 0 : index
    %119 = vector.load %arg14[%c0_73, %c24_74, %c0_75] : memref<2x32x32xf32, #tpu.memory_space<vmem>>, vector<2x8x32xf32>
    tpu.vector_store %arg14[%c0_73, %c24_74, %c0_75], %118 {strides = array<i32>} : memref<2x32x32xf32, #tpu.memory_space<vmem>>, vector<2x8x32xf32>,
    %c0_76 = arith.constant 0 : index
    %c0_77 = arith.constant 0 : index
    %c0_78 = arith.constant 0 : index
    %120 = vector.load %arg11[%c0_76, %c0_77, %c0_78] : memref<2x8x32xf32, #tpu.memory_space<vmem>>, vector<2x8x32xf32>
    tpu.vector_store %arg11[%c0_76, %c0_77, %c0_78], %118 {strides = array<i32>} : memref<2x8x32xf32, #tpu.memory_space<vmem>>, vector<2x8x32xf32>,
    %c0_79 = arith.constant 0 : index
    %c0_80 = arith.constant 0 : index
    %c0_81 = arith.constant 0 : index
    %121 = vector.load %arg14[%c0_79, %c0_80, %c0_81] : memref<2x32x32xf32, #tpu.memory_space<vmem>>, vector<2x32x32xf32>
    %122 = vector.shape_cast %121 : vector<2x32x32xf32> to vector<64x32xf32>
    %c0_82 = arith.constant 0 : index
    %c0_83 = arith.constant 0 : index
    %123 = vector.load %arg8[%c0_82, %c0_83] : memref<32x4xf32, #tpu.memory_space<vmem>>, vector<32x4xf32>
    %cst_84 = arith.constant dense<0.000000e+00> : vector<64x4xf32>
    %124 = tpu.matmul %122, %123, %cst_84 {dimension_numbers = #tpu.dot_dimension_numbers<[1], [0], [0], [1], [0, 0, 1, 1], [], []>} : vector<64x32xf32>, vector<32x4xf32>, vector<64x4xf32> -> vector<64x4xf32>
    %c0_85 = arith.constant 0 : index
    %c0_86 = arith.constant 0 : index
    %125 = vector.load %arg9[%c0_85, %c0_86] : memref<1x4xf32, #tpu.memory_space<vmem>>, vector<1x4xf32>
    %126 = vector.broadcast %125 : vector<1x4xf32> to vector<64x4xf32>
    %127 = arith.addf %124, %126 : vector<64x4xf32>
    %128 = vector.shape_cast %127 : vector<64x4xf32> to vector<2x128xf32>
    %129 = arith.negf %128 : vector<2x128xf32>
    %130 = math.exp %129 : vector<2x128xf32>
    %cst_87 = arith.constant 1.000000e+00 : f32
    %131 = vector.broadcast %cst_87 : f32 to vector<2x128xf32>
    %132 = arith.addf %131, %130 : vector<2x128xf32>
    %133 = arith.divf %131, %132 : vector<2x128xf32>
    %c0_88 = arith.constant 0 : index
    %c0_89 = arith.constant 0 : index
    %c0_90 = arith.constant 0 : index
    %134 = vector.load %arg10[%c0_88, %c0_89, %c0_90] : memref<1x2x128xf32, #tpu.memory_space<vmem>>, vector<1x2x128xf32>
    %135 = vector.shape_cast %134 : vector<1x2x128xf32> to vector<2x128xf32>
    %136 = vector.shape_cast %133 : vector<2x128xf32> to vector<1x2x128xf32>
    tpu.vector_store %arg10[%c0_88, %c0_89, %c0_90], %136 {strides = array<i32>} : memref<1x2x128xf32, #tpu.memory_space<vmem>>, vector<1x2x128xf32>,
    return
  }
  func.func @transform_0(%arg0: i32) -> (i32, i32, i32, i32) {
    %c0_i32 = arith.constant 0 : i32
    %c0_i32_0 = arith.constant 0 : i32
    %c0_i32_1 = arith.constant 0 : i32
    %c0_i32_2 = arith.constant 0 : i32
    return %arg0, %c0_i32, %c0_i32_0, %c0_i32_1 : i32, i32, i32, i32
  }
  func.func @transform_1(%arg0: i32) -> (i32, i32, i32) {
    %c0_i32 = arith.constant 0 : i32
    %c0_i32_0 = arith.constant 0 : i32
    %c0_i32_1 = arith.constant 0 : i32
    return %arg0, %c0_i32, %c0_i32_0 : i32, i32, i32
  }
  func.func @transform_2(%arg0: i32) -> (i32, i32, i32) {
    %c0_i32 = arith.constant 0 : i32
    %c0_i32_0 = arith.constant 0 : i32
    %c0_i32_1 = arith.constant 0 : i32
    return %arg0, %c0_i32, %c0_i32_0 : i32, i32, i32
  }
  func.func @transform_3(%arg0: i32) -> (i32, i32) {
    %c0_i32 = arith.constant 0 : i32
    %c0_i32_0 = arith.constant 0 : i32
    %c0_i32_1 = arith.constant 0 : i32
    return %c0_i32, %c0_i32_0 : i32, i32
  }
  func.func @transform_4(%arg0: i32) -> (i32, i32) {
    %c0_i32 = arith.constant 0 : i32
    %c0_i32_0 = arith.constant 0 : i32
    %c0_i32_1 = arith.constant 0 : i32
    return %c0_i32, %c0_i32_0 : i32, i32
  }
  func.func @transform_5(%arg0: i32) -> (i32, i32) {
    %c0_i32 = arith.constant 0 : i32
    %c0_i32_0 = arith.constant 0 : i32
    %c0_i32_1 = arith.constant 0 : i32
    return %c0_i32, %c0_i32_0 : i32, i32
  }
  func.func @transform_6(%arg0: i32) -> (i32, i32) {
    %c0_i32 = arith.constant 0 : i32
    %c0_i32_0 = arith.constant 0 : i32
    %c0_i32_1 = arith.constant 0 : i32
    return %c0_i32, %c0_i32_0 : i32, i32
  }
  func.func @transform_7(%arg0: i32) -> (i32, i32) {
    %c0_i32 = arith.constant 0 : i32
    %c0_i32_0 = arith.constant 0 : i32
    %c0_i32_1 = arith.constant 0 : i32
    return %c0_i32, %c0_i32_0 : i32, i32
  }
  func.func @transform_8(%arg0: i32) -> (i32, i32) {
    %c0_i32 = arith.constant 0 : i32
    %c0_i32_0 = arith.constant 0 : i32
    %c0_i32_1 = arith.constant 0 : i32
    return %c0_i32, %c0_i32_0 : i32, i32
  }
  func.func @transform_9(%arg0: i32) -> (i32, i32, i32) {
    %c0_i32 = arith.constant 0 : i32
    %c0_i32_0 = arith.constant 0 : i32
    %c0_i32_1 = arith.constant 0 : i32
    return %arg0, %c0_i32, %c0_i32_0 : i32, i32, i32
  }
  func.func @transform_10(%arg0: i32) -> (i32, i32, i32) {
    %c0_i32 = arith.constant 0 : i32
    %c0_i32_0 = arith.constant 0 : i32
    %c0_i32_1 = arith.constant 0 : i32
    return %arg0, %c0_i32, %c0_i32_0 : i32, i32, i32
  }
}

module attributes {stable_mosaic.version = 11 : i64} {
  func.func @grnn_kernel(%arg0: i32, %arg1: memref<2x4x8x4xf32, #tpu.memory_space<vmem>>, %arg2: memref<2x8x32xf32, #tpu.memory_space<vmem>>, %arg3: memref<2x8x8xf32, #tpu.memory_space<vmem>>, %arg4: memref<32x64xf32, #tpu.memory_space<vmem>>, %arg5: memref<32x32xf32, #tpu.memory_space<vmem>>, %arg6: memref<4x96xf32, #tpu.memory_space<vmem>>, %arg7: memref<1x96xf32, #tpu.memory_space<vmem>>, %arg8: memref<32x4xf32, #tpu.memory_space<vmem>>, %arg9: memref<1x4xf32, #tpu.memory_space<vmem>>, %arg10: memref<2x4x8x4xf32, #tpu.memory_space<vmem>>, %arg11: memref<2x8x32xf32, #tpu.memory_space<vmem>>, %arg12: memref<2x32x64xf32, #tpu.memory_space<vmem>>, %arg13: memref<2x32x32xf32, #tpu.memory_space<vmem>>, %arg14: memref<2x32x32xf32, #tpu.memory_space<vmem>>) attributes {dimension_semantics = [#tpu.dimension_semantics<parallel>], iteration_bounds = array<i64: 2>, scalar_prefetch = 0 : i64, scratch_operands = 3 : i64, tpu.core_type = #tpu.core_type<tc>, window_params = [{transform_indices = @transform_0, window_bounds = array<i64: 2, 4, 8, 4>}, {transform_indices = @transform_1, window_bounds = array<i64: 2, 8, 32>}, {transform_indices = @transform_2, window_bounds = array<i64: 2, 8, 8>}, {pipeline_mode = #tpu.pipeline_mode<synchronous>, transform_indices = @transform_3, window_bounds = array<i64: 32, 64>}, {pipeline_mode = #tpu.pipeline_mode<synchronous>, transform_indices = @transform_4, window_bounds = array<i64: 32, 32>}, {pipeline_mode = #tpu.pipeline_mode<synchronous>, transform_indices = @transform_5, window_bounds = array<i64: 4, 96>}, {pipeline_mode = #tpu.pipeline_mode<synchronous>, transform_indices = @transform_6, window_bounds = array<i64: 1, 96>}, {pipeline_mode = #tpu.pipeline_mode<synchronous>, transform_indices = @transform_7, window_bounds = array<i64: 32, 4>}, {pipeline_mode = #tpu.pipeline_mode<synchronous>, transform_indices = @transform_8, window_bounds = array<i64: 1, 4>}, {transform_indices = @transform_9, window_bounds = array<i64: 2, 4, 8, 4>}, {transform_indices = @transform_10, window_bounds = array<i64: 2, 8, 32>}]} {
    %c0 = arith.constant 0 : index
    %c0_0 = arith.constant 0 : index
    %c0_1 = arith.constant 0 : index
    %0 = vector.load %arg3[%c0, %c0_0, %c0_1] : memref<2x8x8xf32, #tpu.memory_space<vmem>>, vector<2x8x8xf32>
    %c0_2 = arith.constant 0 : index
    %c0_3 = arith.constant 0 : index
    %c0_4 = arith.constant 0 : index
    %1 = vector.load %arg2[%c0_2, %c0_3, %c0_4] : memref<2x8x32xf32, #tpu.memory_space<vmem>>, vector<2x8x32xf32>
    %c0_5 = arith.constant 0 : index
    %c0_6 = arith.constant 0 : index
    %2 = vector.load %arg4[%c0_5, %c0_6] : memref<32x64xf32, #tpu.memory_space<vmem>>, vector<32x64xf32>
    %c0_7 = arith.constant 0 : index
    %c0_8 = arith.constant 0 : index
    %3 = vector.load %arg5[%c0_7, %c0_8] : memref<32x32xf32, #tpu.memory_space<vmem>>, vector<32x32xf32>
    %c0_9 = arith.constant 0 : index
    %c0_10 = arith.constant 0 : index
    %c0_11 = arith.constant 0 : index
    %c0_12 = arith.constant 0 : index
    %4 = vector.load %arg1[%c0_9, %c0_10, %c0_11, %c0_12] : memref<2x4x8x4xf32, #tpu.memory_space<vmem>>, vector<2x4x8x4xf32>
    %5 = vector.shape_cast %4 : vector<2x4x8x4xf32> to vector<64x4xf32>
    %c0_13 = arith.constant 0 : index
    %c0_14 = arith.constant 0 : index
    %6 = vector.load %arg6[%c0_13, %c0_14] : memref<4x96xf32, #tpu.memory_space<vmem>>, vector<4x96xf32>
    %cst = arith.constant dense<0.000000e+00> : vector<64x96xf32>
    %7 = tpu.matmul %5, %6, %cst {dimension_numbers = #tpu.dot_dimension_numbers<[1], [0], [0], [1], [0, 0, 1, 1], [], []>} : vector<64x4xf32>, vector<4x96xf32>, vector<64x96xf32> -> vector<64x96xf32>
    %c0_15 = arith.constant 0 : index
    %c0_16 = arith.constant 0 : index
    %8 = vector.load %arg7[%c0_15, %c0_16] : memref<1x96xf32, #tpu.memory_space<vmem>>, vector<1x96xf32>
    %9 = vector.broadcast %8 : vector<1x96xf32> to vector<64x96xf32>
    %10 = arith.addf %7, %9 : vector<64x96xf32>
    %11 = vector.shape_cast %10 : vector<64x96xf32> to vector<2x32x96xf32>
    %12 = vector.extract_strided_slice %11 {offsets = [0, 0, 0], sizes = [2, 32, 64], strides = [1, 1, 1]} : vector<2x32x96xf32> to vector<2x32x64xf32>
    %c0_17 = arith.constant 0 : index
    %c0_18 = arith.constant 0 : index
    %c0_19 = arith.constant 0 : index
    %13 = vector.load %arg12[%c0_17, %c0_18, %c0_19] : memref<2x32x64xf32, #tpu.memory_space<vmem>>, vector<2x32x64xf32>
    tpu.vector_store %arg12[%c0_17, %c0_18, %c0_19], %12 {strides = array<i32>} : memref<2x32x64xf32, #tpu.memory_space<vmem>>, vector<2x32x64xf32>,
    %14 = vector.extract_strided_slice %11 {offsets = [0, 0, 64], sizes = [2, 32, 32], strides = [1, 1, 1]} : vector<2x32x96xf32> to vector<2x32x32xf32>
    %c0_20 = arith.constant 0 : index
    %c0_21 = arith.constant 0 : index
    %c0_22 = arith.constant 0 : index
    %15 = vector.load %arg13[%c0_20, %c0_21, %c0_22] : memref<2x32x32xf32, #tpu.memory_space<vmem>>, vector<2x32x32xf32>
    tpu.vector_store %arg13[%c0_20, %c0_21, %c0_22], %14 {strides = array<i32>} : memref<2x32x32xf32, #tpu.memory_space<vmem>>, vector<2x32x32xf32>,
    "tpu.trace_start"() <{level = 10 : i32, message = "bnm,bmd->bnd"}> : () -> ()
    %cst_23 = arith.constant dense<0.000000e+00> : vector<2x8x32xf32>
    %16 = tpu.matmul %0, %1, %cst_23 {dimension_numbers = #tpu.dot_dimension_numbers<[2], [1], [1], [2], [0, 0, 0, 1, 1, 2], [0], [0]>} : vector<2x8x8xf32>, vector<2x8x32xf32>, vector<2x8x32xf32> -> vector<2x8x32xf32>
    "tpu.trace_stop"() : () -> ()
    %17 = vector.shape_cast %16 : vector<2x8x32xf32> to vector<16x32xf32>
    %c0_24 = arith.constant 0 : index
    %c0_25 = arith.constant 0 : index
    %c0_26 = arith.constant 0 : index
    %18 = vector.load %arg12[%c0_24, %c0_25, %c0_26] : memref<2x32x64xf32, #tpu.memory_space<vmem>>, vector<2x8x64xf32>
    %19 = vector.shape_cast %18 : vector<2x8x64xf32> to vector<16x64xf32>
    %c0_27 = arith.constant 0 : index
    %c0_28 = arith.constant 0 : index
    %c0_29 = arith.constant 0 : index
    %20 = vector.load %arg13[%c0_27, %c0_28, %c0_29] : memref<2x32x32xf32, #tpu.memory_space<vmem>>, vector<2x8x32xf32>
    %21 = vector.shape_cast %20 : vector<2x8x32xf32> to vector<16x32xf32>
    %cst_30 = arith.constant dense<0.000000e+00> : vector<16x64xf32>
    %22 = tpu.matmul %17, %2, %cst_30 {dimension_numbers = #tpu.dot_dimension_numbers<[1], [0], [0], [1], [0, 0, 1, 1], [], []>} : vector<16x32xf32>, vector<32x64xf32>, vector<16x64xf32> -> vector<16x64xf32>
    %23 = arith.addf %22, %19 : vector<16x64xf32>
    %24 = arith.negf %23 : vector<16x64xf32>
    %25 = math.exp %24 : vector<16x64xf32>
    %cst_31 = arith.constant 1.000000e+00 : f32
    %26 = vector.broadcast %cst_31 : f32 to vector<16x64xf32>
    %27 = arith.addf %26, %25 : vector<16x64xf32>
    %28 = arith.divf %26, %27 : vector<16x64xf32>
    %29 = vector.extract_strided_slice %28 {offsets = [0, 0], sizes = [16, 32], strides = [1, 1]} : vector<16x64xf32> to vector<16x32xf32>
    %30 = vector.extract_strided_slice %28 {offsets = [0, 32], sizes = [16, 32], strides = [1, 1]} : vector<16x64xf32> to vector<16x32xf32>
    %31 = arith.mulf %30, %17 : vector<16x32xf32>
    %cst_32 = arith.constant dense<0.000000e+00> : vector<16x32xf32>
    %32 = tpu.matmul %31, %3, %cst_32 {dimension_numbers = #tpu.dot_dimension_numbers<[1], [0], [0], [1], [0, 0, 1, 1], [], []>} : vector<16x32xf32>, vector<32x32xf32>, vector<16x32xf32> -> vector<16x32xf32>
    %33 = arith.addf %32, %21 : vector<16x32xf32>
    %34 = math.tanh %33 : vector<16x32xf32>
    %cst_33 = arith.constant 1.000000e+00 : f32
    %35 = vector.broadcast %cst_33 : f32 to vector<16x32xf32>
    %36 = arith.subf %35, %29 : vector<16x32xf32>
    %37 = arith.mulf %36, %17 : vector<16x32xf32>
    %38 = arith.mulf %29, %34 : vector<16x32xf32>
    %39 = arith.addf %37, %38 : vector<16x32xf32>
    %40 = vector.shape_cast %39 : vector<16x32xf32> to vector<2x8x32xf32>
    %c0_34 = arith.constant 0 : index
    %c0_35 = arith.constant 0 : index
    %c0_36 = arith.constant 0 : index
    %41 = vector.load %arg14[%c0_34, %c0_35, %c0_36] : memref<2x32x32xf32, #tpu.memory_space<vmem>>, vector<2x8x32xf32>
    tpu.vector_store %arg14[%c0_34, %c0_35, %c0_36], %40 {strides = array<i32>} : memref<2x32x32xf32, #tpu.memory_space<vmem>>, vector<2x8x32xf32>,
    "tpu.trace_start"() <{level = 10 : i32, message = "bnm,bmd->bnd"}> : () -> ()
    %cst_37 = arith.constant dense<0.000000e+00> : vector<2x8x32xf32>
    %42 = tpu.matmul %0, %40, %cst_37 {dimension_numbers = #tpu.dot_dimension_numbers<[2], [1], [1], [2], [0, 0, 0, 1, 1, 2], [0], [0]>} : vector<2x8x8xf32>, vector<2x8x32xf32>, vector<2x8x32xf32> -> vector<2x8x32xf32>
    "tpu.trace_stop"() : () -> ()
    %43 = vector.shape_cast %42 : vector<2x8x32xf32> to vector<16x32xf32>
    %c0_38 = arith.constant 0 : index
    %c8 = arith.constant 8 : index
    %c0_39 = arith.constant 0 : index
    %44 = vector.load %arg12[%c0_38, %c8, %c0_39] : memref<2x32x64xf32, #tpu.memory_space<vmem>>, vector<2x8x64xf32>
    %45 = vector.shape_cast %44 : vector<2x8x64xf32> to vector<16x64xf32>
    %c0_40 = arith.constant 0 : index
    %c8_41 = arith.constant 8 : index
    %c0_42 = arith.constant 0 : index
    %46 = vector.load %arg13[%c0_40, %c8_41, %c0_42] : memref<2x32x32xf32, #tpu.memory_space<vmem>>, vector<2x8x32xf32>
    %47 = vector.shape_cast %46 : vector<2x8x32xf32> to vector<16x32xf32>
    %cst_43 = arith.constant dense<0.000000e+00> : vector<16x64xf32>
    %48 = tpu.matmul %43, %2, %cst_43 {dimension_numbers = #tpu.dot_dimension_numbers<[1], [0], [0], [1], [0, 0, 1, 1], [], []>} : vector<16x32xf32>, vector<32x64xf32>, vector<16x64xf32> -> vector<16x64xf32>
    %49 = arith.addf %48, %45 : vector<16x64xf32>
    %50 = arith.negf %49 : vector<16x64xf32>
    %51 = math.exp %50 : vector<16x64xf32>
    %cst_44 = arith.constant 1.000000e+00 : f32
    %52 = vector.broadcast %cst_44 : f32 to vector<16x64xf32>
    %53 = arith.addf %52, %51 : vector<16x64xf32>
    %54 = arith.divf %52, %53 : vector<16x64xf32>
    %55 = vector.extract_strided_slice %54 {offsets = [0, 0], sizes = [16, 32], strides = [1, 1]} : vector<16x64xf32> to vector<16x32xf32>
    %56 = vector.extract_strided_slice %54 {offsets = [0, 32], sizes = [16, 32], strides = [1, 1]} : vector<16x64xf32> to vector<16x32xf32>
    %57 = arith.mulf %56, %43 : vector<16x32xf32>
    %cst_45 = arith.constant dense<0.000000e+00> : vector<16x32xf32>
    %58 = tpu.matmul %57, %3, %cst_45 {dimension_numbers = #tpu.dot_dimension_numbers<[1], [0], [0], [1], [0, 0, 1, 1], [], []>} : vector<16x32xf32>, vector<32x32xf32>, vector<16x32xf32> -> vector<16x32xf32>
    %59 = arith.addf %58, %47 : vector<16x32xf32>
    %60 = math.tanh %59 : vector<16x32xf32>
    %cst_46 = arith.constant 1.000000e+00 : f32
    %61 = vector.broadcast %cst_46 : f32 to vector<16x32xf32>
    %62 = arith.subf %61, %55 : vector<16x32xf32>
    %63 = arith.mulf %62, %43 : vector<16x32xf32>
    %64 = arith.mulf %55, %60 : vector<16x32xf32>
    %65 = arith.addf %63, %64 : vector<16x32xf32>
    %66 = vector.shape_cast %65 : vector<16x32xf32> to vector<2x8x32xf32>
    %c0_47 = arith.constant 0 : index
    %c8_48 = arith.constant 8 : index
    %c0_49 = arith.constant 0 : index
    %67 = vector.load %arg14[%c0_47, %c8_48, %c0_49] : memref<2x32x32xf32, #tpu.memory_space<vmem>>, vector<2x8x32xf32>
    tpu.vector_store %arg14[%c0_47, %c8_48, %c0_49], %66 {strides = array<i32>} : memref<2x32x32xf32, #tpu.memory_space<vmem>>, vector<2x8x32xf32>,
    "tpu.trace_start"() <{level = 10 : i32, message = "bnm,bmd->bnd"}> : () -> ()
    %cst_50 = arith.constant dense<0.000000e+00> : vector<2x8x32xf32>
    %68 = tpu.matmul %0, %66, %cst_50 {dimension_numbers = #tpu.dot_dimension_numbers<[2], [1], [1], [2], [0, 0, 0, 1, 1, 2], [0], [0]>} : vector<2x8x8xf32>, vector<2x8x32xf32>, vector<2x8x32xf32> -> vector<2x8x32xf32>
    "tpu.trace_stop"() : () -> ()
    %69 = vector.shape_cast %68 : vector<2x8x32xf32> to vector<16x32xf32>
    %c0_51 = arith.constant 0 : index
    %c16 = arith.constant 16 : index
    %c0_52 = arith.constant 0 : index
    %70 = vector.load %arg12[%c0_51, %c16, %c0_52] : memref<2x32x64xf32, #tpu.memory_space<vmem>>, vector<2x8x64xf32>
    %71 = vector.shape_cast %70 : vector<2x8x64xf32> to vector<16x64xf32>
    %c0_53 = arith.constant 0 : index
    %c16_54 = arith.constant 16 : index
    %c0_55 = arith.constant 0 : index
    %72 = vector.load %arg13[%c0_53, %c16_54, %c0_55] : memref<2x32x32xf32, #tpu.memory_space<vmem>>, vector<2x8x32xf32>
    %73 = vector.shape_cast %72 : vector<2x8x32xf32> to vector<16x32xf32>
    %cst_56 = arith.constant dense<0.000000e+00> : vector<16x64xf32>
    %74 = tpu.matmul %69, %2, %cst_56 {dimension_numbers = #tpu.dot_dimension_numbers<[1], [0], [0], [1], [0, 0, 1, 1], [], []>} : vector<16x32xf32>, vector<32x64xf32>, vector<16x64xf32> -> vector<16x64xf32>
    %75 = arith.addf %74, %71 : vector<16x64xf32>
    %76 = arith.negf %75 : vector<16x64xf32>
    %77 = math.exp %76 : vector<16x64xf32>
    %cst_57 = arith.constant 1.000000e+00 : f32
    %78 = vector.broadcast %cst_57 : f32 to vector<16x64xf32>
    %79 = arith.addf %78, %77 : vector<16x64xf32>
    %80 = arith.divf %78, %79 : vector<16x64xf32>
    %81 = vector.extract_strided_slice %80 {offsets = [0, 0], sizes = [16, 32], strides = [1, 1]} : vector<16x64xf32> to vector<16x32xf32>
    %82 = vector.extract_strided_slice %80 {offsets = [0, 32], sizes = [16, 32], strides = [1, 1]} : vector<16x64xf32> to vector<16x32xf32>
    %83 = arith.mulf %82, %69 : vector<16x32xf32>
    %cst_58 = arith.constant dense<0.000000e+00> : vector<16x32xf32>
    %84 = tpu.matmul %83, %3, %cst_58 {dimension_numbers = #tpu.dot_dimension_numbers<[1], [0], [0], [1], [0, 0, 1, 1], [], []>} : vector<16x32xf32>, vector<32x32xf32>, vector<16x32xf32> -> vector<16x32xf32>
    %85 = arith.addf %84, %73 : vector<16x32xf32>
    %86 = math.tanh %85 : vector<16x32xf32>
    %cst_59 = arith.constant 1.000000e+00 : f32
    %87 = vector.broadcast %cst_59 : f32 to vector<16x32xf32>
    %88 = arith.subf %87, %81 : vector<16x32xf32>
    %89 = arith.mulf %88, %69 : vector<16x32xf32>
    %90 = arith.mulf %81, %86 : vector<16x32xf32>
    %91 = arith.addf %89, %90 : vector<16x32xf32>
    %92 = vector.shape_cast %91 : vector<16x32xf32> to vector<2x8x32xf32>
    %c0_60 = arith.constant 0 : index
    %c16_61 = arith.constant 16 : index
    %c0_62 = arith.constant 0 : index
    %93 = vector.load %arg14[%c0_60, %c16_61, %c0_62] : memref<2x32x32xf32, #tpu.memory_space<vmem>>, vector<2x8x32xf32>
    tpu.vector_store %arg14[%c0_60, %c16_61, %c0_62], %92 {strides = array<i32>} : memref<2x32x32xf32, #tpu.memory_space<vmem>>, vector<2x8x32xf32>,
    "tpu.trace_start"() <{level = 10 : i32, message = "bnm,bmd->bnd"}> : () -> ()
    %cst_63 = arith.constant dense<0.000000e+00> : vector<2x8x32xf32>
    %94 = tpu.matmul %0, %92, %cst_63 {dimension_numbers = #tpu.dot_dimension_numbers<[2], [1], [1], [2], [0, 0, 0, 1, 1, 2], [0], [0]>} : vector<2x8x8xf32>, vector<2x8x32xf32>, vector<2x8x32xf32> -> vector<2x8x32xf32>
    "tpu.trace_stop"() : () -> ()
    %95 = vector.shape_cast %94 : vector<2x8x32xf32> to vector<16x32xf32>
    %c0_64 = arith.constant 0 : index
    %c24 = arith.constant 24 : index
    %c0_65 = arith.constant 0 : index
    %96 = vector.load %arg12[%c0_64, %c24, %c0_65] : memref<2x32x64xf32, #tpu.memory_space<vmem>>, vector<2x8x64xf32>
    %97 = vector.shape_cast %96 : vector<2x8x64xf32> to vector<16x64xf32>
    %c0_66 = arith.constant 0 : index
    %c24_67 = arith.constant 24 : index
    %c0_68 = arith.constant 0 : index
    %98 = vector.load %arg13[%c0_66, %c24_67, %c0_68] : memref<2x32x32xf32, #tpu.memory_space<vmem>>, vector<2x8x32xf32>
    %99 = vector.shape_cast %98 : vector<2x8x32xf32> to vector<16x32xf32>
    %cst_69 = arith.constant dense<0.000000e+00> : vector<16x64xf32>
    %100 = tpu.matmul %95, %2, %cst_69 {dimension_numbers = #tpu.dot_dimension_numbers<[1], [0], [0], [1], [0, 0, 1, 1], [], []>} : vector<16x32xf32>, vector<32x64xf32>, vector<16x64xf32> -> vector<16x64xf32>
    %101 = arith.addf %100, %97 : vector<16x64xf32>
    %102 = arith.negf %101 : vector<16x64xf32>
    %103 = math.exp %102 : vector<16x64xf32>
    %cst_70 = arith.constant 1.000000e+00 : f32
    %104 = vector.broadcast %cst_70 : f32 to vector<16x64xf32>
    %105 = arith.addf %104, %103 : vector<16x64xf32>
    %106 = arith.divf %104, %105 : vector<16x64xf32>
    %107 = vector.extract_strided_slice %106 {offsets = [0, 0], sizes = [16, 32], strides = [1, 1]} : vector<16x64xf32> to vector<16x32xf32>
    %108 = vector.extract_strided_slice %106 {offsets = [0, 32], sizes = [16, 32], strides = [1, 1]} : vector<16x64xf32> to vector<16x32xf32>
    %109 = arith.mulf %108, %95 : vector<16x32xf32>
    %cst_71 = arith.constant dense<0.000000e+00> : vector<16x32xf32>
    %110 = tpu.matmul %109, %3, %cst_71 {dimension_numbers = #tpu.dot_dimension_numbers<[1], [0], [0], [1], [0, 0, 1, 1], [], []>} : vector<16x32xf32>, vector<32x32xf32>, vector<16x32xf32> -> vector<16x32xf32>
    %111 = arith.addf %110, %99 : vector<16x32xf32>
    %112 = math.tanh %111 : vector<16x32xf32>
    %cst_72 = arith.constant 1.000000e+00 : f32
    %113 = vector.broadcast %cst_72 : f32 to vector<16x32xf32>
    %114 = arith.subf %113, %107 : vector<16x32xf32>
    %115 = arith.mulf %114, %95 : vector<16x32xf32>
    %116 = arith.mulf %107, %112 : vector<16x32xf32>
    %117 = arith.addf %115, %116 : vector<16x32xf32>
    %118 = vector.shape_cast %117 : vector<16x32xf32> to vector<2x8x32xf32>
    %c0_73 = arith.constant 0 : index
    %c24_74 = arith.constant 24 : index
    %c0_75 = arith.constant 0 : index
    %119 = vector.load %arg14[%c0_73, %c24_74, %c0_75] : memref<2x32x32xf32, #tpu.memory_space<vmem>>, vector<2x8x32xf32>
    tpu.vector_store %arg14[%c0_73, %c24_74, %c0_75], %118 {strides = array<i32>} : memref<2x32x32xf32, #tpu.memory_space<vmem>>, vector<2x8x32xf32>,
    %c0_76 = arith.constant 0 : index
    %c0_77 = arith.constant 0 : index
    %c0_78 = arith.constant 0 : index
    %120 = vector.load %arg11[%c0_76, %c0_77, %c0_78] : memref<2x8x32xf32, #tpu.memory_space<vmem>>, vector<2x8x32xf32>
    tpu.vector_store %arg11[%c0_76, %c0_77, %c0_78], %118 {strides = array<i32>} : memref<2x8x32xf32, #tpu.memory_space<vmem>>, vector<2x8x32xf32>,
    %c0_79 = arith.constant 0 : index
    %c0_80 = arith.constant 0 : index
    %c0_81 = arith.constant 0 : index
    %121 = vector.load %arg14[%c0_79, %c0_80, %c0_81] : memref<2x32x32xf32, #tpu.memory_space<vmem>>, vector<2x32x32xf32>
    %122 = vector.shape_cast %121 : vector<2x32x32xf32> to vector<64x32xf32>
    %c0_82 = arith.constant 0 : index
    %c0_83 = arith.constant 0 : index
    %123 = vector.load %arg8[%c0_82, %c0_83] : memref<32x4xf32, #tpu.memory_space<vmem>>, vector<32x4xf32>
    %cst_84 = arith.constant dense<0.000000e+00> : vector<64x4xf32>
    %124 = tpu.matmul %122, %123, %cst_84 {dimension_numbers = #tpu.dot_dimension_numbers<[1], [0], [0], [1], [0, 0, 1, 1], [], []>} : vector<64x32xf32>, vector<32x4xf32>, vector<64x4xf32> -> vector<64x4xf32>
    %c0_85 = arith.constant 0 : index
    %c0_86 = arith.constant 0 : index
    %125 = vector.load %arg9[%c0_85, %c0_86] : memref<1x4xf32, #tpu.memory_space<vmem>>, vector<1x4xf32>
    %126 = vector.broadcast %125 : vector<1x4xf32> to vector<64x4xf32>
    %127 = arith.addf %124, %126 : vector<64x4xf32>
    %128 = arith.negf %127 : vector<64x4xf32>
    %129 = math.exp %128 : vector<64x4xf32>
    %cst_87 = arith.constant 1.000000e+00 : f32
    %130 = vector.broadcast %cst_87 : f32 to vector<64x4xf32>
    %131 = arith.addf %130, %129 : vector<64x4xf32>
    %132 = arith.divf %130, %131 : vector<64x4xf32>
    %133 = vector.shape_cast %132 : vector<64x4xf32> to vector<2x4x8x4xf32>
    %c0_88 = arith.constant 0 : index
    %c0_89 = arith.constant 0 : index
    %c0_90 = arith.constant 0 : index
    %c0_91 = arith.constant 0 : index
    %134 = vector.load %arg10[%c0_88, %c0_89, %c0_90, %c0_91] : memref<2x4x8x4xf32, #tpu.memory_space<vmem>>, vector<2x4x8x4xf32>
    tpu.vector_store %arg10[%c0_88, %c0_89, %c0_90, %c0_91], %133 {strides = array<i32>} : memref<2x4x8x4xf32, #tpu.memory_space<vmem>>, vector<2x4x8x4xf32>,
    return
  }
  func.func @transform_0(%arg0: i32) -> (i32, i32, i32, i32) {
    %c0_i32 = arith.constant 0 : i32
    %c0_i32_0 = arith.constant 0 : i32
    %c0_i32_1 = arith.constant 0 : i32
    %c0_i32_2 = arith.constant 0 : i32
    return %arg0, %c0_i32, %c0_i32_0, %c0_i32_1 : i32, i32, i32, i32
  }
  func.func @transform_1(%arg0: i32) -> (i32, i32, i32) {
    %c0_i32 = arith.constant 0 : i32
    %c0_i32_0 = arith.constant 0 : i32
    %c0_i32_1 = arith.constant 0 : i32
    return %arg0, %c0_i32, %c0_i32_0 : i32, i32, i32
  }
  func.func @transform_2(%arg0: i32) -> (i32, i32, i32) {
    %c0_i32 = arith.constant 0 : i32
    %c0_i32_0 = arith.constant 0 : i32
    %c0_i32_1 = arith.constant 0 : i32
    return %arg0, %c0_i32, %c0_i32_0 : i32, i32, i32
  }
  func.func @transform_3(%arg0: i32) -> (i32, i32) {
    %c0_i32 = arith.constant 0 : i32
    %c0_i32_0 = arith.constant 0 : i32
    %c0_i32_1 = arith.constant 0 : i32
    return %c0_i32, %c0_i32_0 : i32, i32
  }
  func.func @transform_4(%arg0: i32) -> (i32, i32) {
    %c0_i32 = arith.constant 0 : i32
    %c0_i32_0 = arith.constant 0 : i32
    %c0_i32_1 = arith.constant 0 : i32
    return %c0_i32, %c0_i32_0 : i32, i32
  }
  func.func @transform_5(%arg0: i32) -> (i32, i32) {
    %c0_i32 = arith.constant 0 : i32
    %c0_i32_0 = arith.constant 0 : i32
    %c0_i32_1 = arith.constant 0 : i32
    return %c0_i32, %c0_i32_0 : i32, i32
  }
  func.func @transform_6(%arg0: i32) -> (i32, i32) {
    %c0_i32 = arith.constant 0 : i32
    %c0_i32_0 = arith.constant 0 : i32
    %c0_i32_1 = arith.constant 0 : i32
    return %c0_i32, %c0_i32_0 : i32, i32
  }
  func.func @transform_7(%arg0: i32) -> (i32, i32) {
    %c0_i32 = arith.constant 0 : i32
    %c0_i32_0 = arith.constant 0 : i32
    %c0_i32_1 = arith.constant 0 : i32
    return %c0_i32, %c0_i32_0 : i32, i32
  }
  func.func @transform_8(%arg0: i32) -> (i32, i32) {
    %c0_i32 = arith.constant 0 : i32
    %c0_i32_0 = arith.constant 0 : i32
    %c0_i32_1 = arith.constant 0 : i32
    return %c0_i32, %c0_i32_0 : i32, i32
  }
  func.func @transform_9(%arg0: i32) -> (i32, i32, i32, i32) {
    %c0_i32 = arith.constant 0 : i32
    %c0_i32_0 = arith.constant 0 : i32
    %c0_i32_1 = arith.constant 0 : i32
    %c0_i32_2 = arith.constant 0 : i32
    return %arg0, %c0_i32, %c0_i32_0, %c0_i32_1 : i32, i32, i32, i32
  }
  func.func @transform_10(%arg0: i32) -> (i32, i32, i32) {
    %c0_i32 = arith.constant 0 : i32
    %c0_i32_0 = arith.constant 0 : i32
    %c0_i32_1 = arith.constant 0 : i32
    return %arg0, %c0_i32, %c0_i32_0 : i32, i32, i32
  }
}

</mosaic_0001>

<llo_original>
// kernel: tpu_custom_call.1
$region0: #{tpu_custom_call.1}
  #allocation0 [shape = 'u32[]', space=smem, size = 0x4, offset = 0x4, fixed_abs, tag = 'smem constant byte address 0x4 - core index']
  #allocation1 [shape = 'u32[144,128]{1,0:T(1,128)}', space=vmem, size = 0x12000, scoped, tag = 'internal scratch']
  #allocation2 [shape = 'f32[2,32,64]{2,1,0:T(8,128)}', space=vmem, size = 0x8000, scoped, tag = 'scratch operand']
  #allocation3 [shape = 'f32[2,32,32]{2,1,0:T(8,128)}', space=vmem, size = 0x8000, scoped, tag = 'scratch operand']
  #allocation4 [shape = 'f32[2,32,32]{2,1,0:T(8,128)}', space=vmem, size = 0x8000, scoped, tag = 'scratch operand']
  %s0 = inlined_call_operand.vmem [shape: f32[4,4,8,4], index: 0, kind: input, shape index: {}]
  %s1 = inlined_call_operand.vmem [shape: f32[4,8,32], index: 1, kind: input, shape index: {}, may-alias: {1,10}]
  %s2 = inlined_call_operand.vmem [shape: f32[4,8,8], index: 2, kind: input, shape index: {}]
  %s3 = inlined_call_operand.vmem [shape: f32[32,64], index: 3, kind: input, shape index: {}]
  %s4 = inlined_call_operand.vmem [shape: f32[32,32], index: 4, kind: input, shape index: {}]
  %s5 = inlined_call_operand.vmem [shape: f32[4,96], index: 5, kind: input, shape index: {}]
  %s6 = inlined_call_operand.vmem [shape: f32[1,96], index: 6, kind: input, shape index: {}]
  %s7 = inlined_call_operand.vmem [shape: f32[32,4], index: 7, kind: input, shape index: {}]
  %s8 = inlined_call_operand.vmem [shape: f32[1,4], index: 8, kind: input, shape index: {}]
  %s9 = inlined_call_operand.vmem [shape: f32[4,4,8,4], index: 9, kind: output, shape index: {0}]
  %s10 = inlined_call_operand.vmem [shape: f32[4,8,32], index: 10, kind: output, shape index: {1}, may-alias: {1,10}]
  %11 = xla_tuple %s9, %s10
  %s12 = sld [smem:[#allocation0]]
  $region77: #{tpu_custom_call.1} parent=0
    _
  %s14 = ssub.s32 1, %s12
  %s15 = scalar_select 0, %s14, %s12
  loop: start=0, step=1, limit=4
  $region2: #{tpu_custom_call.1} parent=0 // loop_pre_header
    _
  $region3: #{tpu_custom_call.1} parent=0 // loop_header
    %s17 = sphi 0, %s21
    %p18 = scmp.ge.s32.totalorder %s17, 4
    %s27 = sphi 0, %s29
    %s30 = sphi 0, %s27
    %s31 = sphi 0, %s30
    %s47 = sphi 0, %s31
    %s53 = sphi 0, %s55
    %s56 = sphi 0, %s53
    %s57 = sphi 0, %s56
    %s73 = sphi 0, %s57
    %s79 = sphi 0, %s81
    %s82 = sphi 0, %s79
    %s83 = sphi 0, %s82
    %s99 = sphi 0, %s83
    %s103 = sphi 0, %s103
    %s105 = sphi 0, %s103
    %s106 = sphi 0, %s105
    %s120 = sphi 0, %s106
    %s124 = sphi 0, %s124
    %s126 = sphi 0, %s124
    %s127 = sphi 0, %s126
    %s141 = sphi 0, %s127
    %s145 = sphi 0, %s145
    %s147 = sphi 0, %s145
    %s148 = sphi 0, %s147
    %s162 = sphi 0, %s148
    %s166 = sphi 0, %s166
    %s168 = sphi 0, %s166
    %s169 = sphi 0, %s168
    %s183 = sphi 0, %s169
    %s187 = sphi 0, %s187
    %s189 = sphi 0, %s187
    %s190 = sphi 0, %s189
    %s204 = sphi 0, %s190
    %s208 = sphi 0, %s208
    %s210 = sphi 0, %s208
    %s211 = sphi 0, %s210
    %s225 = sphi 0, %s211
    %s231 = sphi 0, %s233
    %s234 = sphi 0, %s231
    %s235 = sphi 0, %s234
    %s251 = sphi 0, %s235
    %s257 = sphi 0, %s259
    %s260 = sphi 0, %s257
    %s261 = sphi 0, %s260
    %s277 = sphi 0, %s261
  $region4: #{tpu_custom_call.1} parent=0 // loop_header_branch
    %20 = sbr.rel (%p18) target = $region8
  $region5: #{tpu_custom_call.1} parent=0 // loop_body
    %s22 = ssub.s32 %s17, 1
    %s23 = ssub.s32 %s17, 2
    %s24 = sadd.s32 %s17, 1
    %s25 = ssub.s32 %s17, %s24
    %p26 = scmp.eq.s32.totalorder %s25, 0
    %s28 = sadd.s32 %s27, 1
    %s29 = scalar_select %p26, %s27, %s28
    %p32 = pneg %p26
    %p33 = scmp.eq.s32.totalorder %s17, 1
    %p34 = por %p32, %p33
    %p35 = scmp.ne.s32.totalorder %s27, %s30
    %p36 = scmp.eq.s32.totalorder %s17, 0
    %p37 = por %p35, %p36
    %p38 = scmp.ne.s32.totalorder %s27, %s30
    %p39 = scmp.eq.s32.totalorder %s22, 1
    %p40 = por %p38, %p39
    %p41 = scmp.ne.s32.totalorder %s30, %s31
    %p42 = scmp.eq.s32.totalorder %s22, 0
    %p43 = por %p41, %p42
    %p44 = scmp.ne.s32.totalorder %s30, %s31
    %p45 = scmp.eq.s32.totalorder %s23, 1
    %p46 = por %p44, %p45
    %p48 = scmp.ne.s32.totalorder %s31, %s47
    %p49 = scmp.eq.s32.totalorder %s23, 0
    %p50 = por %p48, %p49
    %s51 = ssub.s32 %s17, %s24
    %p52 = scmp.eq.s32.totalorder %s51, 0
    %s54 = sadd.s32 %s53, 1
    %s55 = scalar_select %p52, %s53, %s54
    %p58 = pneg %p52
    %p59 = scmp.eq.s32.totalorder %s17, 1
    %p60 = por %p58, %p59
    %p61 = scmp.ne.s32.totalorder %s53, %s56
    %p62 = scmp.eq.s32.totalorder %s17, 0
    %p63 = por %p61, %p62
    %p64 = scmp.ne.s32.totalorder %s53, %s56
    %p65 = scmp.eq.s32.totalorder %s22, 1
    %p66 = por %p64, %p65
    %p67 = scmp.ne.s32.totalorder %s56, %s57
    %p68 = scmp.eq.s32.totalorder %s22, 0
    %p69 = por %p67, %p68
    %p70 = scmp.ne.s32.totalorder %s56, %s57
    %p71 = scmp.eq.s32.totalorder %s23, 1
    %p72 = por %p70, %p71
    %p74 = scmp.ne.s32.totalorder %s57, %s73
    %p75 = scmp.eq.s32.totalorder %s23, 0
    %p76 = por %p74, %p75
    %s77 = ssub.s32 %s17, %s24
    %p78 = scmp.eq.s32.totalorder %s77, 0
    %s80 = sadd.s32 %s79, 1
    %s81 = scalar_select %p78, %s79, %s80
    %p84 = pneg %p78
    %p85 = scmp.eq.s32.totalorder %s17, 1
    %p86 = por %p84, %p85
    %p87 = scmp.ne.s32.totalorder %s79, %s82
    %p88 = scmp.eq.s32.totalorder %s17, 0
    %p89 = por %p87, %p88
    %p90 = scmp.ne.s32.totalorder %s79, %s82
    %p91 = scmp.eq.s32.totalorder %s22, 1
    %p92 = por %p90, %p91
    %p93 = scmp.ne.s32.totalorder %s82, %s83
    %p94 = scmp.eq.s32.totalorder %s22, 0
    %p95 = por %p93, %p94
    %p96 = scmp.ne.s32.totalorder %s82, %s83
    %p97 = scmp.eq.s32.totalorder %s23, 1
    %p98 = por %p96, %p97
    %p100 = scmp.ne.s32.totalorder %s83, %s99
    %p101 = scmp.eq.s32.totalorder %s23, 0
    %p102 = por %p100, %p101
    %s104 = sadd.s32 %s103, 1
    %p107 = scmp.eq.s32.totalorder %s17, 1
    %p108 = scmp.ne.s32.totalorder %s103, %s105
    %p109 = scmp.eq.s32.totalorder %s17, 0
    %p110 = por %p108, %p109
    %p111 = scmp.ne.s32.totalorder %s103, %s105
    %p112 = scmp.eq.s32.totalorder %s22, 1
    %p113 = por %p111, %p112
    %p114 = scmp.ne.s32.totalorder %s105, %s106
    %p115 = scmp.eq.s32.totalorder %s22, 0
    %p116 = por %p114, %p115
    %p117 = scmp.ne.s32.totalorder %s105, %s106
    %p118 = scmp.eq.s32.totalorder %s23, 1
    %p119 = por %p117, %p118
    %p121 = scmp.ne.s32.totalorder %s106, %s120
    %p122 = scmp.eq.s32.totalorder %s23, 0
    %p123 = por %p121, %p122
    %s125 = sadd.s32 %s124, 1
    %p128 = scmp.eq.s32.totalorder %s17, 1
    %p129 = scmp.ne.s32.totalorder %s124, %s126
    %p130 = scmp.eq.s32.totalorder %s17, 0
    %p131 = por %p129, %p130
    %p132 = scmp.ne.s32.totalorder %s124, %s126
    %p133 = scmp.eq.s32.totalorder %s22, 1
    %p134 = por %p132, %p133
    %p135 = scmp.ne.s32.totalorder %s126, %s127
    %p136 = scmp.eq.s32.totalorder %s22, 0
    %p137 = por %p135, %p136
    %p138 = scmp.ne.s32.totalorder %s126, %s127
    %p139 = scmp.eq.s32.totalorder %s23, 1
    %p140 = por %p138, %p139
    %p142 = scmp.ne.s32.totalorder %s127, %s141
    %p143 = scmp.eq.s32.totalorder %s23, 0
    %p144 = por %p142, %p143
    %s146 = sadd.s32 %s145, 1
    %p149 = scmp.eq.s32.totalorder %s17, 1
    %p150 = scmp.ne.s32.totalorder %s145, %s147
    %p151 = scmp.eq.s32.totalorder %s17, 0
    %p152 = por %p150, %p151
    %p153 = scmp.ne.s32.totalorder %s145, %s147
    %p154 = scmp.eq.s32.totalorder %s22, 1
    %p155 = por %p153, %p154
    %p156 = scmp.ne.s32.totalorder %s147, %s148
    %p157 = scmp.eq.s32.totalorder %s22, 0
    %p158 = por %p156, %p157
    %p159 = scmp.ne.s32.totalorder %s147, %s148
    %p160 = scmp.eq.s32.totalorder %s23, 1
    %p161 = por %p159, %p160
    %p163 = scmp.ne.s32.totalorder %s148, %s162
    %p164 = scmp.eq.s32.totalorder %s23, 0
    %p165 = por %p163, %p164
    %s167 = sadd.s32 %s166, 1
    %p170 = scmp.eq.s32.totalorder %s17, 1
    %p171 = scmp.ne.s32.totalorder %s166, %s168
    %p172 = scmp.eq.s32.totalorder %s17, 0
    %p173 = por %p171, %p172
    %p174 = scmp.ne.s32.totalorder %s166, %s168
    %p175 = scmp.eq.s32.totalorder %s22, 1
    %p176 = por %p174, %p175
    %p177 = scmp.ne.s32.totalorder %s168, %s169
    %p178 = scmp.eq.s32.totalorder %s22, 0
    %p179 = por %p177, %p178
    %p180 = scmp.ne.s32.totalorder %s168, %s169
    %p181 = scmp.eq.s32.totalorder %s23, 1
    %p182 = por %p180, %p181
    %p184 = scmp.ne.s32.totalorder %s169, %s183
    %p185 = scmp.eq.s32.totalorder %s23, 0
    %p186 = por %p184, %p185
    %s188 = sadd.s32 %s187, 1
    %p191 = scmp.eq.s32.totalorder %s17, 1
    %p192 = scmp.ne.s32.totalorder %s187, %s189
    %p193 = scmp.eq.s32.totalorder %s17, 0
    %p194 = por %p192, %p193
    %p195 = scmp.ne.s32.totalorder %s187, %s189
    %p196 = scmp.eq.s32.totalorder %s22, 1
    %p197 = por %p195, %p196
    %p198 = scmp.ne.s32.totalorder %s189, %s190
    %p199 = scmp.eq.s32.totalorder %s22, 0
    %p200 = por %p198, %p199
    %p201 = scmp.ne.s32.totalorder %s189, %s190
    %p202 = scmp.eq.s32.totalorder %s23, 1
    %p203 = por %p201, %p202
    %p205 = scmp.ne.s32.totalorder %s190, %s204
    %p206 = scmp.eq.s32.totalorder %s23, 0
    %p207 = por %p205, %p206
    %s209 = sadd.s32 %s208, 1
    %p212 = scmp.eq.s32.totalorder %s17, 1
    %p213 = scmp.ne.s32.totalorder %s208, %s210
    %p214 = scmp.eq.s32.totalorder %s17, 0
    %p215 = por %p213, %p214
    %p216 = scmp.ne.s32.totalorder %s208, %s210
    %p217 = scmp.eq.s32.totalorder %s22, 1
    %p218 = por %p216, %p217
    %p219 = scmp.ne.s32.totalorder %s210, %s211
    %p220 = scmp.eq.s32.totalorder %s22, 0
    %p221 = por %p219, %p220
    %p222 = scmp.ne.s32.totalorder %s210, %s211
    %p223 = scmp.eq.s32.totalorder %s23, 1
    %p224 = por %p222, %p223
    %p226 = scmp.ne.s32.totalorder %s211, %s225
    %p227 = scmp.eq.s32.totalorder %s23, 0
    %p228 = por %p226, %p227
    %s229 = ssub.s32 %s17, %s24
    %p230 = scmp.eq.s32.totalorder %s229, 0
    %s232 = sadd.s32 %s231, 1
    %s233 = scalar_select %p230, %s231, %s232
    %p236 = pneg %p230
    %p237 = scmp.eq.s32.totalorder %s17, 1
    %p238 = por %p236, %p237
    %p239 = scmp.ne.s32.totalorder %s231, %s234
    %p240 = scmp.eq.s32.totalorder %s17, 0
    %p241 = por %p239, %p240
    %p242 = scmp.ne.s32.totalorder %s231, %s234
    %p243 = scmp.eq.s32.totalorder %s22, 1
    %p244 = por %p242, %p243
    %p245 = scmp.ne.s32.totalorder %s234, %s235
    %p246 = scmp.eq.s32.totalorder %s22, 0
    %p247 = por %p245, %p246
    %p248 = scmp.ne.s32.totalorder %s234, %s235
    %p249 = scmp.eq.s32.totalorder %s23, 1
    %p250 = por %p248, %p249
    %p252 = scmp.ne.s32.totalorder %s235, %s251
    %p253 = scmp.eq.s32.totalorder %s23, 0
    %p254 = por %p252, %p253
    %s255 = ssub.s32 %s17, %s24
    %p256 = scmp.eq.s32.totalorder %s255, 0
    %s258 = sadd.s32 %s257, 1
    %s259 = scalar_select %p256, %s257, %s258
    %p262 = pneg %p256
    %p263 = scmp.eq.s32.totalorder %s17, 1
    %p264 = por %p262, %p263
    %p265 = scmp.ne.s32.totalorder %s257, %s260
    %p266 = scmp.eq.s32.totalorder %s17, 0
    %p267 = por %p265, %p266
    %p268 = scmp.ne.s32.totalorder %s257, %s260
    %p269 = scmp.eq.s32.totalorder %s22, 1
    %p270 = por %p268, %p269
    %p271 = scmp.ne.s32.totalorder %s260, %s261
    %p272 = scmp.eq.s32.totalorder %s22, 0
    %p273 = por %p271, %p272
    %p274 = scmp.ne.s32.totalorder %s260, %s261
    %p275 = scmp.eq.s32.totalorder %s23, 1
    %p276 = por %p274, %p275
    %p278 = scmp.ne.s32.totalorder %s261, %s277
    %p279 = scmp.eq.s32.totalorder %s23, 0
    %p280 = por %p278, %p279
    %p281 = scmp.le.s32.totalorder 1, %s17
    %p282 = scmp.lt.s32.totalorder %s17, 3
    %p283 = pnand %p281, %p282
    %p284 = pneg %p283
    // Predicated region
    $region9: #{tpu_custom_call.1} parent=5 // pred_check
      _
    $region10: #{tpu_custom_call.1} parent=5 // pred_check_branch
      %286 = sbr.rel (%p283) target = $region12
    $region11: #{tpu_custom_call.1} parent=5 // pred_region
      %s287 = ssub.s32 %s17, 1
      // Predicated region
      $region13: #{tpu_custom_call.1} parent=11 // pred_check
        %p288 = pneg %p116
      $region14: #{tpu_custom_call.1} parent=11 // pred_check_branch
        %290 = sbr.rel (%p288) target = $region16
      $region15: #{tpu_custom_call.1} parent=11 // pred_region
        _
      $region16: #{tpu_custom_call.1} parent=11 // pred_fallthru
        _
      // Predicated region
      $region17: #{tpu_custom_call.1} parent=11 // pred_check
        %p291 = pneg %p137
      $region18: #{tpu_custom_call.1} parent=11 // pred_check_branch
        %293 = sbr.rel (%p291) target = $region20
      $region19: #{tpu_custom_call.1} parent=11 // pred_region
        _
      $region20: #{tpu_custom_call.1} parent=11 // pred_fallthru
        _
      // Predicated region
      $region21: #{tpu_custom_call.1} parent=11 // pred_check
        %p294 = pneg %p158
      $region22: #{tpu_custom_call.1} parent=11 // pred_check_branch
        %296 = sbr.rel (%p294) target = $region24
      $region23: #{tpu_custom_call.1} parent=11 // pred_region
        _
      $region24: #{tpu_custom_call.1} parent=11 // pred_fallthru
        _
      // Predicated region
      $region25: #{tpu_custom_call.1} parent=11 // pred_check
        %p297 = pneg %p179
      $region26: #{tpu_custom_call.1} parent=11 // pred_check_branch
        %299 = sbr.rel (%p297) target = $region28
      $region27: #{tpu_custom_call.1} parent=11 // pred_region
        _
      $region28: #{tpu_custom_call.1} parent=11 // pred_fallthru
        _
      // Predicated region
      $region29: #{tpu_custom_call.1} parent=11 // pred_check
        %p300 = pneg %p200
      $region30: #{tpu_custom_call.1} parent=11 // pred_check_branch
        %302 = sbr.rel (%p300) target = $region32
      $region31: #{tpu_custom_call.1} parent=11 // pred_region
        _
      $region32: #{tpu_custom_call.1} parent=11 // pred_fallthru
        _
      // Predicated region
      $region33: #{tpu_custom_call.1} parent=11 // pred_check
        %p303 = pneg %p221
      $region34: #{tpu_custom_call.1} parent=11 // pred_check_branch
        %305 = sbr.rel (%p303) target = $region36
      $region35: #{tpu_custom_call.1} parent=11 // pred_region
        _
      $region36: #{tpu_custom_call.1} parent=11 // pred_fallthru
        _
    $region12: #{tpu_custom_call.1} parent=5 // pred_fallthru
      _
    %p306 = scmp.lt.s32.totalorder %s17, 2
    // Predicated region
    $region37: #{tpu_custom_call.1} parent=5 // pred_check
      %p307 = pneg %p306
    $region38: #{tpu_custom_call.1} parent=5 // pred_check_branch
      %309 = sbr.rel (%p307) target = $region40
    $region39: #{tpu_custom_call.1} parent=5 // pred_region
      // Predicated region
      $region41: #{tpu_custom_call.1} parent=39 // pred_check
        %p310 = pneg %p37
      $region42: #{tpu_custom_call.1} parent=39 // pred_check_branch
        %312 = sbr.rel (%p310) target = $region44
      $region43: #{tpu_custom_call.1} parent=39 // pred_region
        %s313 = smul.u32 2, %s17
        %p314 = scmp.lt.s32.totalorder %s313, 3
        %s315 = scalar_select %p314, %s313, 3
        %s316 = smul.addr %s315, 4
        %s317 = smul.addr %s316, 8
        %s318 = scalar_lea.vmem %s0, %s317
        %s319 = smul.u32 2, %s17
      $region44: #{tpu_custom_call.1} parent=39 // pred_fallthru
        _
      // Predicated region
      $region45: #{tpu_custom_call.1} parent=39 // pred_check
        %p320 = pneg %p63
      $region46: #{tpu_custom_call.1} parent=39 // pred_check_branch
        %322 = sbr.rel (%p320) target = $region48
      $region47: #{tpu_custom_call.1} parent=39 // pred_region
        %s323 = smul.u32 2, %s17
        %p324 = scmp.lt.s32.totalorder %s323, 3
        %s325 = scalar_select %p324, %s323, 3
        %s326 = smul.addr %s325, 8
        %s327 = scalar_lea.vmem %s1, %s326
        %s328 = smul.u32 2, %s17
      $region48: #{tpu_custom_call.1} parent=39 // pred_fallthru
        _
      // Predicated region
      $region49: #{tpu_custom_call.1} parent=39 // pred_check
        %p329 = pneg %p89
      $region50: #{tpu_custom_call.1} parent=39 // pred_check_branch
        %331 = sbr.rel (%p329) target = $region52
      $region51: #{tpu_custom_call.1} parent=39 // pred_region
        %s332 = smul.u32 2, %s17
        %p333 = scmp.lt.s32.totalorder %s332, 3
        %s334 = scalar_select %p333, %s332, 3
        %s335 = smul.addr %s334, 8
        %s336 = scalar_lea.vmem %s2, %s335
        %s337 = smul.u32 2, %s17
      $region52: #{tpu_custom_call.1} parent=39 // pred_fallthru
        _
    $region40: #{tpu_custom_call.1} parent=5 // pred_fallthru
      _
    %p338 = scmp.le.s32.totalorder 1, %s17
    %p339 = scmp.lt.s32.totalorder %s17, 3
    %p340 = pnand %p338, %p339
    %p341 = pneg %p340
    // Predicated region
    $region53: #{tpu_custom_call.1} parent=5 // pred_check
      _
    $region54: #{tpu_custom_call.1} parent=5 // pred_check_branch
      %343 = sbr.rel (%p340) target = $region56
    $region55: #{tpu_custom_call.1} parent=5 // pred_region
      %s344 = ssub.s32 %s17, 1
      %s345 = smul.u32 2, %s22
      %p346 = scmp.lt.s32.totalorder %s345, 3
      %s347 = scalar_select %p346, %s345, 3
      %s348 = smul.addr %s347, 4
      %s349 = smul.addr %s348, 8
      %s350 = scalar_lea.vmem %s0, %s349
      %p351 = pneg %p43
      %p352 = pneg %p40
      %s353 = smul.u32 2, %s22
      %p354 = scmp.lt.s32.totalorder %s353, 3
      %s355 = scalar_select %p354, %s353, 3
      %s356 = smul.addr %s355, 8
      %s357 = scalar_lea.vmem %s1, %s356
      %p358 = pneg %p69
      %p359 = pneg %p66
      %s360 = smul.u32 2, %s22
      %p361 = scmp.lt.s32.totalorder %s360, 3
      %s362 = scalar_select %p361, %s360, 3
      %s363 = smul.addr %s362, 8
      %s364 = scalar_lea.vmem %s2, %s363
      %p365 = pneg %p95
      %p366 = pneg %p92
      %p367 = pneg %p116
      %p368 = pneg %p113
      %p369 = pneg %p137
      %p370 = pneg %p134
      %p371 = pneg %p158
      %p372 = pneg %p155
      %p373 = pneg %p179
      %p374 = pneg %p176
      %p375 = pneg %p200
      %p376 = pneg %p197
      %p377 = pneg %p221
      %p378 = pneg %p218
      %p379 = pneg %p247
      %p380 = pneg %p244
      %s381 = smul.u32 2, %s22
      %p382 = scmp.lt.s32.totalorder %s381, 3
      %s383 = scalar_select %p382, %s381, 3
      %s384 = smul.addr %s383, 4
      %s385 = smul.addr %s384, 8
      %s386 = scalar_lea.vmem %s9, %s385
      %p387 = pneg %p273
      %p388 = pneg %p270
      %s389 = smul.u32 2, %s22
      %p390 = scmp.lt.s32.totalorder %s389, 3
      %s391 = scalar_select %p390, %s389, 3
      %s392 = smul.addr %s391, 8
      %s393 = scalar_lea.vmem %s10, %s392
      %s394 = smul.u32 2, %s22
      %p395 = scmp.lt.s32.totalorder %s394, 3
      %s396 = scalar_select %p395, %s394, 3
      %s397 = smul.addr %s396, 4
      %s398 = smul.addr %s397, 8
      %s399 = scalar_lea.vmem %s0, %s398
      %s400 = smul.u32 2, %s22
      %s401 = smul.u32 2, %s22
      %p402 = scmp.lt.s32.totalorder %s401, 3
      %s403 = scalar_select %p402, %s401, 3
      %s404 = smul.addr %s403, 8
      %s405 = scalar_lea.vmem %s1, %s404
      %s406 = smul.u32 2, %s22
      %s407 = smul.u32 2, %s22
      %p408 = scmp.lt.s32.totalorder %s407, 3
      %s409 = scalar_select %p408, %s407, 3
      %s410 = smul.addr %s409, 8
      %s411 = scalar_lea.vmem %s2, %s410
      %s412 = smul.u32 2, %s22
      %s413 = smul.u32 2, %s22
      %p414 = scmp.lt.s32.totalorder %s413, 3
      %s415 = scalar_select %p414, %s413, 3
      %s416 = smul.addr %s415, 4
      %s417 = smul.addr %s416, 8
      %s418 = scalar_lea.vmem %s9, %s417
      %s419 = smul.u32 2, %s22
      %s420 = smul.u32 2, %s22
      %p421 = scmp.lt.s32.totalorder %s420, 3
      %s422 = scalar_select %p421, %s420, 3
      %s423 = smul.addr %s422, 8
      %s424 = scalar_lea.vmem %s10, %s423
      %s425 = smul.u32 2, %s22
      %v426 = vld [vmem:[%s411] sm:$0xff]
      %v427 = vld [vmem:[%s411 + $0x8] sm:$0xff]
      %v428 = vld [vmem:[%s405] sm:$0xff]
      %v429 = vld [vmem:[%s405 + $0x8] sm:$0xff]
      %v430 = vld [vmem:[%s3] sm:$0xff]
      %v431 = vld [vmem:[%s3 + $0x8] sm:$0xff]
      %v432 = vld [vmem:[%s3 + $0x10] sm:$0xff]
      %v433 = vld [vmem:[%s3 + $0x18] sm:$0xff]
      %v434 = vld [vmem:[%s4] sm:$0xff]
      %v435 = vld [vmem:[%s4 + $0x8] sm:$0xff]
      %v436 = vld [vmem:[%s4 + $0x10] sm:$0xff]
      %v437 = vld [vmem:[%s4 + $0x18] sm:$0xff]
      %v438 = vld [vmem:[%s399] sm:$0xff]
      %v439 = vld [vmem:[%s399 + $0x8] sm:$0xff]
      %v440 = vld [vmem:[%s399 + $0x10] sm:$0xff]
      %v441 = vld [vmem:[%s399 + $0x18] sm:$0xff]
      %v442 = vld [vmem:[%s399 + $0x20] sm:$0xff]
      %v443 = vld [vmem:[%s399 + $0x28] sm:$0xff]
      %v444 = vld [vmem:[%s399 + $0x30] sm:$0xff]
      %v445 = vld [vmem:[%s399 + $0x38] sm:$0xff]
      %v446 = vld [vmem:[%s5] sm:$0xf]
      %v447 = vld [vmem:[%s6] sm:$0x1]
      %v449 = vlaneseq
      %v450 = vshrl.u32 %v449, 7
      %v451 = vsub.s32 0, %v450
      %v452 = vrot.slane %v447, %v451
      %vm454 = vcmask 31744
      %v456 = vsel %vm454, %v438, 0
      %v459 = vsel %vm454, %v439, 0
      %v462 = vsel %vm454, %v440, 0
      %v465 = vsel %vm454, %v441, 0
      %v468 = vsel %vm454, %v442, 0
      %v471 = vsel %vm454, %v443, 0
      %v474 = vsel %vm454, %v444, 0
      %v477 = vsel %vm454, %v445, 0
      %vm479 = vcmask 1043456
      %v481 = vsel %vm479, %v446, 0
      %483 = vmatprep.subr.mxu0 0.0
      %484 = vmatpush1.msra.mxu0 0.0
      %485 = vmatprep.subr.mxu0 0.0
      %486 = vmatpush1.msra.mxu0 0.0
      %487 = vmatprep.subr.mxu0 0.0
      %488 = vmatpush1.msra.mxu0 0.0
      %489 = vmatprep.subr.mxu0 0.0
      %490 = vmatpush1.msra.mxu0 0.0
      %491 = vmatprep.subr.mxu0 0.0
      %492 = vmatpush1.msra.mxu0 0.0
      %493 = vmatprep.subr.mxu0 0.0
      %494 = vmatpush1.msra.mxu0 0.0
      %495 = vmatprep.subr.mxu0 0.0
      %496 = vmatpush1.msra.mxu0 0.0
      %497 = vmatprep.subr.mxu0 0.0
      %498 = vmatpush1.msra.mxu0 0.0
      %499 = vmatprep.subr.mxu0 0.0
      %500 = vmatpush1.msra.mxu0 0.0
      %501 = vmatprep.subr.mxu0 0.0
      %502 = vmatpush1.msra.mxu0 0.0
      %503 = vmatprep.subr.mxu0 0.0
      %504 = vmatpush1.msra.mxu0 0.0
      %505 = vmatprep.subr.mxu0 0.0
      %506 = vmatpush1.msra.mxu0 0.0
      %507 = vmatprep.subr.mxu0 0.0
      %508 = vmatpush1.msra.mxu0 0.0
      %509 = vmatprep.subr.mxu0 0.0
      %510 = vmatpush1.msra.mxu0 0.0
      %511 = vmatprep.subr.mxu0 0.0
      %512 = vmatpush1.msra.mxu0 0.0
      %513 = vmatprep.subr.mxu0 0.0
      %514 = vmatpush1.msra.mxu0 %v481
      %515 = vmatprep.subr.mxu0 0.0
      %516 = vmatpush2.msra.mxu0 0.0
      %517 = vmatprep.subr.mxu0 0.0
      %518 = vmatpush2.msra.mxu0 0.0
      %519 = vmatprep.subr.mxu0 0.0
      %520 = vmatpush2.msra.mxu0 0.0
      %521 = vmatprep.subr.mxu0 0.0
      %522 = vmatpush2.msra.mxu0 0.0
      %523 = vmatprep.subr.mxu0 0.0
      %524 = vmatpush2.msra.mxu0 0.0
      %525 = vmatprep.subr.mxu0 0.0
      %526 = vmatpush2.msra.mxu0 0.0
      %527 = vmatprep.subr.mxu0 0.0
      %528 = vmatpush2.msra.mxu0 0.0
      %529 = vmatprep.subr.mxu0 0.0
      %530 = vmatpush2.msra.mxu0 0.0
      %531 = vmatprep.subr.mxu0 0.0
      %532 = vmatpush2.msra.mxu0 0.0
      %533 = vmatprep.subr.mxu0 0.0
      %534 = vmatpush2.msra.mxu0 0.0
      %535 = vmatprep.subr.mxu0 0.0
      %536 = vmatpush2.msra.mxu0 0.0
      %537 = vmatprep.subr.mxu0 0.0
      %538 = vmatpush2.msra.mxu0 0.0
      %539 = vmatprep.subr.mxu0 0.0
      %540 = vmatpush2.msra.mxu0 0.0
      %541 = vmatprep.subr.mxu0 0.0
      %542 = vmatpush2.msra.mxu0 0.0
      %543 = vmatprep.subr.mxu0 0.0
      %544 = vmatpush2.msra.mxu0 0.0
      %545 = vmatprep.subr.mxu0 0.0
      %546 = vmatpush2.msra.mxu0 0.0
      %547 = vmatprep.mubr.f32.mxu0 0.0
      %548 = vmatmul.mubr.f32.gmra.mxu0 %v456
      %v549 = vpop.f32.mrf.mxu0
      %v550 = vadd.f32 %v452, %v549
      %v551 = vpop.f32.mrf.mxu0
      %552 = vmatprep.mubr.f32.mxu0 0.0
      %553 = vmatmul.mubr.f32.gmra.mxu0 %v459
      %v554 = vpop.f32.mrf.mxu0
      %v555 = vadd.f32 %v452, %v554
      %v556 = vpop.f32.mrf.mxu0
      %557 = vmatprep.mubr.f32.mxu0 0.0
      %558 = vmatmul.mubr.f32.gmra.mxu0 %v462
      %v559 = vpop.f32.mrf.mxu0
      %v560 = vadd.f32 %v452, %v559
      %v561 = vpop.f32.mrf.mxu0
      %562 = vmatprep.mubr.f32.mxu0 0.0
      %563 = vmatmul.mubr.f32.gmra.mxu0 %v465
      %v564 = vpop.f32.mrf.mxu0
      %v565 = vadd.f32 %v452, %v564
      %v566 = vpop.f32.mrf.mxu0
      %567 = vmatprep.mubr.f32.mxu0 0.0
      %568 = vmatmul.mubr.f32.gmra.mxu0 %v468
      %v569 = vpop.f32.mrf.mxu0
      %v570 = vadd.f32 %v452, %v569
      %v571 = vpop.f32.mrf.mxu0
      %572 = vmatprep.mubr.f32.mxu0 0.0
      %573 = vmatmul.mubr.f32.gmra.mxu0 %v471
      %v574 = vpop.f32.mrf.mxu0
      %v575 = vadd.f32 %v452, %v574
      %v576 = vpop.f32.mrf.mxu0
      %577 = vmatprep.mubr.f32.mxu0 0.0
      %578 = vmatmul.mubr.f32.gmra.mxu0 %v474
      %v579 = vpop.f32.mrf.mxu0
      %v580 = vadd.f32 %v452, %v579
      %v581 = vpop.f32.mrf.mxu0
      %582 = vmatprep.mubr.f32.mxu0 0.0
      %583 = vmatmul.mubr.f32.gmra.mxu0 %v477
      %v584 = vpop.f32.mrf.mxu0
      %v585 = vadd.f32 %v452, %v584
      %v586 = vpop.f32.mrf.mxu0
      %587 = vdwg.mxu0
      %vm588 = vcmask 523264
      %589 = vst.msk [vmem:[#allocation2] sm:$0xff] %vm588, %v550
      %590 = vst.msk [vmem:[#allocation2 + $0x8] sm:$0xff] %vm588, %v555
      %591 = vst.msk [vmem:[#allocation2 + $0x10] sm:$0xff] %vm588, %v560
      %592 = vst.msk [vmem:[#allocation2 + $0x18] sm:$0xff] %vm588, %v565
      %593 = vst.msk [vmem:[#allocation2 + $0x20] sm:$0xff] %vm588, %v570
      %594 = vst.msk [vmem:[#allocation2 + $0x28] sm:$0xff] %vm588, %v575
      %595 = vst.msk [vmem:[#allocation2 + $0x30] sm:$0xff] %vm588, %v580
      %596 = vst.msk [vmem:[#allocation2 + $0x38] sm:$0xff] %vm588, %v585
      %605 = vrot.lane.b32.xlu0 %v550, 64
      %v606 = vpop.permute.xlu0 %605
      %607 = vrot.lane.b32.xlu0 %v555, 64
      %v608 = vpop.permute.xlu0 %607
      %609 = vrot.lane.b32.xlu0 %v560, 64
      %v610 = vpop.permute.xlu0 %609
      %611 = vrot.lane.b32.xlu0 %v565, 64
      %v612 = vpop.permute.xlu0 %611
      %613 = vrot.lane.b32.xlu0 %v570, 64
      %v614 = vpop.permute.xlu0 %613
      %615 = vrot.lane.b32.xlu0 %v575, 64
      %v616 = vpop.permute.xlu0 %615
      %617 = vrot.lane.b32.xlu0 %v580, 64
      %v618 = vpop.permute.xlu0 %617
      %619 = vrot.lane.b32.xlu0 %v585, 64
      %v620 = vpop.permute.xlu0 %619
      %vm629 = vcmask 261120
      %630 = vst.msk [vmem:[#allocation3] sm:$0xff] %vm629, %v606
      %631 = vst.msk [vmem:[#allocation3 + $0x8] sm:$0xff] %vm629, %v608
      %632 = vst.msk [vmem:[#allocation3 + $0x10] sm:$0xff] %vm629, %v610
      %633 = vst.msk [vmem:[#allocation3 + $0x18] sm:$0xff] %vm629, %v612
      %634 = vst.msk [vmem:[#allocation3 + $0x20] sm:$0xff] %vm629, %v614
      %635 = vst.msk [vmem:[#allocation3 + $0x28] sm:$0xff] %vm629, %v616
      %636 = vst.msk [vmem:[#allocation3 + $0x30] sm:$0xff] %vm629, %v618
      %637 = vst.msk [vmem:[#allocation3 + $0x38] sm:$0xff] %vm629, %v620
      %vm638 = vcmask 64512
      %v640 = vsel %vm638, %v426, 0
      %642 = vmatprep.subr.mxu0 0.0
      %643 = vmatpush1.msra.mxu0 0.0
      %644 = vmatprep.subr.mxu0 0.0
      %645 = vmatpush1.msra.mxu0 0.0
      %646 = vmatprep.subr.mxu0 0.0
      %647 = vmatpush1.msra.mxu0 0.0
      %648 = vmatprep.subr.mxu0 0.0
      %649 = vmatpush1.msra.mxu0 0.0
      %650 = vmatprep.subr.mxu0 0.0
      %651 = vmatpush1.msra.mxu0 0.0
      %652 = vmatprep.subr.mxu0 0.0
      %653 = vmatpush1.msra.mxu0 0.0
      %654 = vmatprep.subr.mxu0 0.0
      %655 = vmatpush1.msra.mxu0 0.0
      %656 = vmatprep.subr.mxu0 0.0
      %657 = vmatpush1.msra.mxu0 0.0
      %658 = vmatprep.subr.mxu0 0.0
      %659 = vmatpush1.msra.mxu0 0.0
      %660 = vmatprep.subr.mxu0 0.0
      %661 = vmatpush1.msra.mxu0 0.0
      %662 = vmatprep.subr.mxu0 0.0
      %663 = vmatpush1.msra.mxu0 0.0
      %664 = vmatprep.subr.mxu0 0.0
      %665 = vmatpush1.msra.mxu0 0.0
      %666 = vmatprep.subr.mxu0 0.0
      %667 = vmatpush1.msra.mxu0 0.0
      %668 = vmatprep.subr.mxu0 0.0
      %669 = vmatpush1.msra.mxu0 0.0
      %670 = vmatprep.subr.mxu0 0.0
      %671 = vmatpush1.msra.mxu0 0.0
      %672 = vmatprep.subr.mxu0 0.0
      %673 = vmatpush1.msra.mxu0 %v428
      %674 = vmatprep.subr.mxu0 0.0
      %675 = vmatpush2.msra.mxu0 0.0
      %676 = vmatprep.subr.mxu0 0.0
      %677 = vmatpush2.msra.mxu0 0.0
      %678 = vmatprep.subr.mxu0 0.0
      %679 = vmatpush2.msra.mxu0 0.0
      %680 = vmatprep.subr.mxu0 0.0
      %681 = vmatpush2.msra.mxu0 0.0
      %682 = vmatprep.subr.mxu0 0.0
      %683 = vmatpush2.msra.mxu0 0.0
      %684 = vmatprep.subr.mxu0 0.0
      %685 = vmatpush2.msra.mxu0 0.0
      %686 = vmatprep.subr.mxu0 0.0
      %687 = vmatpush2.msra.mxu0 0.0
      %688 = vmatprep.subr.mxu0 0.0
      %689 = vmatpush2.msra.mxu0 0.0
      %690 = vmatprep.subr.mxu0 0.0
      %691 = vmatpush2.msra.mxu0 0.0
      %692 = vmatprep.subr.mxu0 0.0
      %693 = vmatpush2.msra.mxu0 0.0
      %694 = vmatprep.subr.mxu0 0.0
      %695 = vmatpush2.msra.mxu0 0.0
      %696 = vmatprep.subr.mxu0 0.0
      %697 = vmatpush2.msra.mxu0 0.0
      %698 = vmatprep.subr.mxu0 0.0
      %699 = vmatpush2.msra.mxu0 0.0
      %700 = vmatprep.subr.mxu0 0.0
      %701 = vmatpush2.msra.mxu0 0.0
      %702 = vmatprep.subr.mxu0 0.0
      %703 = vmatpush2.msra.mxu0 0.0
      %704 = vmatprep.subr.mxu0 0.0
      %705 = vmatpush2.msra.mxu0 0.0
      %706 = vmatprep.mubr.f32.mxu0 0.0
      %707 = vmatmul.mubr.f32.gmra.mxu0 %v640
      %v708 = vpop.f32.mrf.mxu0
      %v709 = vadd.f32 0.0, %v708
      %v710 = vpop.f32.mrf.mxu0
      %711 = vdwg.mxu0
      %v713 = vsel %vm638, %v427, 0
      %715 = vmatprep.subr.mxu0 0.0
      %716 = vmatpush1.msra.mxu0 0.0
      %717 = vmatprep.subr.mxu0 0.0
      %718 = vmatpush1.msra.mxu0 0.0
      %719 = vmatprep.subr.mxu0 0.0
      %720 = vmatpush1.msra.mxu0 0.0
      %721 = vmatprep.subr.mxu0 0.0
      %722 = vmatpush1.msra.mxu0 0.0
      %723 = vmatprep.subr.mxu0 0.0
      %724 = vmatpush1.msra.mxu0 0.0
      %725 = vmatprep.subr.mxu0 0.0
      %726 = vmatpush1.msra.mxu0 0.0
      %727 = vmatprep.subr.mxu0 0.0
      %728 = vmatpush1.msra.mxu0 0.0
      %729 = vmatprep.subr.mxu0 0.0
      %730 = vmatpush1.msra.mxu0 0.0
      %731 = vmatprep.subr.mxu0 0.0
      %732 = vmatpush1.msra.mxu0 0.0
      %733 = vmatprep.subr.mxu0 0.0
      %734 = vmatpush1.msra.mxu0 0.0
      %735 = vmatprep.subr.mxu0 0.0
      %736 = vmatpush1.msra.mxu0 0.0
      %737 = vmatprep.subr.mxu0 0.0
      %738 = vmatpush1.msra.mxu0 0.0
      %739 = vmatprep.subr.mxu0 0.0
      %740 = vmatpush1.msra.mxu0 0.0
      %741 = vmatprep.subr.mxu0 0.0
      %742 = vmatpush1.msra.mxu0 0.0
      %743 = vmatprep.subr.mxu0 0.0
      %744 = vmatpush1.msra.mxu0 0.0
      %745 = vmatprep.subr.mxu0 0.0
      %746 = vmatpush1.msra.mxu0 %v429
      %747 = vmatprep.subr.mxu0 0.0
      %748 = vmatpush2.msra.mxu0 0.0
      %749 = vmatprep.subr.mxu0 0.0
      %750 = vmatpush2.msra.mxu0 0.0
      %751 = vmatprep.subr.mxu0 0.0
      %752 = vmatpush2.msra.mxu0 0.0
      %753 = vmatprep.subr.mxu0 0.0
      %754 = vmatpush2.msra.mxu0 0.0
      %755 = vmatprep.subr.mxu0 0.0
      %756 = vmatpush2.msra.mxu0 0.0
      %757 = vmatprep.subr.mxu0 0.0
      %758 = vmatpush2.msra.mxu0 0.0
      %759 = vmatprep.subr.mxu0 0.0
      %760 = vmatpush2.msra.mxu0 0.0
      %761 = vmatprep.subr.mxu0 0.0
      %762 = vmatpush2.msra.mxu0 0.0
      %763 = vmatprep.subr.mxu0 0.0
      %764 = vmatpush2.msra.mxu0 0.0
      %765 = vmatprep.subr.mxu0 0.0
      %766 = vmatpush2.msra.mxu0 0.0
      %767 = vmatprep.subr.mxu0 0.0
      %768 = vmatpush2.msra.mxu0 0.0
      %769 = vmatprep.subr.mxu0 0.0
      %770 = vmatpush2.msra.mxu0 0.0
      %771 = vmatprep.subr.mxu0 0.0
      %772 = vmatpush2.msra.mxu0 0.0
      %773 = vmatprep.subr.mxu0 0.0
      %774 = vmatpush2.msra.mxu0 0.0
      %775 = vmatprep.subr.mxu0 0.0
      %776 = vmatpush2.msra.mxu0 0.0
      %777 = vmatprep.subr.mxu0 0.0
      %778 = vmatpush2.msra.mxu0 0.0
      %779 = vmatprep.mubr.f32.mxu0 0.0
      %780 = vmatmul.mubr.f32.gmra.mxu0 %v713
      %v781 = vpop.f32.mrf.mxu0
      %v782 = vadd.f32 0.0, %v781
      %v783 = vpop.f32.mrf.mxu0
      %784 = vdwg.mxu0
      %v785 = vld [vmem:[#allocation2] sm:$0xff]
      %v786 = vld [vmem:[#allocation2 + $0x20] sm:$0xff]
      %v787 = vld [vmem:[#allocation3] sm:$0xff]
      %v788 = vld [vmem:[#allocation3 + $0x20] sm:$0xff]
      %v790 = vsel %vm629, %v709, 0
      %v793 = vsel %vm629, %v782, 0
      %795 = vmatprep.subr.mxu0 0.0
      %796 = vmatpush1.msra.mxu0 0.0
      %797 = vmatprep.subr.mxu0 0.0
      %798 = vmatpush1.msra.mxu0 0.0
      %799 = vmatprep.subr.mxu0 0.0
      %800 = vmatpush1.msra.mxu0 0.0
      %801 = vmatprep.subr.mxu0 0.0
      %802 = vmatpush1.msra.mxu0 0.0
      %803 = vmatprep.subr.mxu0 0.0
      %804 = vmatpush1.msra.mxu0 0.0
      %805 = vmatprep.subr.mxu0 0.0
      %806 = vmatpush1.msra.mxu0 0.0
      %807 = vmatprep.subr.mxu0 0.0
      %808 = vmatpush1.msra.mxu0 0.0
      %809 = vmatprep.subr.mxu0 0.0
      %810 = vmatpush1.msra.mxu0 0.0
      %811 = vmatprep.subr.mxu0 0.0
      %812 = vmatpush1.msra.mxu0 0.0
      %813 = vmatprep.subr.mxu0 0.0
      %814 = vmatpush1.msra.mxu0 0.0
      %815 = vmatprep.subr.mxu0 0.0
      %816 = vmatpush1.msra.mxu0 0.0
      %817 = vmatprep.subr.mxu0 0.0
      %818 = vmatpush1.msra.mxu0 0.0
      %819 = vmatprep.subr.mxu0 0.0
      %820 = vmatpush1.msra.mxu0 %v433
      %821 = vmatprep.subr.mxu0 0.0
      %822 = vmatpush1.msra.mxu0 %v432
      %823 = vmatprep.subr.mxu0 0.0
      %824 = vmatpush1.msra.mxu0 %v431
      %825 = vmatprep.subr.mxu0 0.0
      %826 = vmatpush1.msra.mxu0 %v430
      %827 = vmatprep.subr.mxu0 0.0
      %828 = vmatpush2.msra.mxu0 0.0
      %829 = vmatprep.subr.mxu0 0.0
      %830 = vmatpush2.msra.mxu0 0.0
      %831 = vmatprep.subr.mxu0 0.0
      %832 = vmatpush2.msra.mxu0 0.0
      %833 = vmatprep.subr.mxu0 0.0
      %834 = vmatpush2.msra.mxu0 0.0
      %835 = vmatprep.subr.mxu0 0.0
      %836 = vmatpush2.msra.mxu0 0.0
      %837 = vmatprep.subr.mxu0 0.0
      %838 = vmatpush2.msra.mxu0 0.0
      %839 = vmatprep.subr.mxu0 0.0
      %840 = vmatpush2.msra.mxu0 0.0
      %841 = vmatprep.subr.mxu0 0.0
      %842 = vmatpush2.msra.mxu0 0.0
      %843 = vmatprep.subr.mxu0 0.0
      %844 = vmatpush2.msra.mxu0 0.0
      %845 = vmatprep.subr.mxu0 0.0
      %846 = vmatpush2.msra.mxu0 0.0
      %847 = vmatprep.subr.mxu0 0.0
      %848 = vmatpush2.msra.mxu0 0.0
      %849 = vmatprep.subr.mxu0 0.0
      %850 = vmatpush2.msra.mxu0 0.0
      %851 = vmatprep.subr.mxu0 0.0
      %852 = vmatpush2.msra.mxu0 0.0
      %853 = vmatprep.subr.mxu0 0.0
      %854 = vmatpush2.msra.mxu0 0.0
      %855 = vmatprep.subr.mxu0 0.0
      %856 = vmatpush2.msra.mxu0 0.0
      %857 = vmatprep.subr.mxu0 0.0
      %858 = vmatpush2.msra.mxu0 0.0
      %859 = vmatprep.mubr.f32.mxu0 0.0
      %860 = vmatmul.mubr.f32.gmra.mxu0 %v790
      %v861 = vpop.f32.mrf.mxu0
      %v862 = vadd.f32 %v785, %v861
      %v863 = vpop.f32.mrf.mxu0
      %864 = vmatprep.mubr.f32.mxu0 0.0
      %865 = vmatmul.mubr.f32.gmra.mxu0 %v793
      %v866 = vpop.f32.mrf.mxu0
      %v867 = vadd.f32 %v786, %v866
      %v868 = vpop.f32.mrf.mxu0
      %869 = vdwg.mxu0
      %v870 = vxor.u32 %v862, 2147483648
      %v871 = vxor.u32 %v867, 2147483648
      %v872 = vmul.f32 %v870, 1.442695
      %v873 = vpow.pop %v872
      %v874 = vmul.f32 %v871, 1.442695
      %v875 = vpow.pop %v874
      %v876 = vadd.f32 %v873, 1.0
      %v877 = vadd.f32 %v875, 1.0
      %v878 = vrcp.pop %v876
      %v879 = vmul.f32 1.0, %v878
      %v880 = vrcp.pop %v877
      %v881 = vmul.f32 1.0, %v880
      %882 = vrot.lane.b32.xlu0 %v709, 32
      %v883 = vpop.permute.xlu0 %882
      %884 = vrot.lane.b32.xlu0 %v782, 32
      %v885 = vpop.permute.xlu0 %884
      %v888 = vmul.f32 %v879, %v883
      %v889 = vmul.f32 %v881, %v885
      %892 = vrot.lane.b32.xlu0 %v888, 96
      %v893 = vpop.permute.xlu0 %892
      %894 = vrot.lane.b32.xlu0 %v889, 96
      %v895 = vpop.permute.xlu0 %894
      %v896 = vsel %vm629, %v893, 0
      %v898 = vsel %vm629, %v895, 0
      %900 = vmatprep.subr.mxu0 0.0
      %901 = vmatpush1.msra.mxu0 0.0
      %902 = vmatprep.subr.mxu0 0.0
      %903 = vmatpush1.msra.mxu0 0.0
      %904 = vmatprep.subr.mxu0 0.0
      %905 = vmatpush1.msra.mxu0 0.0
      %906 = vmatprep.subr.mxu0 0.0
      %907 = vmatpush1.msra.mxu0 0.0
      %908 = vmatprep.subr.mxu0 0.0
      %909 = vmatpush1.msra.mxu0 0.0
      %910 = vmatprep.subr.mxu0 0.0
      %911 = vmatpush1.msra.mxu0 0.0
      %912 = vmatprep.subr.mxu0 0.0
      %913 = vmatpush1.msra.mxu0 0.0
      %914 = vmatprep.subr.mxu0 0.0
      %915 = vmatpush1.msra.mxu0 0.0
      %916 = vmatprep.subr.mxu0 0.0
      %917 = vmatpush1.msra.mxu0 0.0
      %918 = vmatprep.subr.mxu0 0.0
      %919 = vmatpush1.msra.mxu0 0.0
      %920 = vmatprep.subr.mxu0 0.0
      %921 = vmatpush1.msra.mxu0 0.0
      %922 = vmatprep.subr.mxu0 0.0
      %923 = vmatpush1.msra.mxu0 0.0
      %924 = vmatprep.subr.mxu0 0.0
      %925 = vmatpush1.msra.mxu0 %v437
      %926 = vmatprep.subr.mxu0 0.0
      %927 = vmatpush1.msra.mxu0 %v436
      %928 = vmatprep.subr.mxu0 0.0
      %929 = vmatpush1.msra.mxu0 %v435
      %930 = vmatprep.subr.mxu0 0.0
      %931 = vmatpush1.msra.mxu0 %v434
      %932 = vmatprep.subr.mxu0 0.0
      %933 = vmatpush2.msra.mxu0 0.0
      %934 = vmatprep.subr.mxu0 0.0
      %935 = vmatpush2.msra.mxu0 0.0
      %936 = vmatprep.subr.mxu0 0.0
      %937 = vmatpush2.msra.mxu0 0.0
      %938 = vmatprep.subr.mxu0 0.0
      %939 = vmatpush2.msra.mxu0 0.0
      %940 = vmatprep.subr.mxu0 0.0
      %941 = vmatpush2.msra.mxu0 0.0
      %942 = vmatprep.subr.mxu0 0.0
      %943 = vmatpush2.msra.mxu0 0.0
      %944 = vmatprep.subr.mxu0 0.0
      %945 = vmatpush2.msra.mxu0 0.0
      %946 = vmatprep.subr.mxu0 0.0
      %947 = vmatpush2.msra.mxu0 0.0
      %948 = vmatprep.subr.mxu0 0.0
      %949 = vmatpush2.msra.mxu0 0.0
      %950 = vmatprep.subr.mxu0 0.0
      %951 = vmatpush2.msra.mxu0 0.0
      %952 = vmatprep.subr.mxu0 0.0
      %953 = vmatpush2.msra.mxu0 0.0
      %954 = vmatprep.subr.mxu0 0.0
      %955 = vmatpush2.msra.mxu0 0.0
      %956 = vmatprep.subr.mxu0 0.0
      %957 = vmatpush2.msra.mxu0 0.0
      %958 = vmatprep.subr.mxu0 0.0
      %959 = vmatpush2.msra.mxu0 0.0
      %960 = vmatprep.subr.mxu0 0.0
      %961 = vmatpush2.msra.mxu0 0.0
      %962 = vmatprep.subr.mxu0 0.0
      %963 = vmatpush2.msra.mxu0 0.0
      %964 = vmatprep.mubr.f32.mxu0 0.0
      %965 = vmatmul.mubr.f32.gmra.mxu0 %v896
      %v966 = vpop.f32.mrf.mxu0
      %v967 = vadd.f32 %v787, %v966
      %v968 = vpop.f32.mrf.mxu0
      %969 = vmatprep.mubr.f32.mxu0 0.0
      %970 = vmatmul.mubr.f32.gmra.mxu0 %v898
      %v971 = vpop.f32.mrf.mxu0
      %v972 = vadd.f32 %v788, %v971
      %v973 = vpop.f32.mrf.mxu0
      %974 = vdwg.mxu0
      %v975 = vtanh.pop %v967
      %v976 = vtanh.pop %v972
      %v977 = vsub.f32 1.0, %v879
      %v978 = vsub.f32 1.0, %v881
      %v979 = vmul.f32 %v977, %v709
      %v980 = vmul.f32 %v978, %v782
      %v981 = vmul.f32 %v879, %v975
      %v982 = vmul.f32 %v881, %v976
      %v983 = vadd.f32 %v979, %v981
      %v984 = vadd.f32 %v980, %v982
      %985 = vst.msk [vmem:[#allocation4] sm:$0xff] %vm629, %v983
      %986 = vst.msk [vmem:[#allocation4 + $0x20] sm:$0xff] %vm629, %v984
      %987 = vmatprep.subr.mxu0 0.0
      %988 = vmatpush1.msra.mxu0 0.0
      %989 = vmatprep.subr.mxu0 0.0
      %990 = vmatpush1.msra.mxu0 0.0
      %991 = vmatprep.subr.mxu0 0.0
      %992 = vmatpush1.msra.mxu0 0.0
      %993 = vmatprep.subr.mxu0 0.0
      %994 = vmatpush1.msra.mxu0 0.0
      %995 = vmatprep.subr.mxu0 0.0
      %996 = vmatpush1.msra.mxu0 0.0
      %997 = vmatprep.subr.mxu0 0.0
      %998 = vmatpush1.msra.mxu0 0.0
      %999 = vmatprep.subr.mxu0 0.0
      %1000 = vmatpush1.msra.mxu0 0.0
      %1001 = vmatprep.subr.mxu0 0.0
      %1002 = vmatpush1.msra.mxu0 0.0
      %1003 = vmatprep.subr.mxu0 0.0
      %1004 = vmatpush1.msra.mxu0 0.0
      %1005 = vmatprep.subr.mxu0 0.0
      %1006 = vmatpush1.msra.mxu0 0.0
      %1007 = vmatprep.subr.mxu0 0.0
      %1008 = vmatpush1.msra.mxu0 0.0
      %1009 = vmatprep.subr.mxu0 0.0
      %1010 = vmatpush1.msra.mxu0 0.0
      %1011 = vmatprep.subr.mxu0 0.0
      %1012 = vmatpush1.msra.mxu0 0.0
      %1013 = vmatprep.subr.mxu0 0.0
      %1014 = vmatpush1.msra.mxu0 0.0
      %1015 = vmatprep.subr.mxu0 0.0
      %1016 = vmatpush1.msra.mxu0 0.0
      %1017 = vmatprep.subr.mxu0 0.0
      %1018 = vmatpush1.msra.mxu0 %v983
      %1019 = vmatprep.subr.mxu0 0.0
      %1020 = vmatpush2.msra.mxu0 0.0
      %1021 = vmatprep.subr.mxu0 0.0
      %1022 = vmatpush2.msra.mxu0 0.0
      %1023 = vmatprep.subr.mxu0 0.0
      %1024 = vmatpush2.msra.mxu0 0.0
      %1025 = vmatprep.subr.mxu0 0.0
      %1026 = vmatpush2.msra.mxu0 0.0
      %1027 = vmatprep.subr.mxu0 0.0
      %1028 = vmatpush2.msra.mxu0 0.0
      %1029 = vmatprep.subr.mxu0 0.0
      %1030 = vmatpush2.msra.mxu0 0.0
      %1031 = vmatprep.subr.mxu0 0.0
      %1032 = vmatpush2.msra.mxu0 0.0
      %1033 = vmatprep.subr.mxu0 0.0
      %1034 = vmatpush2.msra.mxu0 0.0
      %1035 = vmatprep.subr.mxu0 0.0
      %1036 = vmatpush2.msra.mxu0 0.0
      %1037 = vmatprep.subr.mxu0 0.0
      %1038 = vmatpush2.msra.mxu0 0.0
      %1039 = vmatprep.subr.mxu0 0.0
      %1040 = vmatpush2.msra.mxu0 0.0
      %1041 = vmatprep.subr.mxu0 0.0
      %1042 = vmatpush2.msra.mxu0 0.0
      %1043 = vmatprep.subr.mxu0 0.0
      %1044 = vmatpush2.msra.mxu0 0.0
      %1045 = vmatprep.subr.mxu0 0.0
      %1046 = vmatpush2.msra.mxu0 0.0
      %1047 = vmatprep.subr.mxu0 0.0
      %1048 = vmatpush2.msra.mxu0 0.0
      %1049 = vmatprep.subr.mxu0 0.0
      %1050 = vmatpush2.msra.mxu0 0.0
      %1051 = vmatprep.mubr.f32.mxu0 0.0
      %1052 = vmatmul.mubr.f32.gmra.mxu0 %v640
      %v1053 = vpop.f32.mrf.mxu0
      %v1054 = vadd.f32 0.0, %v1053
      %v1055 = vpop.f32.mrf.mxu0
      %1056 = vdwg.mxu0
      %1057 = vmatprep.subr.mxu0 0.0
      %1058 = vmatpush1.msra.mxu0 0.0
      %1059 = vmatprep.subr.mxu0 0.0
      %1060 = vmatpush1.msra.mxu0 0.0
      %1061 = vmatprep.subr.mxu0 0.0
      %1062 = vmatpush1.msra.mxu0 0.0
      %1063 = vmatprep.subr.mxu0 0.0
      %1064 = vmatpush1.msra.mxu0 0.0
      %1065 = vmatprep.subr.mxu0 0.0
      %1066 = vmatpush1.msra.mxu0 0.0
      %1067 = vmatprep.subr.mxu0 0.0
      %1068 = vmatpush1.msra.mxu0 0.0
      %1069 = vmatprep.subr.mxu0 0.0
      %1070 = vmatpush1.msra.mxu0 0.0
      %1071 = vmatprep.subr.mxu0 0.0
      %1072 = vmatpush1.msra.mxu0 0.0
      %1073 = vmatprep.subr.mxu0 0.0
      %1074 = vmatpush1.msra.mxu0 0.0
      %1075 = vmatprep.subr.mxu0 0.0
      %1076 = vmatpush1.msra.mxu0 0.0
      %1077 = vmatprep.subr.mxu0 0.0
      %1078 = vmatpush1.msra.mxu0 0.0
      %1079 = vmatprep.subr.mxu0 0.0
      %1080 = vmatpush1.msra.mxu0 0.0
      %1081 = vmatprep.subr.mxu0 0.0
      %1082 = vmatpush1.msra.mxu0 0.0
      %1083 = vmatprep.subr.mxu0 0.0
      %1084 = vmatpush1.msra.mxu0 0.0
      %1085 = vmatprep.subr.mxu0 0.0
      %1086 = vmatpush1.msra.mxu0 0.0
      %1087 = vmatprep.subr.mxu0 0.0
      %1088 = vmatpush1.msra.mxu0 %v984
      %1089 = vmatprep.subr.mxu0 0.0
      %1090 = vmatpush2.msra.mxu0 0.0
      %1091 = vmatprep.subr.mxu0 0.0
      %1092 = vmatpush2.msra.mxu0 0.0
      %1093 = vmatprep.subr.mxu0 0.0
      %1094 = vmatpush2.msra.mxu0 0.0
      %1095 = vmatprep.subr.mxu0 0.0
      %1096 = vmatpush2.msra.mxu0 0.0
      %1097 = vmatprep.subr.mxu0 0.0
      %1098 = vmatpush2.msra.mxu0 0.0
      %1099 = vmatprep.subr.mxu0 0.0
      %1100 = vmatpush2.msra.mxu0 0.0
      %1101 = vmatprep.subr.mxu0 0.0
      %1102 = vmatpush2.msra.mxu0 0.0
      %1103 = vmatprep.subr.mxu0 0.0
      %1104 = vmatpush2.msra.mxu0 0.0
      %1105 = vmatprep.subr.mxu0 0.0
      %1106 = vmatpush2.msra.mxu0 0.0
      %1107 = vmatprep.subr.mxu0 0.0
      %1108 = vmatpush2.msra.mxu0 0.0
      %1109 = vmatprep.subr.mxu0 0.0
      %1110 = vmatpush2.msra.mxu0 0.0
      %1111 = vmatprep.subr.mxu0 0.0
      %1112 = vmatpush2.msra.mxu0 0.0
      %1113 = vmatprep.subr.mxu0 0.0
      %1114 = vmatpush2.msra.mxu0 0.0
      %1115 = vmatprep.subr.mxu0 0.0
      %1116 = vmatpush2.msra.mxu0 0.0
      %1117 = vmatprep.subr.mxu0 0.0
      %1118 = vmatpush2.msra.mxu0 0.0
      %1119 = vmatprep.subr.mxu0 0.0
      %1120 = vmatpush2.msra.mxu0 0.0
      %1121 = vmatprep.mubr.f32.mxu0 0.0
      %1122 = vmatmul.mubr.f32.gmra.mxu0 %v713
      %v1123 = vpop.f32.mrf.mxu0
      %v1124 = vadd.f32 0.0, %v1123
      %v1125 = vpop.f32.mrf.mxu0
      %1126 = vdwg.mxu0
      %v1127 = vld [vmem:[#allocation2 + $0x8] sm:$0xff]
      %v1128 = vld [vmem:[#allocation2 + $0x28] sm:$0xff]
      %v1129 = vld [vmem:[#allocation3 + $0x8] sm:$0xff]
      %v1130 = vld [vmem:[#allocation3 + $0x28] sm:$0xff]
      %v1132 = vsel %vm629, %v1054, 0
      %v1135 = vsel %vm629, %v1124, 0
      %1137 = vmatprep.subr.mxu0 0.0
      %1138 = vmatpush1.msra.mxu0 0.0
      %1139 = vmatprep.subr.mxu0 0.0
      %1140 = vmatpush1.msra.mxu0 0.0
      %1141 = vmatprep.subr.mxu0 0.0
      %1142 = vmatpush1.msra.mxu0 0.0
      %1143 = vmatprep.subr.mxu0 0.0
      %1144 = vmatpush1.msra.mxu0 0.0
      %1145 = vmatprep.subr.mxu0 0.0
      %1146 = vmatpush1.msra.mxu0 0.0
      %1147 = vmatprep.subr.mxu0 0.0
      %1148 = vmatpush1.msra.mxu0 0.0
      %1149 = vmatprep.subr.mxu0 0.0
      %1150 = vmatpush1.msra.mxu0 0.0
      %1151 = vmatprep.subr.mxu0 0.0
      %1152 = vmatpush1.msra.mxu0 0.0
      %1153 = vmatprep.subr.mxu0 0.0
      %1154 = vmatpush1.msra.mxu0 0.0
      %1155 = vmatprep.subr.mxu0 0.0
      %1156 = vmatpush1.msra.mxu0 0.0
      %1157 = vmatprep.subr.mxu0 0.0
      %1158 = vmatpush1.msra.mxu0 0.0
      %1159 = vmatprep.subr.mxu0 0.0
      %1160 = vmatpush1.msra.mxu0 0.0
      %1161 = vmatprep.subr.mxu0 0.0
      %1162 = vmatpush1.msra.mxu0 %v433
      %1163 = vmatprep.subr.mxu0 0.0
      %1164 = vmatpush1.msra.mxu0 %v432
      %1165 = vmatprep.subr.mxu0 0.0
      %1166 = vmatpush1.msra.mxu0 %v431
      %1167 = vmatprep.subr.mxu0 0.0
      %1168 = vmatpush1.msra.mxu0 %v430
      %1169 = vmatprep.subr.mxu0 0.0
      %1170 = vmatpush2.msra.mxu0 0.0
      %1171 = vmatprep.subr.mxu0 0.0
      %1172 = vmatpush2.msra.mxu0 0.0
      %1173 = vmatprep.subr.mxu0 0.0
      %1174 = vmatpush2.msra.mxu0 0.0
      %1175 = vmatprep.subr.mxu0 0.0
      %1176 = vmatpush2.msra.mxu0 0.0
      %1177 = vmatprep.subr.mxu0 0.0
      %1178 = vmatpush2.msra.mxu0 0.0
      %1179 = vmatprep.subr.mxu0 0.0
      %1180 = vmatpush2.msra.mxu0 0.0
      %1181 = vmatprep.subr.mxu0 0.0
      %1182 = vmatpush2.msra.mxu0 0.0
      %1183 = vmatprep.subr.mxu0 0.0
      %1184 = vmatpush2.msra.mxu0 0.0
      %1185 = vmatprep.subr.mxu0 0.0
      %1186 = vmatpush2.msra.mxu0 0.0
      %1187 = vmatprep.subr.mxu0 0.0
      %1188 = vmatpush2.msra.mxu0 0.0
      %1189 = vmatprep.subr.mxu0 0.0
      %1190 = vmatpush2.msra.mxu0 0.0
      %1191 = vmatprep.subr.mxu0 0.0
      %1192 = vmatpush2.msra.mxu0 0.0
      %1193 = vmatprep.subr.mxu0 0.0
      %1194 = vmatpush2.msra.mxu0 0.0
      %1195 = vmatprep.subr.mxu0 0.0
      %1196 = vmatpush2.msra.mxu0 0.0
      %1197 = vmatprep.subr.mxu0 0.0
      %1198 = vmatpush2.msra.mxu0 0.0
      %1199 = vmatprep.subr.mxu0 0.0
      %1200 = vmatpush2.msra.mxu0 0.0
      %1201 = vmatprep.mubr.f32.mxu0 0.0
      %1202 = vmatmul.mubr.f32.gmra.mxu0 %v1132
      %v1203 = vpop.f32.mrf.mxu0
      %v1204 = vadd.f32 %v1127, %v1203
      %v1205 = vpop.f32.mrf.mxu0
      %1206 = vmatprep.mubr.f32.mxu0 0.0
      %1207 = vmatmul.mubr.f32.gmra.mxu0 %v1135
      %v1208 = vpop.f32.mrf.mxu0
      %v1209 = vadd.f32 %v1128, %v1208
      %v1210 = vpop.f32.mrf.mxu0
      %1211 = vdwg.mxu0
      %v1212 = vxor.u32 %v1204, 2147483648
      %v1213 = vxor.u32 %v1209, 2147483648
      %v1214 = vmul.f32 %v1212, 1.442695
      %v1215 = vpow.pop %v1214
      %v1216 = vmul.f32 %v1213, 1.442695
      %v1217 = vpow.pop %v1216
      %v1218 = vadd.f32 %v1215, 1.0
      %v1219 = vadd.f32 %v1217, 1.0
      %v1220 = vrcp.pop %v1218
      %v1221 = vmul.f32 1.0, %v1220
      %v1222 = vrcp.pop %v1219
      %v1223 = vmul.f32 1.0, %v1222
      %1224 = vrot.lane.b32.xlu0 %v1054, 32
      %v1225 = vpop.permute.xlu0 %1224
      %1226 = vrot.lane.b32.xlu0 %v1124, 32
      %v1227 = vpop.permute.xlu0 %1226
      %v1230 = vmul.f32 %v1221, %v1225
      %v1231 = vmul.f32 %v1223, %v1227
      %1234 = vrot.lane.b32.xlu0 %v1230, 96
      %v1235 = vpop.permute.xlu0 %1234
      %1236 = vrot.lane.b32.xlu0 %v1231, 96
      %v1237 = vpop.permute.xlu0 %1236
      %v1238 = vsel %vm629, %v1235, 0
      %v1240 = vsel %vm629, %v1237, 0
      %1242 = vmatprep.subr.mxu0 0.0
      %1243 = vmatpush1.msra.mxu0 0.0
      %1244 = vmatprep.subr.mxu0 0.0
      %1245 = vmatpush1.msra.mxu0 0.0
      %1246 = vmatprep.subr.mxu0 0.0
      %1247 = vmatpush1.msra.mxu0 0.0
      %1248 = vmatprep.subr.mxu0 0.0
      %1249 = vmatpush1.msra.mxu0 0.0
      %1250 = vmatprep.subr.mxu0 0.0
      %1251 = vmatpush1.msra.mxu0 0.0
      %1252 = vmatprep.subr.mxu0 0.0
      %1253 = vmatpush1.msra.mxu0 0.0
      %1254 = vmatprep.subr.mxu0 0.0
      %1255 = vmatpush1.msra.mxu0 0.0
      %1256 = vmatprep.subr.mxu0 0.0
      %1257 = vmatpush1.msra.mxu0 0.0
      %1258 = vmatprep.subr.mxu0 0.0
      %1259 = vmatpush1.msra.mxu0 0.0
      %1260 = vmatprep.subr.mxu0 0.0
      %1261 = vmatpush1.msra.mxu0 0.0
      %1262 = vmatprep.subr.mxu0 0.0
      %1263 = vmatpush1.msra.mxu0 0.0
      %1264 = vmatprep.subr.mxu0 0.0
      %1265 = vmatpush1.msra.mxu0 0.0
      %1266 = vmatprep.subr.mxu0 0.0
      %1267 = vmatpush1.msra.mxu0 %v437
      %1268 = vmatprep.subr.mxu0 0.0
      %1269 = vmatpush1.msra.mxu0 %v436
      %1270 = vmatprep.subr.mxu0 0.0
      %1271 = vmatpush1.msra.mxu0 %v435
      %1272 = vmatprep.subr.mxu0 0.0
      %1273 = vmatpush1.msra.mxu0 %v434
      %1274 = vmatprep.subr.mxu0 0.0
      %1275 = vmatpush2.msra.mxu0 0.0
      %1276 = vmatprep.subr.mxu0 0.0
      %1277 = vmatpush2.msra.mxu0 0.0
      %1278 = vmatprep.subr.mxu0 0.0
      %1279 = vmatpush2.msra.mxu0 0.0
      %1280 = vmatprep.subr.mxu0 0.0
      %1281 = vmatpush2.msra.mxu0 0.0
      %1282 = vmatprep.subr.mxu0 0.0
      %1283 = vmatpush2.msra.mxu0 0.0
      %1284 = vmatprep.subr.mxu0 0.0
      %1285 = vmatpush2.msra.mxu0 0.0
      %1286 = vmatprep.subr.mxu0 0.0
      %1287 = vmatpush2.msra.mxu0 0.0
      %1288 = vmatprep.subr.mxu0 0.0
      %1289 = vmatpush2.msra.mxu0 0.0
      %1290 = vmatprep.subr.mxu0 0.0
      %1291 = vmatpush2.msra.mxu0 0.0
      %1292 = vmatprep.subr.mxu0 0.0
      %1293 = vmatpush2.msra.mxu0 0.0
      %1294 = vmatprep.subr.mxu0 0.0
      %1295 = vmatpush2.msra.mxu0 0.0
      %1296 = vmatprep.subr.mxu0 0.0
      %1297 = vmatpush2.msra.mxu0 0.0
      %1298 = vmatprep.subr.mxu0 0.0
      %1299 = vmatpush2.msra.mxu0 0.0
      %1300 = vmatprep.subr.mxu0 0.0
      %1301 = vmatpush2.msra.mxu0 0.0
      %1302 = vmatprep.subr.mxu0 0.0
      %1303 = vmatpush2.msra.mxu0 0.0
      %1304 = vmatprep.subr.mxu0 0.0
      %1305 = vmatpush2.msra.mxu0 0.0
      %1306 = vmatprep.mubr.f32.mxu0 0.0
      %1307 = vmatmul.mubr.f32.gmra.mxu0 %v1238
      %v1308 = vpop.f32.mrf.mxu0
      %v1309 = vadd.f32 %v1129, %v1308
      %v1310 = vpop.f32.mrf.mxu0
      %1311 = vmatprep.mubr.f32.mxu0 0.0
      %1312 = vmatmul.mubr.f32.gmra.mxu0 %v1240
      %v1313 = vpop.f32.mrf.mxu0
      %v1314 = vadd.f32 %v1130, %v1313
      %v1315 = vpop.f32.mrf.mxu0
      %1316 = vdwg.mxu0
      %v1317 = vtanh.pop %v1309
      %v1318 = vtanh.pop %v1314
      %v1319 = vsub.f32 1.0, %v1221
      %v1320 = vsub.f32 1.0, %v1223
      %v1321 = vmul.f32 %v1319, %v1054
      %v1322 = vmul.f32 %v1320, %v1124
      %v1323 = vmul.f32 %v1221, %v1317
      %v1324 = vmul.f32 %v1223, %v1318
      %v1325 = vadd.f32 %v1321, %v1323
      %v1326 = vadd.f32 %v1322, %v1324
      %1327 = vst.msk [vmem:[#allocation4 + $0x8] sm:$0xff] %vm629, %v1325
      %1328 = vst.msk [vmem:[#allocation4 + $0x28] sm:$0xff] %vm629, %v1326
      %1329 = vmatprep.subr.mxu0 0.0
      %1330 = vmatpush1.msra.mxu0 0.0
      %1331 = vmatprep.subr.mxu0 0.0
      %1332 = vmatpush1.msra.mxu0 0.0
      %1333 = vmatprep.subr.mxu0 0.0
      %1334 = vmatpush1.msra.mxu0 0.0
      %1335 = vmatprep.subr.mxu0 0.0
      %1336 = vmatpush1.msra.mxu0 0.0
      %1337 = vmatprep.subr.mxu0 0.0
      %1338 = vmatpush1.msra.mxu0 0.0
      %1339 = vmatprep.subr.mxu0 0.0
      %1340 = vmatpush1.msra.mxu0 0.0
      %1341 = vmatprep.subr.mxu0 0.0
      %1342 = vmatpush1.msra.mxu0 0.0
      %1343 = vmatprep.subr.mxu0 0.0
      %1344 = vmatpush1.msra.mxu0 0.0
      %1345 = vmatprep.subr.mxu0 0.0
      %1346 = vmatpush1.msra.mxu0 0.0
      %1347 = vmatprep.subr.mxu0 0.0
      %1348 = vmatpush1.msra.mxu0 0.0
      %1349 = vmatprep.subr.mxu0 0.0
      %1350 = vmatpush1.msra.mxu0 0.0
      %1351 = vmatprep.subr.mxu0 0.0
      %1352 = vmatpush1.msra.mxu0 0.0
      %1353 = vmatprep.subr.mxu0 0.0
      %1354 = vmatpush1.msra.mxu0 0.0
      %1355 = vmatprep.subr.mxu0 0.0
      %1356 = vmatpush1.msra.mxu0 0.0
      %1357 = vmatprep.subr.mxu0 0.0
      %1358 = vmatpush1.msra.mxu0 0.0
      %1359 = vmatprep.subr.mxu0 0.0
      %1360 = vmatpush1.msra.mxu0 %v1325
      %1361 = vmatprep.subr.mxu0 0.0
      %1362 = vmatpush2.msra.mxu0 0.0
      %1363 = vmatprep.subr.mxu0 0.0
      %1364 = vmatpush2.msra.mxu0 0.0
      %1365 = vmatprep.subr.mxu0 0.0
      %1366 = vmatpush2.msra.mxu0 0.0
      %1367 = vmatprep.subr.mxu0 0.0
      %1368 = vmatpush2.msra.mxu0 0.0
      %1369 = vmatprep.subr.mxu0 0.0
      %1370 = vmatpush2.msra.mxu0 0.0
      %1371 = vmatprep.subr.mxu0 0.0
      %1372 = vmatpush2.msra.mxu0 0.0
      %1373 = vmatprep.subr.mxu0 0.0
      %1374 = vmatpush2.msra.mxu0 0.0
      %1375 = vmatprep.subr.mxu0 0.0
      %1376 = vmatpush2.msra.mxu0 0.0
      %1377 = vmatprep.subr.mxu0 0.0
      %1378 = vmatpush2.msra.mxu0 0.0
      %1379 = vmatprep.subr.mxu0 0.0
      %1380 = vmatpush2.msra.mxu0 0.0
      %1381 = vmatprep.subr.mxu0 0.0
      %1382 = vmatpush2.msra.mxu0 0.0
      %1383 = vmatprep.subr.mxu0 0.0
      %1384 = vmatpush2.msra.mxu0 0.0
      %1385 = vmatprep.subr.mxu0 0.0
      %1386 = vmatpush2.msra.mxu0 0.0
      %1387 = vmatprep.subr.mxu0 0.0
      %1388 = vmatpush2.msra.mxu0 0.0
      %1389 = vmatprep.subr.mxu0 0.0
      %1390 = vmatpush2.msra.mxu0 0.0
      %1391 = vmatprep.subr.mxu0 0.0
      %1392 = vmatpush2.msra.mxu0 0.0
      %1393 = vmatprep.mubr.f32.mxu0 0.0
      %1394 = vmatmul.mubr.f32.gmra.mxu0 %v640
      %v1395 = vpop.f32.mrf.mxu0
      %v1396 = vadd.f32 0.0, %v1395
      %v1397 = vpop.f32.mrf.mxu0
      %1398 = vdwg.mxu0
      %1399 = vmatprep.subr.mxu0 0.0
      %1400 = vmatpush1.msra.mxu0 0.0
      %1401 = vmatprep.subr.mxu0 0.0
      %1402 = vmatpush1.msra.mxu0 0.0
      %1403 = vmatprep.subr.mxu0 0.0
      %1404 = vmatpush1.msra.mxu0 0.0
      %1405 = vmatprep.subr.mxu0 0.0
      %1406 = vmatpush1.msra.mxu0 0.0
      %1407 = vmatprep.subr.mxu0 0.0
      %1408 = vmatpush1.msra.mxu0 0.0
      %1409 = vmatprep.subr.mxu0 0.0
      %1410 = vmatpush1.msra.mxu0 0.0
      %1411 = vmatprep.subr.mxu0 0.0
      %1412 = vmatpush1.msra.mxu0 0.0
      %1413 = vmatprep.subr.mxu0 0.0
      %1414 = vmatpush1.msra.mxu0 0.0
      %1415 = vmatprep.subr.mxu0 0.0
      %1416 = vmatpush1.msra.mxu0 0.0
      %1417 = vmatprep.subr.mxu0 0.0
      %1418 = vmatpush1.msra.mxu0 0.0
      %1419 = vmatprep.subr.mxu0 0.0
      %1420 = vmatpush1.msra.mxu0 0.0
      %1421 = vmatprep.subr.mxu0 0.0
      %1422 = vmatpush1.msra.mxu0 0.0
      %1423 = vmatprep.subr.mxu0 0.0
      %1424 = vmatpush1.msra.mxu0 0.0
      %1425 = vmatprep.subr.mxu0 0.0
      %1426 = vmatpush1.msra.mxu0 0.0
      %1427 = vmatprep.subr.mxu0 0.0
      %1428 = vmatpush1.msra.mxu0 0.0
      %1429 = vmatprep.subr.mxu0 0.0
      %1430 = vmatpush1.msra.mxu0 %v1326
      %1431 = vmatprep.subr.mxu0 0.0
      %1432 = vmatpush2.msra.mxu0 0.0
      %1433 = vmatprep.subr.mxu0 0.0
      %1434 = vmatpush2.msra.mxu0 0.0
      %1435 = vmatprep.subr.mxu0 0.0
      %1436 = vmatpush2.msra.mxu0 0.0
      %1437 = vmatprep.subr.mxu0 0.0
      %1438 = vmatpush2.msra.mxu0 0.0
      %1439 = vmatprep.subr.mxu0 0.0
      %1440 = vmatpush2.msra.mxu0 0.0
      %1441 = vmatprep.subr.mxu0 0.0
      %1442 = vmatpush2.msra.mxu0 0.0
      %1443 = vmatprep.subr.mxu0 0.0
      %1444 = vmatpush2.msra.mxu0 0.0
      %1445 = vmatprep.subr.mxu0 0.0
      %1446 = vmatpush2.msra.mxu0 0.0
      %1447 = vmatprep.subr.mxu0 0.0
      %1448 = vmatpush2.msra.mxu0 0.0
      %1449 = vmatprep.subr.mxu0 0.0
      %1450 = vmatpush2.msra.mxu0 0.0
      %1451 = vmatprep.subr.mxu0 0.0
      %1452 = vmatpush2.msra.mxu0 0.0
      %1453 = vmatprep.subr.mxu0 0.0
      %1454 = vmatpush2.msra.mxu0 0.0
      %1455 = vmatprep.subr.mxu0 0.0
      %1456 = vmatpush2.msra.mxu0 0.0
      %1457 = vmatprep.subr.mxu0 0.0
      %1458 = vmatpush2.msra.mxu0 0.0
      %1459 = vmatprep.subr.mxu0 0.0
      %1460 = vmatpush2.msra.mxu0 0.0
      %1461 = vmatprep.subr.mxu0 0.0
      %1462 = vmatpush2.msra.mxu0 0.0
      %1463 = vmatprep.mubr.f32.mxu0 0.0
      %1464 = vmatmul.mubr.f32.gmra.mxu0 %v713
      %v1465 = vpop.f32.mrf.mxu0
      %v1466 = vadd.f32 0.0, %v1465
      %v1467 = vpop.f32.mrf.mxu0
      %1468 = vdwg.mxu0
      %v1469 = vld [vmem:[#allocation2 + $0x10] sm:$0xff]
      %v1470 = vld [vmem:[#allocation2 + $0x30] sm:$0xff]
      %v1471 = vld [vmem:[#allocation3 + $0x10] sm:$0xff]
      %v1472 = vld [vmem:[#allocation3 + $0x30] sm:$0xff]
      %v1474 = vsel %vm629, %v1396, 0
      %v1477 = vsel %vm629, %v1466, 0
      %1479 = vmatprep.subr.mxu0 0.0
      %1480 = vmatpush1.msra.mxu0 0.0
      %1481 = vmatprep.subr.mxu0 0.0
      %1482 = vmatpush1.msra.mxu0 0.0
      %1483 = vmatprep.subr.mxu0 0.0
      %1484 = vmatpush1.msra.mxu0 0.0
      %1485 = vmatprep.subr.mxu0 0.0
      %1486 = vmatpush1.msra.mxu0 0.0
      %1487 = vmatprep.subr.mxu0 0.0
      %1488 = vmatpush1.msra.mxu0 0.0
      %1489 = vmatprep.subr.mxu0 0.0
      %1490 = vmatpush1.msra.mxu0 0.0
      %1491 = vmatprep.subr.mxu0 0.0
      %1492 = vmatpush1.msra.mxu0 0.0
      %1493 = vmatprep.subr.mxu0 0.0
      %1494 = vmatpush1.msra.mxu0 0.0
      %1495 = vmatprep.subr.mxu0 0.0
      %1496 = vmatpush1.msra.mxu0 0.0
      %1497 = vmatprep.subr.mxu0 0.0
      %1498 = vmatpush1.msra.mxu0 0.0
      %1499 = vmatprep.subr.mxu0 0.0
      %1500 = vmatpush1.msra.mxu0 0.0
      %1501 = vmatprep.subr.mxu0 0.0
      %1502 = vmatpush1.msra.mxu0 0.0
      %1503 = vmatprep.subr.mxu0 0.0
      %1504 = vmatpush1.msra.mxu0 %v433
      %1505 = vmatprep.subr.mxu0 0.0
      %1506 = vmatpush1.msra.mxu0 %v432
      %1507 = vmatprep.subr.mxu0 0.0
      %1508 = vmatpush1.msra.mxu0 %v431
      %1509 = vmatprep.subr.mxu0 0.0
      %1510 = vmatpush1.msra.mxu0 %v430
      %1511 = vmatprep.subr.mxu0 0.0
      %1512 = vmatpush2.msra.mxu0 0.0
      %1513 = vmatprep.subr.mxu0 0.0
      %1514 = vmatpush2.msra.mxu0 0.0
      %1515 = vmatprep.subr.mxu0 0.0
      %1516 = vmatpush2.msra.mxu0 0.0
      %1517 = vmatprep.subr.mxu0 0.0
      %1518 = vmatpush2.msra.mxu0 0.0
      %1519 = vmatprep.subr.mxu0 0.0
      %1520 = vmatpush2.msra.mxu0 0.0
      %1521 = vmatprep.subr.mxu0 0.0
      %1522 = vmatpush2.msra.mxu0 0.0
      %1523 = vmatprep.subr.mxu0 0.0
      %1524 = vmatpush2.msra.mxu0 0.0
      %1525 = vmatprep.subr.mxu0 0.0
      %1526 = vmatpush2.msra.mxu0 0.0
      %1527 = vmatprep.subr.mxu0 0.0
      %1528 = vmatpush2.msra.mxu0 0.0
      %1529 = vmatprep.subr.mxu0 0.0
      %1530 = vmatpush2.msra.mxu0 0.0
      %1531 = vmatprep.subr.mxu0 0.0
      %1532 = vmatpush2.msra.mxu0 0.0
      %1533 = vmatprep.subr.mxu0 0.0
      %1534 = vmatpush2.msra.mxu0 0.0
      %1535 = vmatprep.subr.mxu0 0.0
      %1536 = vmatpush2.msra.mxu0 0.0
      %1537 = vmatprep.subr.mxu0 0.0
      %1538 = vmatpush2.msra.mxu0 0.0
      %1539 = vmatprep.subr.mxu0 0.0
      %1540 = vmatpush2.msra.mxu0 0.0
      %1541 = vmatprep.subr.mxu0 0.0
      %1542 = vmatpush2.msra.mxu0 0.0
      %1543 = vmatprep.mubr.f32.mxu0 0.0
      %1544 = vmatmul.mubr.f32.gmra.mxu0 %v1474
      %v1545 = vpop.f32.mrf.mxu0
      %v1546 = vadd.f32 %v1469, %v1545
      %v1547 = vpop.f32.mrf.mxu0
      %1548 = vmatprep.mubr.f32.mxu0 0.0
      %1549 = vmatmul.mubr.f32.gmra.mxu0 %v1477
      %v1550 = vpop.f32.mrf.mxu0
      %v1551 = vadd.f32 %v1470, %v1550
      %v1552 = vpop.f32.mrf.mxu0
      %1553 = vdwg.mxu0
      %v1554 = vxor.u32 %v1546, 2147483648
      %v1555 = vxor.u32 %v1551, 2147483648
      %v1556 = vmul.f32 %v1554, 1.442695
      %v1557 = vpow.pop %v1556
      %v1558 = vmul.f32 %v1555, 1.442695
      %v1559 = vpow.pop %v1558
      %v1560 = vadd.f32 %v1557, 1.0
      %v1561 = vadd.f32 %v1559, 1.0
      %v1562 = vrcp.pop %v1560
      %v1563 = vmul.f32 1.0, %v1562
      %v1564 = vrcp.pop %v1561
      %v1565 = vmul.f32 1.0, %v1564
      %1566 = vrot.lane.b32.xlu0 %v1396, 32
      %v1567 = vpop.permute.xlu0 %1566
      %1568 = vrot.lane.b32.xlu0 %v1466, 32
      %v1569 = vpop.permute.xlu0 %1568
      %v1572 = vmul.f32 %v1563, %v1567
      %v1573 = vmul.f32 %v1565, %v1569
      %1576 = vrot.lane.b32.xlu0 %v1572, 96
      %v1577 = vpop.permute.xlu0 %1576
      %1578 = vrot.lane.b32.xlu0 %v1573, 96
      %v1579 = vpop.permute.xlu0 %1578
      %v1580 = vsel %vm629, %v1577, 0
      %v1582 = vsel %vm629, %v1579, 0
      %1584 = vmatprep.subr.mxu0 0.0
      %1585 = vmatpush1.msra.mxu0 0.0
      %1586 = vmatprep.subr.mxu0 0.0
      %1587 = vmatpush1.msra.mxu0 0.0
      %1588 = vmatprep.subr.mxu0 0.0
      %1589 = vmatpush1.msra.mxu0 0.0
      %1590 = vmatprep.subr.mxu0 0.0
      %1591 = vmatpush1.msra.mxu0 0.0
      %1592 = vmatprep.subr.mxu0 0.0
      %1593 = vmatpush1.msra.mxu0 0.0
      %1594 = vmatprep.subr.mxu0 0.0
      %1595 = vmatpush1.msra.mxu0 0.0
      %1596 = vmatprep.subr.mxu0 0.0
      %1597 = vmatpush1.msra.mxu0 0.0
      %1598 = vmatprep.subr.mxu0 0.0
      %1599 = vmatpush1.msra.mxu0 0.0
      %1600 = vmatprep.subr.mxu0 0.0
      %1601 = vmatpush1.msra.mxu0 0.0
      %1602 = vmatprep.subr.mxu0 0.0
      %1603 = vmatpush1.msra.mxu0 0.0
      %1604 = vmatprep.subr.mxu0 0.0
      %1605 = vmatpush1.msra.mxu0 0.0
      %1606 = vmatprep.subr.mxu0 0.0
      %1607 = vmatpush1.msra.mxu0 0.0
      %1608 = vmatprep.subr.mxu0 0.0
      %1609 = vmatpush1.msra.mxu0 %v437
      %1610 = vmatprep.subr.mxu0 0.0
      %1611 = vmatpush1.msra.mxu0 %v436
      %1612 = vmatprep.subr.mxu0 0.0
      %1613 = vmatpush1.msra.mxu0 %v435
      %1614 = vmatprep.subr.mxu0 0.0
      %1615 = vmatpush1.msra.mxu0 %v434
      %1616 = vmatprep.subr.mxu0 0.0
      %1617 = vmatpush2.msra.mxu0 0.0
      %1618 = vmatprep.subr.mxu0 0.0
      %1619 = vmatpush2.msra.mxu0 0.0
      %1620 = vmatprep.subr.mxu0 0.0
      %1621 = vmatpush2.msra.mxu0 0.0
      %1622 = vmatprep.subr.mxu0 0.0
      %1623 = vmatpush2.msra.mxu0 0.0
      %1624 = vmatprep.subr.mxu0 0.0
      %1625 = vmatpush2.msra.mxu0 0.0
      %1626 = vmatprep.subr.mxu0 0.0
      %1627 = vmatpush2.msra.mxu0 0.0
      %1628 = vmatprep.subr.mxu0 0.0
      %1629 = vmatpush2.msra.mxu0 0.0
      %1630 = vmatprep.subr.mxu0 0.0
      %1631 = vmatpush2.msra.mxu0 0.0
      %1632 = vmatprep.subr.mxu0 0.0
      %1633 = vmatpush2.msra.mxu0 0.0
      %1634 = vmatprep.subr.mxu0 0.0
      %1635 = vmatpush2.msra.mxu0 0.0
      %1636 = vmatprep.subr.mxu0 0.0
      %1637 = vmatpush2.msra.mxu0 0.0
      %1638 = vmatprep.subr.mxu0 0.0
      %1639 = vmatpush2.msra.mxu0 0.0
      %1640 = vmatprep.subr.mxu0 0.0
      %1641 = vmatpush2.msra.mxu0 0.0
      %1642 = vmatprep.subr.mxu0 0.0
      %1643 = vmatpush2.msra.mxu0 0.0
      %1644 = vmatprep.subr.mxu0 0.0
      %1645 = vmatpush2.msra.mxu0 0.0
      %1646 = vmatprep.subr.mxu0 0.0
      %1647 = vmatpush2.msra.mxu0 0.0
      %1648 = vmatprep.mubr.f32.mxu0 0.0
      %1649 = vmatmul.mubr.f32.gmra.mxu0 %v1580
      %v1650 = vpop.f32.mrf.mxu0
      %v1651 = vadd.f32 %v1471, %v1650
      %v1652 = vpop.f32.mrf.mxu0
      %1653 = vmatprep.mubr.f32.mxu0 0.0
      %1654 = vmatmul.mubr.f32.gmra.mxu0 %v1582
      %v1655 = vpop.f32.mrf.mxu0
      %v1656 = vadd.f32 %v1472, %v1655
      %v1657 = vpop.f32.mrf.mxu0
      %1658 = vdwg.mxu0
      %v1659 = vtanh.pop %v1651
      %v1660 = vtanh.pop %v1656
      %v1661 = vsub.f32 1.0, %v1563
      %v1662 = vsub.f32 1.0, %v1565
      %v1663 = vmul.f32 %v1661, %v1396
      %v1664 = vmul.f32 %v1662, %v1466
      %v1665 = vmul.f32 %v1563, %v1659
      %v1666 = vmul.f32 %v1565, %v1660
      %v1667 = vadd.f32 %v1663, %v1665
      %v1668 = vadd.f32 %v1664, %v1666
      %1669 = vst.msk [vmem:[#allocation4 + $0x10] sm:$0xff] %vm629, %v1667
      %1670 = vst.msk [vmem:[#allocation4 + $0x30] sm:$0xff] %vm629, %v1668
      %1671 = vmatprep.subr.mxu0 0.0
      %1672 = vmatpush1.msra.mxu0 0.0
      %1673 = vmatprep.subr.mxu0 0.0
      %1674 = vmatpush1.msra.mxu0 0.0
      %1675 = vmatprep.subr.mxu0 0.0
      %1676 = vmatpush1.msra.mxu0 0.0
      %1677 = vmatprep.subr.mxu0 0.0
      %1678 = vmatpush1.msra.mxu0 0.0
      %1679 = vmatprep.subr.mxu0 0.0
      %1680 = vmatpush1.msra.mxu0 0.0
      %1681 = vmatprep.subr.mxu0 0.0
      %1682 = vmatpush1.msra.mxu0 0.0
      %1683 = vmatprep.subr.mxu0 0.0
      %1684 = vmatpush1.msra.mxu0 0.0
      %1685 = vmatprep.subr.mxu0 0.0
      %1686 = vmatpush1.msra.mxu0 0.0
      %1687 = vmatprep.subr.mxu0 0.0
      %1688 = vmatpush1.msra.mxu0 0.0
      %1689 = vmatprep.subr.mxu0 0.0
      %1690 = vmatpush1.msra.mxu0 0.0
      %1691 = vmatprep.subr.mxu0 0.0
      %1692 = vmatpush1.msra.mxu0 0.0
      %1693 = vmatprep.subr.mxu0 0.0
      %1694 = vmatpush1.msra.mxu0 0.0
      %1695 = vmatprep.subr.mxu0 0.0
      %1696 = vmatpush1.msra.mxu0 0.0
      %1697 = vmatprep.subr.mxu0 0.0
      %1698 = vmatpush1.msra.mxu0 0.0
      %1699 = vmatprep.subr.mxu0 0.0
      %1700 = vmatpush1.msra.mxu0 0.0
      %1701 = vmatprep.subr.mxu0 0.0
      %1702 = vmatpush1.msra.mxu0 %v1667
      %1703 = vmatprep.subr.mxu0 0.0
      %1704 = vmatpush2.msra.mxu0 0.0
      %1705 = vmatprep.subr.mxu0 0.0
      %1706 = vmatpush2.msra.mxu0 0.0
      %1707 = vmatprep.subr.mxu0 0.0
      %1708 = vmatpush2.msra.mxu0 0.0
      %1709 = vmatprep.subr.mxu0 0.0
      %1710 = vmatpush2.msra.mxu0 0.0
      %1711 = vmatprep.subr.mxu0 0.0
      %1712 = vmatpush2.msra.mxu0 0.0
      %1713 = vmatprep.subr.mxu0 0.0
      %1714 = vmatpush2.msra.mxu0 0.0
      %1715 = vmatprep.subr.mxu0 0.0
      %1716 = vmatpush2.msra.mxu0 0.0
      %1717 = vmatprep.subr.mxu0 0.0
      %1718 = vmatpush2.msra.mxu0 0.0
      %1719 = vmatprep.subr.mxu0 0.0
      %1720 = vmatpush2.msra.mxu0 0.0
      %1721 = vmatprep.subr.mxu0 0.0
      %1722 = vmatpush2.msra.mxu0 0.0
      %1723 = vmatprep.subr.mxu0 0.0
      %1724 = vmatpush2.msra.mxu0 0.0
      %1725 = vmatprep.subr.mxu0 0.0
      %1726 = vmatpush2.msra.mxu0 0.0
      %1727 = vmatprep.subr.mxu0 0.0
      %1728 = vmatpush2.msra.mxu0 0.0
      %1729 = vmatprep.subr.mxu0 0.0
      %1730 = vmatpush2.msra.mxu0 0.0
      %1731 = vmatprep.subr.mxu0 0.0
      %1732 = vmatpush2.msra.mxu0 0.0
      %1733 = vmatprep.subr.mxu0 0.0
      %1734 = vmatpush2.msra.mxu0 0.0
      %1735 = vmatprep.mubr.f32.mxu0 0.0
      %1736 = vmatmul.mubr.f32.gmra.mxu0 %v640
      %v1737 = vpop.f32.mrf.mxu0
      %v1738 = vadd.f32 0.0, %v1737
      %v1739 = vpop.f32.mrf.mxu0
      %1740 = vdwg.mxu0
      %1741 = vmatprep.subr.mxu0 0.0
      %1742 = vmatpush1.msra.mxu0 0.0
      %1743 = vmatprep.subr.mxu0 0.0
      %1744 = vmatpush1.msra.mxu0 0.0
      %1745 = vmatprep.subr.mxu0 0.0
      %1746 = vmatpush1.msra.mxu0 0.0
      %1747 = vmatprep.subr.mxu0 0.0
      %1748 = vmatpush1.msra.mxu0 0.0
      %1749 = vmatprep.subr.mxu0 0.0
      %1750 = vmatpush1.msra.mxu0 0.0
      %1751 = vmatprep.subr.mxu0 0.0
      %1752 = vmatpush1.msra.mxu0 0.0
      %1753 = vmatprep.subr.mxu0 0.0
      %1754 = vmatpush1.msra.mxu0 0.0
      %1755 = vmatprep.subr.mxu0 0.0
      %1756 = vmatpush1.msra.mxu0 0.0
      %1757 = vmatprep.subr.mxu0 0.0
      %1758 = vmatpush1.msra.mxu0 0.0
      %1759 = vmatprep.subr.mxu0 0.0
      %1760 = vmatpush1.msra.mxu0 0.0
      %1761 = vmatprep.subr.mxu0 0.0
      %1762 = vmatpush1.msra.mxu0 0.0
      %1763 = vmatprep.subr.mxu0 0.0
      %1764 = vmatpush1.msra.mxu0 0.0
      %1765 = vmatprep.subr.mxu0 0.0
      %1766 = vmatpush1.msra.mxu0 0.0
      %1767 = vmatprep.subr.mxu0 0.0
      %1768 = vmatpush1.msra.mxu0 0.0
      %1769 = vmatprep.subr.mxu0 0.0
      %1770 = vmatpush1.msra.mxu0 0.0
      %1771 = vmatprep.subr.mxu0 0.0
      %1772 = vmatpush1.msra.mxu0 %v1668
      %1773 = vmatprep.subr.mxu0 0.0
      %1774 = vmatpush2.msra.mxu0 0.0
      %1775 = vmatprep.subr.mxu0 0.0
      %1776 = vmatpush2.msra.mxu0 0.0
      %1777 = vmatprep.subr.mxu0 0.0
      %1778 = vmatpush2.msra.mxu0 0.0
      %1779 = vmatprep.subr.mxu0 0.0
      %1780 = vmatpush2.msra.mxu0 0.0
      %1781 = vmatprep.subr.mxu0 0.0
      %1782 = vmatpush2.msra.mxu0 0.0
      %1783 = vmatprep.subr.mxu0 0.0
      %1784 = vmatpush2.msra.mxu0 0.0
      %1785 = vmatprep.subr.mxu0 0.0
      %1786 = vmatpush2.msra.mxu0 0.0
      %1787 = vmatprep.subr.mxu0 0.0
      %1788 = vmatpush2.msra.mxu0 0.0
      %1789 = vmatprep.subr.mxu0 0.0
      %1790 = vmatpush2.msra.mxu0 0.0
      %1791 = vmatprep.subr.mxu0 0.0
      %1792 = vmatpush2.msra.mxu0 0.0
      %1793 = vmatprep.subr.mxu0 0.0
      %1794 = vmatpush2.msra.mxu0 0.0
      %1795 = vmatprep.subr.mxu0 0.0
      %1796 = vmatpush2.msra.mxu0 0.0
      %1797 = vmatprep.subr.mxu0 0.0
      %1798 = vmatpush2.msra.mxu0 0.0
      %1799 = vmatprep.subr.mxu0 0.0
      %1800 = vmatpush2.msra.mxu0 0.0
      %1801 = vmatprep.subr.mxu0 0.0
      %1802 = vmatpush2.msra.mxu0 0.0
      %1803 = vmatprep.subr.mxu0 0.0
      %1804 = vmatpush2.msra.mxu0 0.0
      %1805 = vmatprep.mubr.f32.mxu0 0.0
      %1806 = vmatmul.mubr.f32.gmra.mxu0 %v713
      %v1807 = vpop.f32.mrf.mxu0
      %v1808 = vadd.f32 0.0, %v1807
      %v1809 = vpop.f32.mrf.mxu0
      %1810 = vdwg.mxu0
      %v1811 = vld [vmem:[#allocation2 + $0x18] sm:$0xff]
      %v1812 = vld [vmem:[#allocation2 + $0x38] sm:$0xff]
      %v1813 = vld [vmem:[#allocation3 + $0x18] sm:$0xff]
      %v1814 = vld [vmem:[#allocation3 + $0x38] sm:$0xff]
      %v1816 = vsel %vm629, %v1738, 0
      %v1819 = vsel %vm629, %v1808, 0
      %1821 = vmatprep.subr.mxu0 0.0
      %1822 = vmatpush1.msra.mxu0 0.0
      %1823 = vmatprep.subr.mxu0 0.0
      %1824 = vmatpush1.msra.mxu0 0.0
      %1825 = vmatprep.subr.mxu0 0.0
      %1826 = vmatpush1.msra.mxu0 0.0
      %1827 = vmatprep.subr.mxu0 0.0
      %1828 = vmatpush1.msra.mxu0 0.0
      %1829 = vmatprep.subr.mxu0 0.0
      %1830 = vmatpush1.msra.mxu0 0.0
      %1831 = vmatprep.subr.mxu0 0.0
      %1832 = vmatpush1.msra.mxu0 0.0
      %1833 = vmatprep.subr.mxu0 0.0
      %1834 = vmatpush1.msra.mxu0 0.0
      %1835 = vmatprep.subr.mxu0 0.0
      %1836 = vmatpush1.msra.mxu0 0.0
      %1837 = vmatprep.subr.mxu0 0.0
      %1838 = vmatpush1.msra.mxu0 0.0
      %1839 = vmatprep.subr.mxu0 0.0
      %1840 = vmatpush1.msra.mxu0 0.0
      %1841 = vmatprep.subr.mxu0 0.0
      %1842 = vmatpush1.msra.mxu0 0.0
      %1843 = vmatprep.subr.mxu0 0.0
      %1844 = vmatpush1.msra.mxu0 0.0
      %1845 = vmatprep.subr.mxu0 0.0
      %1846 = vmatpush1.msra.mxu0 %v433
      %1847 = vmatprep.subr.mxu0 0.0
      %1848 = vmatpush1.msra.mxu0 %v432
      %1849 = vmatprep.subr.mxu0 0.0
      %1850 = vmatpush1.msra.mxu0 %v431
      %1851 = vmatprep.subr.mxu0 0.0
      %1852 = vmatpush1.msra.mxu0 %v430
      %1853 = vmatprep.subr.mxu0 0.0
      %1854 = vmatpush2.msra.mxu0 0.0
      %1855 = vmatprep.subr.mxu0 0.0
      %1856 = vmatpush2.msra.mxu0 0.0
      %1857 = vmatprep.subr.mxu0 0.0
      %1858 = vmatpush2.msra.mxu0 0.0
      %1859 = vmatprep.subr.mxu0 0.0
      %1860 = vmatpush2.msra.mxu0 0.0
      %1861 = vmatprep.subr.mxu0 0.0
      %1862 = vmatpush2.msra.mxu0 0.0
      %1863 = vmatprep.subr.mxu0 0.0
      %1864 = vmatpush2.msra.mxu0 0.0
      %1865 = vmatprep.subr.mxu0 0.0
      %1866 = vmatpush2.msra.mxu0 0.0
      %1867 = vmatprep.subr.mxu0 0.0
      %1868 = vmatpush2.msra.mxu0 0.0
      %1869 = vmatprep.subr.mxu0 0.0
      %1870 = vmatpush2.msra.mxu0 0.0
      %1871 = vmatprep.subr.mxu0 0.0
      %1872 = vmatpush2.msra.mxu0 0.0
      %1873 = vmatprep.subr.mxu0 0.0
      %1874 = vmatpush2.msra.mxu0 0.0
      %1875 = vmatprep.subr.mxu0 0.0
      %1876 = vmatpush2.msra.mxu0 0.0
      %1877 = vmatprep.subr.mxu0 0.0
      %1878 = vmatpush2.msra.mxu0 0.0
      %1879 = vmatprep.subr.mxu0 0.0
      %1880 = vmatpush2.msra.mxu0 0.0
      %1881 = vmatprep.subr.mxu0 0.0
      %1882 = vmatpush2.msra.mxu0 0.0
      %1883 = vmatprep.subr.mxu0 0.0
      %1884 = vmatpush2.msra.mxu0 0.0
      %1885 = vmatprep.mubr.f32.mxu0 0.0
      %1886 = vmatmul.mubr.f32.gmra.mxu0 %v1816
      %v1887 = vpop.f32.mrf.mxu0
      %v1888 = vadd.f32 %v1811, %v1887
      %v1889 = vpop.f32.mrf.mxu0
      %1890 = vmatprep.mubr.f32.mxu0 0.0
      %1891 = vmatmul.mubr.f32.gmra.mxu0 %v1819
      %v1892 = vpop.f32.mrf.mxu0
      %v1893 = vadd.f32 %v1812, %v1892
      %v1894 = vpop.f32.mrf.mxu0
      %1895 = vdwg.mxu0
      %v1896 = vxor.u32 %v1888, 2147483648
      %v1897 = vxor.u32 %v1893, 2147483648
      %v1898 = vmul.f32 %v1896, 1.442695
      %v1899 = vpow.pop %v1898
      %v1900 = vmul.f32 %v1897, 1.442695
      %v1901 = vpow.pop %v1900
      %v1902 = vadd.f32 %v1899, 1.0
      %v1903 = vadd.f32 %v1901, 1.0
      %v1904 = vrcp.pop %v1902
      %v1905 = vmul.f32 1.0, %v1904
      %v1906 = vrcp.pop %v1903
      %v1907 = vmul.f32 1.0, %v1906
      %1908 = vrot.lane.b32.xlu0 %v1738, 32
      %v1909 = vpop.permute.xlu0 %1908
      %1910 = vrot.lane.b32.xlu0 %v1808, 32
      %v1911 = vpop.permute.xlu0 %1910
      %v1914 = vmul.f32 %v1905, %v1909
      %v1915 = vmul.f32 %v1907, %v1911
      %1918 = vrot.lane.b32.xlu0 %v1914, 96
      %v1919 = vpop.permute.xlu0 %1918
      %1920 = vrot.lane.b32.xlu0 %v1915, 96
      %v1921 = vpop.permute.xlu0 %1920
      %v1922 = vsel %vm629, %v1919, 0
      %v1924 = vsel %vm629, %v1921, 0
      %1926 = vmatprep.subr.mxu0 0.0
      %1927 = vmatpush1.msra.mxu0 0.0
      %1928 = vmatprep.subr.mxu0 0.0
      %1929 = vmatpush1.msra.mxu0 0.0
      %1930 = vmatprep.subr.mxu0 0.0
      %1931 = vmatpush1.msra.mxu0 0.0
      %1932 = vmatprep.subr.mxu0 0.0
      %1933 = vmatpush1.msra.mxu0 0.0
      %1934 = vmatprep.subr.mxu0 0.0
      %1935 = vmatpush1.msra.mxu0 0.0
      %1936 = vmatprep.subr.mxu0 0.0
      %1937 = vmatpush1.msra.mxu0 0.0
      %1938 = vmatprep.subr.mxu0 0.0
      %1939 = vmatpush1.msra.mxu0 0.0
      %1940 = vmatprep.subr.mxu0 0.0
      %1941 = vmatpush1.msra.mxu0 0.0
      %1942 = vmatprep.subr.mxu0 0.0
      %1943 = vmatpush1.msra.mxu0 0.0
      %1944 = vmatprep.subr.mxu0 0.0
      %1945 = vmatpush1.msra.mxu0 0.0
      %1946 = vmatprep.subr.mxu0 0.0
      %1947 = vmatpush1.msra.mxu0 0.0
      %1948 = vmatprep.subr.mxu0 0.0
      %1949 = vmatpush1.msra.mxu0 0.0
      %1950 = vmatprep.subr.mxu0 0.0
      %1951 = vmatpush1.msra.mxu0 %v437
      %1952 = vmatprep.subr.mxu0 0.0
      %1953 = vmatpush1.msra.mxu0 %v436
      %1954 = vmatprep.subr.mxu0 0.0
      %1955 = vmatpush1.msra.mxu0 %v435
      %1956 = vmatprep.subr.mxu0 0.0
      %1957 = vmatpush1.msra.mxu0 %v434
      %1958 = vmatprep.subr.mxu0 0.0
      %1959 = vmatpush2.msra.mxu0 0.0
      %1960 = vmatprep.subr.mxu0 0.0
      %1961 = vmatpush2.msra.mxu0 0.0
      %1962 = vmatprep.subr.mxu0 0.0
      %1963 = vmatpush2.msra.mxu0 0.0
      %1964 = vmatprep.subr.mxu0 0.0
      %1965 = vmatpush2.msra.mxu0 0.0
      %1966 = vmatprep.subr.mxu0 0.0
      %1967 = vmatpush2.msra.mxu0 0.0
      %1968 = vmatprep.subr.mxu0 0.0
      %1969 = vmatpush2.msra.mxu0 0.0
      %1970 = vmatprep.subr.mxu0 0.0
      %1971 = vmatpush2.msra.mxu0 0.0
      %1972 = vmatprep.subr.mxu0 0.0
      %1973 = vmatpush2.msra.mxu0 0.0
      %1974 = vmatprep.subr.mxu0 0.0
      %1975 = vmatpush2.msra.mxu0 0.0
      %1976 = vmatprep.subr.mxu0 0.0
      %1977 = vmatpush2.msra.mxu0 0.0
      %1978 = vmatprep.subr.mxu0 0.0
      %1979 = vmatpush2.msra.mxu0 0.0
      %1980 = vmatprep.subr.mxu0 0.0
      %1981 = vmatpush2.msra.mxu0 0.0
      %1982 = vmatprep.subr.mxu0 0.0
      %1983 = vmatpush2.msra.mxu0 0.0
      %1984 = vmatprep.subr.mxu0 0.0
      %1985 = vmatpush2.msra.mxu0 0.0
      %1986 = vmatprep.subr.mxu0 0.0
      %1987 = vmatpush2.msra.mxu0 0.0
      %1988 = vmatprep.subr.mxu0 0.0
      %1989 = vmatpush2.msra.mxu0 0.0
      %1990 = vmatprep.mubr.f32.mxu0 0.0
      %1991 = vmatmul.mubr.f32.gmra.mxu0 %v1922
      %v1992 = vpop.f32.mrf.mxu0
      %v1993 = vadd.f32 %v1813, %v1992
      %v1994 = vpop.f32.mrf.mxu0
      %1995 = vmatprep.mubr.f32.mxu0 0.0
      %1996 = vmatmul.mubr.f32.gmra.mxu0 %v1924
      %v1997 = vpop.f32.mrf.mxu0
      %v1998 = vadd.f32 %v1814, %v1997
      %v1999 = vpop.f32.mrf.mxu0
      %2000 = vdwg.mxu0
      %v2001 = vtanh.pop %v1993
      %v2002 = vtanh.pop %v1998
      %v2003 = vsub.f32 1.0, %v1905
      %v2004 = vsub.f32 1.0, %v1907
      %v2005 = vmul.f32 %v2003, %v1738
      %v2006 = vmul.f32 %v2004, %v1808
      %v2007 = vmul.f32 %v1905, %v2001
      %v2008 = vmul.f32 %v1907, %v2002
      %v2009 = vadd.f32 %v2005, %v2007
      %v2010 = vadd.f32 %v2006, %v2008
      %2011 = vst.msk [vmem:[#allocation4 + $0x18] sm:$0xff] %vm629, %v2009
      %2012 = vst.msk [vmem:[#allocation4 + $0x38] sm:$0xff] %vm629, %v2010
      %2013 = vst.msk [vmem:[%s424] sm:$0xff] %vm629, %v2009
      %2014 = vst.msk [vmem:[%s424 + $0x8] sm:$0xff] %vm629, %v2010
      %v2015 = vld [vmem:[#allocation4] sm:$0xff]
      %v2016 = vld [vmem:[#allocation4 + $0x8] sm:$0xff]
      %v2017 = vld [vmem:[#allocation4 + $0x10] sm:$0xff]
      %v2018 = vld [vmem:[#allocation4 + $0x18] sm:$0xff]
      %v2019 = vld [vmem:[#allocation4 + $0x20] sm:$0xff]
      %v2020 = vld [vmem:[#allocation4 + $0x28] sm:$0xff]
      %v2021 = vld [vmem:[#allocation4 + $0x30] sm:$0xff]
      %v2022 = vld [vmem:[#allocation4 + $0x38] sm:$0xff]
      %v2023 = vld [vmem:[%s7] sm:$0xff]
      %v2024 = vld [vmem:[%s7 + $0x8] sm:$0xff]
      %v2025 = vld [vmem:[%s7 + $0x10] sm:$0xff]
      %v2026 = vld [vmem:[%s7 + $0x18] sm:$0xff]
      %v2027 = vld [vmem:[%s8] sm:$0x1]
      %v2029 = vlaneseq
      %v2030 = vshrl.u32 %v2029, 7
      %v2031 = vsub.s32 0, %v2030
      %v2032 = vrot.slane %v2027, %v2031
      %v2035 = vsel %vm629, %v2015, 0
      %v2038 = vsel %vm629, %v2016, 0
      %v2041 = vsel %vm629, %v2017, 0
      %v2044 = vsel %vm629, %v2018, 0
      %v2047 = vsel %vm629, %v2019, 0
      %v2050 = vsel %vm629, %v2020, 0
      %v2053 = vsel %vm629, %v2021, 0
      %v2056 = vsel %vm629, %v2022, 0
      %2058 = vmatprep.subr.mxu0 0.0
      %2059 = vmatpush1.msra.mxu0 0.0
      %2060 = vmatprep.subr.mxu0 0.0
      %2061 = vmatpush1.msra.mxu0 0.0
      %2062 = vmatprep.subr.mxu0 0.0
      %2063 = vmatpush1.msra.mxu0 0.0
      %2064 = vmatprep.subr.mxu0 0.0
      %2065 = vmatpush1.msra.mxu0 0.0
      %2066 = vmatprep.subr.mxu0 0.0
      %2067 = vmatpush1.msra.mxu0 0.0
      %2068 = vmatprep.subr.mxu0 0.0
      %2069 = vmatpush1.msra.mxu0 0.0
      %2070 = vmatprep.subr.mxu0 0.0
      %2071 = vmatpush1.msra.mxu0 0.0
      %2072 = vmatprep.subr.mxu0 0.0
      %2073 = vmatpush1.msra.mxu0 0.0
      %2074 = vmatprep.subr.mxu0 0.0
      %2075 = vmatpush1.msra.mxu0 0.0
      %2076 = vmatprep.subr.mxu0 0.0
      %2077 = vmatpush1.msra.mxu0 0.0
      %2078 = vmatprep.subr.mxu0 0.0
      %2079 = vmatpush1.msra.mxu0 0.0
      %2080 = vmatprep.subr.mxu0 0.0
      %2081 = vmatpush1.msra.mxu0 0.0
      %2082 = vmatprep.subr.mxu0 0.0
      %2083 = vmatpush1.msra.mxu0 %v2026
      %2084 = vmatprep.subr.mxu0 0.0
      %2085 = vmatpush1.msra.mxu0 %v2025
      %2086 = vmatprep.subr.mxu0 0.0
      %2087 = vmatpush1.msra.mxu0 %v2024
      %2088 = vmatprep.subr.mxu0 0.0
      %2089 = vmatpush1.msra.mxu0 %v2023
      %2090 = vmatprep.subr.mxu0 0.0
      %2091 = vmatpush2.msra.mxu0 0.0
      %2092 = vmatprep.subr.mxu0 0.0
      %2093 = vmatpush2.msra.mxu0 0.0
      %2094 = vmatprep.subr.mxu0 0.0
      %2095 = vmatpush2.msra.mxu0 0.0
      %2096 = vmatprep.subr.mxu0 0.0
      %2097 = vmatpush2.msra.mxu0 0.0
      %2098 = vmatprep.subr.mxu0 0.0
      %2099 = vmatpush2.msra.mxu0 0.0
      %2100 = vmatprep.subr.mxu0 0.0
      %2101 = vmatpush2.msra.mxu0 0.0
      %2102 = vmatprep.subr.mxu0 0.0
      %2103 = vmatpush2.msra.mxu0 0.0
      %2104 = vmatprep.subr.mxu0 0.0
      %2105 = vmatpush2.msra.mxu0 0.0
      %2106 = vmatprep.subr.mxu0 0.0
      %2107 = vmatpush2.msra.mxu0 0.0
      %2108 = vmatprep.subr.mxu0 0.0
      %2109 = vmatpush2.msra.mxu0 0.0
      %2110 = vmatprep.subr.mxu0 0.0
      %2111 = vmatpush2.msra.mxu0 0.0
      %2112 = vmatprep.subr.mxu0 0.0
      %2113 = vmatpush2.msra.mxu0 0.0
      %2114 = vmatprep.subr.mxu0 0.0
      %2115 = vmatpush2.msra.mxu0 0.0
      %2116 = vmatprep.subr.mxu0 0.0
      %2117 = vmatpush2.msra.mxu0 0.0
      %2118 = vmatprep.subr.mxu0 0.0
      %2119 = vmatpush2.msra.mxu0 0.0
      %2120 = vmatprep.subr.mxu0 0.0
      %2121 = vmatpush2.msra.mxu0 0.0
      %2122 = vmatprep.mubr.f32.mxu0 0.0
      %2123 = vmatmul.mubr.f32.gmra.mxu0 %v2035
      %v2124 = vpop.f32.mrf.mxu0
      %v2125 = vadd.f32 %v2032, %v2124
      %v2126 = vpop.f32.mrf.mxu0
      %2127 = vmatprep.mubr.f32.mxu0 0.0
      %2128 = vmatmul.mubr.f32.gmra.mxu0 %v2038
      %v2129 = vpop.f32.mrf.mxu0
      %v2130 = vadd.f32 %v2032, %v2129
      %v2131 = vpop.f32.mrf.mxu0
      %2132 = vmatprep.mubr.f32.mxu0 0.0
      %2133 = vmatmul.mubr.f32.gmra.mxu0 %v2041
      %v2134 = vpop.f32.mrf.mxu0
      %v2135 = vadd.f32 %v2032, %v2134
      %v2136 = vpop.f32.mrf.mxu0
      %2137 = vmatprep.mubr.f32.mxu0 0.0
      %2138 = vmatmul.mubr.f32.gmra.mxu0 %v2044
      %v2139 = vpop.f32.mrf.mxu0
      %v2140 = vadd.f32 %v2032, %v2139
      %v2141 = vpop.f32.mrf.mxu0
      %2142 = vmatprep.mubr.f32.mxu0 0.0
      %2143 = vmatmul.mubr.f32.gmra.mxu0 %v2047
      %v2144 = vpop.f32.mrf.mxu0
      %v2145 = vadd.f32 %v2032, %v2144
      %v2146 = vpop.f32.mrf.mxu0
      %2147 = vmatprep.mubr.f32.mxu0 0.0
      %2148 = vmatmul.mubr.f32.gmra.mxu0 %v2050
      %v2149 = vpop.f32.mrf.mxu0
      %v2150 = vadd.f32 %v2032, %v2149
      %v2151 = vpop.f32.mrf.mxu0
      %2152 = vmatprep.mubr.f32.mxu0 0.0
      %2153 = vmatmul.mubr.f32.gmra.mxu0 %v2053
      %v2154 = vpop.f32.mrf.mxu0
      %v2155 = vadd.f32 %v2032, %v2154
      %v2156 = vpop.f32.mrf.mxu0
      %2157 = vmatprep.mubr.f32.mxu0 0.0
      %2158 = vmatmul.mubr.f32.gmra.mxu0 %v2056
      %v2159 = vpop.f32.mrf.mxu0
      %v2160 = vadd.f32 %v2032, %v2159
      %v2161 = vpop.f32.mrf.mxu0
      %2162 = vdwg.mxu0
      %v2163 = vxor.u32 %v2125, 2147483648
      %v2164 = vxor.u32 %v2130, 2147483648
      %v2165 = vxor.u32 %v2135, 2147483648
      %v2166 = vxor.u32 %v2140, 2147483648
      %v2167 = vxor.u32 %v2145, 2147483648
      %v2168 = vxor.u32 %v2150, 2147483648
      %v2169 = vxor.u32 %v2155, 2147483648
      %v2170 = vxor.u32 %v2160, 2147483648
      %v2171 = vmul.f32 %v2163, 1.442695
      %v2172 = vpow.pop %v2171
      %v2173 = vmul.f32 %v2164, 1.442695
      %v2174 = vpow.pop %v2173
      %v2175 = vmul.f32 %v2165, 1.442695
      %v2176 = vpow.pop %v2175
      %v2177 = vmul.f32 %v2166, 1.442695
      %v2178 = vpow.pop %v2177
      %v2179 = vmul.f32 %v2167, 1.442695
      %v2180 = vpow.pop %v2179
      %v2181 = vmul.f32 %v2168, 1.442695
      %v2182 = vpow.pop %v2181
      %v2183 = vmul.f32 %v2169, 1.442695
      %v2184 = vpow.pop %v2183
      %v2185 = vmul.f32 %v2170, 1.442695
      %v2186 = vpow.pop %v2185
      %v2187 = vadd.f32 %v2172, 1.0
      %v2188 = vadd.f32 %v2174, 1.0
      %v2189 = vadd.f32 %v2176, 1.0
      %v2190 = vadd.f32 %v2178, 1.0
      %v2191 = vadd.f32 %v2180, 1.0
      %v2192 = vadd.f32 %v2182, 1.0
      %v2193 = vadd.f32 %v2184, 1.0
      %v2194 = vadd.f32 %v2186, 1.0
      %v2195 = vrcp.pop %v2187
      %v2196 = vmul.f32 1.0, %v2195
      %v2197 = vrcp.pop %v2188
      %v2198 = vmul.f32 1.0, %v2197
      %v2199 = vrcp.pop %v2189
      %v2200 = vmul.f32 1.0, %v2199
      %v2201 = vrcp.pop %v2190
      %v2202 = vmul.f32 1.0, %v2201
      %v2203 = vrcp.pop %v2191
      %v2204 = vmul.f32 1.0, %v2203
      %v2205 = vrcp.pop %v2192
      %v2206 = vmul.f32 1.0, %v2205
      %v2207 = vrcp.pop %v2193
      %v2208 = vmul.f32 1.0, %v2207
      %v2209 = vrcp.pop %v2194
      %v2210 = vmul.f32 1.0, %v2209
      %2211 = vst.msk [vmem:[%s418] sm:$0xff] %vm454, %v2196
      %2212 = vst.msk [vmem:[%s418 + $0x8] sm:$0xff] %vm454, %v2198
      %2213 = vst.msk [vmem:[%s418 + $0x10] sm:$0xff] %vm454, %v2200
      %2214 = vst.msk [vmem:[%s418 + $0x18] sm:$0xff] %vm454, %v2202
      %2215 = vst.msk [vmem:[%s418 + $0x20] sm:$0xff] %vm454, %v2204
      %2216 = vst.msk [vmem:[%s418 + $0x28] sm:$0xff] %vm454, %v2206
      %2217 = vst.msk [vmem:[%s418 + $0x30] sm:$0xff] %vm454, %v2208
      %2218 = vst.msk [vmem:[%s418 + $0x38] sm:$0xff] %vm454, %v2210
      %s2219 = smul.u32 2, %s22
      %p2220 = scmp.lt.s32.totalorder %s2219, 3
      %s2221 = scalar_select %p2220, %s2219, 3
      %s2222 = smul.addr %s2221, 4
      %s2223 = smul.addr %s2222, 8
      %s2224 = scalar_lea.vmem %s9, %s2223
      %s2225 = smul.u32 2, %s22
      %p2226 = scmp.lt.s32.totalorder %s2225, 3
      %s2227 = scalar_select %p2226, %s2225, 3
      %s2228 = smul.addr %s2227, 8
      %s2229 = scalar_lea.vmem %s10, %s2228
      // Predicated region
      $region57: #{tpu_custom_call.1} parent=55 // pred_check
        %p2230 = pneg %p244
      $region58: #{tpu_custom_call.1} parent=55 // pred_check_branch
        %2232 = sbr.rel (%p2230) target = $region60
      $region59: #{tpu_custom_call.1} parent=55 // pred_region
        %s2233 = smul.u32 2, %s22
      $region60: #{tpu_custom_call.1} parent=55 // pred_fallthru
        _
      // Predicated region
      $region61: #{tpu_custom_call.1} parent=55 // pred_check
        %p2234 = pneg %p270
      $region62: #{tpu_custom_call.1} parent=55 // pred_check_branch
        %2236 = sbr.rel (%p2234) target = $region64
      $region63: #{tpu_custom_call.1} parent=55 // pred_region
        %s2237 = smul.u32 2, %s22
      $region64: #{tpu_custom_call.1} parent=55 // pred_fallthru
        _
    $region56: #{tpu_custom_call.1} parent=5 // pred_fallthru
      _
    %p2238 = scmp.le.s32.totalorder 2, %s17
    // Predicated region
    $region65: #{tpu_custom_call.1} parent=5 // pred_check
      %p2239 = pneg %p2238
    $region66: #{tpu_custom_call.1} parent=5 // pred_check_branch
      %2241 = sbr.rel (%p2239) target = $region68
    $region67: #{tpu_custom_call.1} parent=5 // pred_region
      %s2242 = ssub.s32 %s17, 2
      // Predicated region
      $region69: #{tpu_custom_call.1} parent=67 // pred_check
        %p2243 = pneg %p250
      $region70: #{tpu_custom_call.1} parent=67 // pred_check_branch
        %2245 = sbr.rel (%p2243) target = $region72
      $region71: #{tpu_custom_call.1} parent=67 // pred_region
        %s2246 = smul.u32 2, %s23
        %p2247 = scmp.lt.s32.totalorder %s2246, 3
        %s2248 = scalar_select %p2247, %s2246, 3
        %s2249 = smul.addr %s2248, 4
        %s2250 = smul.addr %s2249, 8
        %s2251 = scalar_lea.vmem %s9, %s2250
      $region72: #{tpu_custom_call.1} parent=67 // pred_fallthru
        _
      // Predicated region
      $region73: #{tpu_custom_call.1} parent=67 // pred_check
        %p2252 = pneg %p276
      $region74: #{tpu_custom_call.1} parent=67 // pred_check_branch
        %2254 = sbr.rel (%p2252) target = $region76
      $region75: #{tpu_custom_call.1} parent=67 // pred_region
        %s2255 = smul.u32 2, %s23
        %p2256 = scmp.lt.s32.totalorder %s2255, 3
        %s2257 = scalar_select %p2256, %s2255, 3
        %s2258 = smul.addr %s2257, 8
        %s2259 = scalar_lea.vmem %s10, %s2258
      $region76: #{tpu_custom_call.1} parent=67 // pred_fallthru
        _
    $region68: #{tpu_custom_call.1} parent=5 // pred_fallthru
      _
  $region6: #{tpu_custom_call.1} parent=0 // loop_footer
    %s21 = sadd.s32 1, %s17
  $region7: #{tpu_custom_call.1} parent=0 // loop_footer_branch
    %16 = sbr.rel target = $region3
  $region8: #{tpu_custom_call.1} parent=0 // loop_exit
    _

</llo_original>
